<compile_context>
chip_gen: v6e
topology: v6e:2x2x1
jax: 0.10.0
libtpu: 0.0.40
codegen_flags: <defaults>
</compile_context>

<pallas_src>
import functools

import jax
import jax.numpy as jnp
from jax import lax
from jax.experimental import pallas as pl
from jax.experimental.pallas import tpu as pltpu


# ---------------------------------------------------------------------------
# Projection matmul kernel (bias-free nn.Linear): y = x @ w, f32 accumulation.
# ---------------------------------------------------------------------------
def _matmul_kernel(x_ref, w_ref, o_ref):
    o_ref[...] = jnp.dot(
        x_ref[...], w_ref[...], preferred_element_type=jnp.float32
    ).astype(o_ref.dtype)


def pallas_matmul(x, w, *, tm=128, tn=128):
    M, K = x.shape
    K2, N = w.shape
    assert K == K2 and M % tm == 0 and N % tn == 0
    return pl.pallas_call(
        _matmul_kernel,
        out_shape=jax.ShapeDtypeStruct((M, N), x.dtype),
        grid_spec=pltpu.PrefetchScalarGridSpec(
            num_scalar_prefetch=0,
            grid=(M // tm, N // tn),
            in_specs=[
                pl.BlockSpec((tm, K), lambda i, j: (i, 0)),
                pl.BlockSpec((K, tn), lambda i, j: (0, j)),
            ],
            out_specs=pl.BlockSpec((tm, tn), lambda i, j: (i, j)),
        ),
        compiler_params=pltpu.CompilerParams(
            dimension_semantics=("parallel", "parallel")
        ),
    )(x, w)


# ---------------------------------------------------------------------------
# Causal flash-attention kernel (online softmax, persistent VMEM accumulator).
# Q/K/V are [B*heads, S, head_dim]; grid = (B*heads, S//tq, S//tk).
# ---------------------------------------------------------------------------
def _flash_attn_kernel(q_ref, k_ref, v_ref, o_ref, m_sc, l_sc, acc_sc, *, scale):
    qi = pl.program_id(1)
    ki = pl.program_id(2)
    tq = q_ref.shape[1]
    tk = k_ref.shape[1]

    @pl.when(ki == 0)
    def _init():
        m_sc[...] = jnp.full(m_sc.shape, -jnp.inf, jnp.float32)
        l_sc[...] = jnp.zeros(l_sc.shape, jnp.float32)
        acc_sc[...] = jnp.zeros(acc_sc.shape, jnp.float32)

    # Skip fully-masked (strictly above the causal diagonal) kv tiles.
    # (tq == tk, so tile (qi, ki) has unmasked entries iff ki <= qi.)
    @pl.when(ki <= qi)
    def _compute():
        q = q_ref[0]  # (tq, D) bf16
        k = k_ref[0]  # (tk, D) bf16
        v = v_ref[0]  # (tk, D) bf16

        # s = (Q K^T) * scaling, accumulated in f32 on the MXU.
        s = lax.dot_general(
            q, k, (((1,), (1,)), ((), ())), preferred_element_type=jnp.float32
        )
        s = s * scale

        # Causal mask (matches torch's additive -1e9 mask).
        row = qi * tq + lax.broadcasted_iota(jnp.int32, (tq, tk), 0)
        col = ki * tk + lax.broadcasted_iota(jnp.int32, (tq, tk), 1)
        s = jnp.where(row >= col, s, -1e9)

        # Online softmax update (all f32 on VPU/EUP).
        m_prev = m_sc[...]                                   # (tq, 1)
        m_new = jnp.maximum(m_prev, s.max(axis=-1, keepdims=True))
        alpha = jnp.exp(m_prev - m_new)
        p = jnp.exp(s - m_new)                               # (tq, tk) f32
        l_sc[...] = alpha * l_sc[...] + p.sum(axis=-1, keepdims=True)
        acc_sc[...] = alpha * acc_sc[...] + jnp.dot(
            p.astype(v.dtype), v, preferred_element_type=jnp.float32
        )
        m_sc[...] = m_new

    @pl.when(ki == pl.num_programs(2) - 1)
    def _finalize():
        inv_l = pl.reciprocal(l_sc[...], approx=True)
        o_ref[0] = (acc_sc[...] * inv_l).astype(o_ref.dtype)


def flash_attention(q, k, v, *, scale, tq=128, tk=128):
    """q, k, v: [B*heads, S, D] (bf16). Returns [B*heads, S, D]."""
    BH, S, D = q.shape
    assert S % tq == 0 and S % tk == 0 and tq == tk
    nq, nk = S // tq, S // tk
    kernel = functools.partial(_flash_attn_kernel, scale=scale)
    return pl.pallas_call(
        kernel,
        out_shape=jax.ShapeDtypeStruct((BH, S, D), q.dtype),
        grid_spec=pltpu.PrefetchScalarGridSpec(
            num_scalar_prefetch=0,
            grid=(BH, nq, nk),
            in_specs=[
                pl.BlockSpec((1, tq, D), lambda b, qi, ki: (b, qi, 0)),
                pl.BlockSpec((1, tk, D), lambda b, qi, ki: (b, ki, 0)),
                pl.BlockSpec((1, tk, D), lambda b, qi, ki: (b, ki, 0)),
            ],
            out_specs=pl.BlockSpec((1, tq, D), lambda b, qi, ki: (b, qi, 0)),
            scratch_shapes=[
                pltpu.VMEM((tq, 1), jnp.float32),   # running max m
                pltpu.VMEM((tq, 1), jnp.float32),   # running sum l
                pltpu.VMEM((tq, D), jnp.float32),   # f32 output accumulator
            ],
        ),
        compiler_params=pltpu.CompilerParams(
            dimension_semantics=("parallel", "parallel", "arbitrary")
        ),
    )(q, k, v)


# ---------------------------------------------------------------------------
# Full AdaptiveAttention forward (inference path of the PyTorch module).
# ---------------------------------------------------------------------------
def adaptive_attention_forward(hidden_states, wq, wk, wv, wo, *, num_heads,
                               tq=128, tk=128):
    if hidden_states.ndim > 3:
        hidden_states = hidden_states.reshape(
            hidden_states.shape[0], -1, hidden_states.shape[-1]
        )
    B, S, H = hidden_states.shape
    D = H // num_heads
    scale = D ** -0.5

    x2d = hidden_states.reshape(B * S, H)
    q = pallas_matmul(x2d, wq)
    k = pallas_matmul(x2d, wk)
    v = pallas_matmul(x2d, wv)

    def split_heads(t):
        return (
            t.reshape(B, S, num_heads, D)
            .transpose(0, 2, 1, 3)
            .reshape(B * num_heads, S, D)
        )

    qh, kh, vh = split_heads(q), split_heads(k), split_heads(v)

    # TODO(synk): attention_mask / head_mask / past_key_value cache are not
    # wired in; pass them via pltpu.PrefetchScalarGridSpec scalar prefetch if
    # needed. Dropout is identity at inference.
    attn = flash_attention(qh, kh, vh, scale=scale, tq=tq, tk=tk)

    attn = (
        attn.reshape(B, num_heads, S, D)
        .transpose(0, 2, 1, 3)
        .reshape(B * S, H)
    )
    out = pallas_matmul(attn, wo)
    return out.reshape(B, S, H)


# ---------------------------------------------------------------------------
# Reference + test driver
# ---------------------------------------------------------------------------
def _reference(x, wq, wk, wv, wo, num_heads):
    B, S, H = x.shape
    D = H // num_heads
    q = (x @ wq).reshape(B, S, num_heads, D).transpose(0, 2, 1, 3)
    k = (x @ wk).reshape(B, S, num_heads, D).transpose(0, 2, 1, 3)
    v = (x @ wv).reshape(B, S, num_heads, D).transpose(0, 2, 1, 3)
    s = jnp.einsum("bhqd,bhkd->bhqk", q, k) * (D ** -0.5)
    causal = jnp.tril(jnp.ones((S, S), jnp.float32))
    s = s + (1.0 - causal) * -1e9
    p = jax.nn.softmax(s, axis=-1)
    o = jnp.einsum("bhqk,bhkd->bhqd", p, v)
    o = o.transpose(0, 2, 1, 3).reshape(B, S, H)
    return o @ wo


if __name__ == "__main__":
    B, S, H, NH = 2, 256, 512, 4   # head_dim = 128 -> lane-dense tiles
    key = jax.random.PRNGKey(0)
    kx, k1, k2, k3, k4 = jax.random.split(key, 5)

    x = jax.random.normal(kx, (B, S, H), jnp.float32) * 0.5
    init_w = lambda k: jax.random.normal(k, (H, H), jnp.float32) * (H ** -0.5)
    wq, wk, wv, wo = init_w(k1), init_w(k2), init_w(k3), init_w(k4)

    xb = x.astype(jnp.bfloat16)
    wqb, wkb, wvb, wob = (w.astype(jnp.bfloat16) for w in (wq, wk, wv, wo))

    fwd = jax.jit(functools.partial(adaptive_attention_forward, num_heads=NH))
    out = fwd(xb, wqb, wkb, wvb, wob)
    out = jax.block_until_ready(out)

    # Reference in f32 on the same (bf16-rounded) inputs.
    ref = _reference(
        xb.astype(jnp.float32),
        wqb.astype(jnp.float32), wkb.astype(jnp.float32),
        wvb.astype(jnp.float32), wob.astype(jnp.float32),
        NH,
    )
    err = float(jnp.max(jnp.abs(out.astype(jnp.float32) - ref)))
    assert err < 5e-2, f"max abs err {err}"
    print("KERNEL_OK")
</pallas_src>

<mosaic_0001>
module attributes {stable_mosaic.version = 11 : i64} {
  func.func @_matmul_kernel(%arg0: i32, %arg1: i32, %arg2: memref<128x512xbf16, #tpu.memory_space<vmem>>, %arg3: memref<512x128xbf16, #tpu.memory_space<vmem>>, %arg4: memref<128x128xbf16, #tpu.memory_space<vmem>>) attributes {dimension_semantics = [#tpu.dimension_semantics<parallel>, #tpu.dimension_semantics<parallel>], iteration_bounds = array<i64: 4, 4>, scalar_prefetch = 0 : i64, scratch_operands = 0 : i64, tpu.core_type = #tpu.core_type<tc>, window_params = [{transform_indices = @transform_0, window_bounds = array<i64: 128, 512>}, {transform_indices = @transform_1, window_bounds = array<i64: 512, 128>}, {transform_indices = @transform_2, window_bounds = array<i64: 128, 128>}]} {
    %c0 = arith.constant 0 : index
    %c0_0 = arith.constant 0 : index
    %0 = vector.load %arg2[%c0, %c0_0] : memref<128x512xbf16, #tpu.memory_space<vmem>>, vector<128x512xbf16>
    %c0_1 = arith.constant 0 : index
    %c0_2 = arith.constant 0 : index
    %1 = vector.load %arg3[%c0_1, %c0_2] : memref<512x128xbf16, #tpu.memory_space<vmem>>, vector<512x128xbf16>
    %cst = arith.constant dense<0.000000e+00> : vector<128x128xf32>
    %2 = tpu.matmul %0, %1, %cst {dimension_numbers = #tpu.dot_dimension_numbers<[1], [0], [0], [1], [0, 0, 1, 1], [], []>} : vector<128x512xbf16>, vector<512x128xbf16>, vector<128x128xf32> -> vector<128x128xf32>
    %3 = arith.truncf %2 : vector<128x128xf32> to vector<128x128xbf16>
    %c0_3 = arith.constant 0 : index
    %c0_4 = arith.constant 0 : index
    %4 = vector.load %arg4[%c0_3, %c0_4] : memref<128x128xbf16, #tpu.memory_space<vmem>>, vector<128x128xbf16>
    tpu.vector_store %arg4[%c0_3, %c0_4], %3 {strides = array<i32>} : memref<128x128xbf16, #tpu.memory_space<vmem>>, vector<128x128xbf16>,
    return
  }
  func.func @transform_0(%arg0: i32, %arg1: i32) -> (i32, i32) {
    %c0_i32 = arith.constant 0 : i32
    %c0_i32_0 = arith.constant 0 : i32
    return %arg0, %c0_i32 : i32, i32
  }
  func.func @transform_1(%arg0: i32, %arg1: i32) -> (i32, i32) {
    %c0_i32 = arith.constant 0 : i32
    %c0_i32_0 = arith.constant 0 : i32
    return %c0_i32, %arg1 : i32, i32
  }
  func.func @transform_2(%arg0: i32, %arg1: i32) -> (i32, i32) {
    %c0_i32 = arith.constant 0 : i32
    return %arg0, %arg1 : i32, i32
  }
}

module attributes {stable_mosaic.version = 11 : i64} {
  func.func @_matmul_kernel(%arg0: i32, %arg1: i32, %arg2: memref<128x512xbf16, #tpu.memory_space<vmem>>, %arg3: memref<512x128xbf16, #tpu.memory_space<vmem>>, %arg4: memref<128x128xbf16, #tpu.memory_space<vmem>>) attributes {dimension_semantics = [#tpu.dimension_semantics<parallel>, #tpu.dimension_semantics<parallel>], iteration_bounds = array<i64: 4, 4>, scalar_prefetch = 0 : i64, scratch_operands = 0 : i64, tpu.core_type = #tpu.core_type<tc>, window_params = [{transform_indices = @transform_0, window_bounds = array<i64: 128, 512>}, {transform_indices = @transform_1, window_bounds = array<i64: 512, 128>}, {transform_indices = @transform_2, window_bounds = array<i64: 128, 128>}]} {
    %c0 = arith.constant 0 : index
    %c0_0 = arith.constant 0 : index
    %0 = vector.load %arg2[%c0, %c0_0] : memref<128x512xbf16, #tpu.memory_space<vmem>>, vector<128x512xbf16>
    %c0_1 = arith.constant 0 : index
    %c0_2 = arith.constant 0 : index
    %1 = vector.load %arg3[%c0_1, %c0_2] : memref<512x128xbf16, #tpu.memory_space<vmem>>, vector<512x128xbf16>
    %cst = arith.constant dense<0.000000e+00> : vector<128x128xf32>
    %2 = tpu.matmul %0, %1, %cst {dimension_numbers = #tpu.dot_dimension_numbers<[1], [0], [0], [1], [0, 0, 1, 1], [], []>} : vector<128x512xbf16>, vector<512x128xbf16>, vector<128x128xf32> -> vector<128x128xf32>
    %3 = arith.truncf %2 : vector<128x128xf32> to vector<128x128xbf16>
    %c0_3 = arith.constant 0 : index
    %c0_4 = arith.constant 0 : index
    %4 = vector.load %arg4[%c0_3, %c0_4] : memref<128x128xbf16, #tpu.memory_space<vmem>>, vector<128x128xbf16>
    tpu.vector_store %arg4[%c0_3, %c0_4], %3 {strides = array<i32>} : memref<128x128xbf16, #tpu.memory_space<vmem>>, vector<128x128xbf16>,
    return
  }
  func.func @transform_0(%arg0: i32, %arg1: i32) -> (i32, i32) {
    %c0_i32 = arith.constant 0 : i32
    %c0_i32_0 = arith.constant 0 : i32
    return %arg0, %c0_i32 : i32, i32
  }
  func.func @transform_1(%arg0: i32, %arg1: i32) -> (i32, i32) {
    %c0_i32 = arith.constant 0 : i32
    %c0_i32_0 = arith.constant 0 : i32
    return %c0_i32, %arg1 : i32, i32
  }
  func.func @transform_2(%arg0: i32, %arg1: i32) -> (i32, i32) {
    %c0_i32 = arith.constant 0 : i32
    return %arg0, %arg1 : i32, i32
  }
}

module attributes {stable_mosaic.version = 11 : i64} {
  func.func @_flash_attn_kernel(%arg0: i32, %arg1: i32, %arg2: i32, %arg3: memref<1x128x128xbf16, #tpu.memory_space<vmem>>, %arg4: memref<1x128x128xbf16, #tpu.memory_space<vmem>>, %arg5: memref<1x128x128xbf16, #tpu.memory_space<vmem>>, %arg6: memref<1x128x128xbf16, #tpu.memory_space<vmem>>, %arg7: memref<128x1xf32, #tpu.memory_space<vmem>>, %arg8: memref<128x1xf32, #tpu.memory_space<vmem>>, %arg9: memref<128x128xf32, #tpu.memory_space<vmem>>) attributes {dimension_semantics = [#tpu.dimension_semantics<parallel>, #tpu.dimension_semantics<parallel>, #tpu.dimension_semantics<arbitrary>], iteration_bounds = array<i64: 8, 2, 2>, scalar_prefetch = 0 : i64, scratch_operands = 3 : i64, tpu.core_type = #tpu.core_type<tc>, window_params = [{transform_indices = @transform_0, window_bounds = array<i64: 1, 128, 128>}, {transform_indices = @transform_1, window_bounds = array<i64: 1, 128, 128>}, {transform_indices = @transform_2, window_bounds = array<i64: 1, 128, 128>}, {transform_indices = @transform_3, window_bounds = array<i64: 1, 128, 128>}]} {
    %c0_i32 = arith.constant 0 : i32
    %0 = arith.cmpi eq, %arg2, %c0_i32 : i32
    %1 = arith.extui %0 : i1 to i32
    %c0_i32_0 = arith.constant 0 : i32
    %2 = arith.cmpi ne, %1, %c0_i32_0 : i32
    scf.if %2 {
      %cst = arith.constant 0xFF800000 : f32
      %9 = vector.broadcast %cst : f32 to vector<128x1xf32>
      %c0 = arith.constant 0 : index
      %c0_3 = arith.constant 0 : index
      %10 = vector.load %arg7[%c0, %c0_3] : memref<128x1xf32, #tpu.memory_space<vmem>>, vector<128x1xf32>
      tpu.vector_store %arg7[%c0, %c0_3], %9 {strides = array<i32>} : memref<128x1xf32, #tpu.memory_space<vmem>>, vector<128x1xf32>,
      %cst_4 = arith.constant 0.000000e+00 : f32
      %11 = vector.broadcast %cst_4 : f32 to vector<128x1xf32>
      %c0_5 = arith.constant 0 : index
      %c0_6 = arith.constant 0 : index
      %12 = vector.load %arg8[%c0_5, %c0_6] : memref<128x1xf32, #tpu.memory_space<vmem>>, vector<128x1xf32>
      tpu.vector_store %arg8[%c0_5, %c0_6], %11 {strides = array<i32>} : memref<128x1xf32, #tpu.memory_space<vmem>>, vector<128x1xf32>,
      %cst_7 = arith.constant 0.000000e+00 : f32
      %13 = vector.broadcast %cst_7 : f32 to vector<128x128xf32>
      %c0_8 = arith.constant 0 : index
      %c0_9 = arith.constant 0 : index
      %14 = vector.load %arg9[%c0_8, %c0_9] : memref<128x128xf32, #tpu.memory_space<vmem>>, vector<128x128xf32>
      tpu.vector_store %arg9[%c0_8, %c0_9], %13 {strides = array<i32>} : memref<128x128xf32, #tpu.memory_space<vmem>>, vector<128x128xf32>,
    } else {
    }
    %3 = arith.cmpi sle, %arg2, %arg1 : i32
    %4 = arith.extui %3 : i1 to i32
    %c0_i32_1 = arith.constant 0 : i32
    %5 = arith.cmpi ne, %4, %c0_i32_1 : i32
    scf.if %5 {
      %c0 = arith.constant 0 : index
      %c0_3 = arith.constant 0 : index
      %c0_4 = arith.constant 0 : index
      %9 = vector.load %arg3[%c0, %c0_3, %c0_4] : memref<1x128x128xbf16, #tpu.memory_space<vmem>>, vector<1x128x128xbf16>
      %10 = vector.shape_cast %9 : vector<1x128x128xbf16> to vector<128x128xbf16>
      %c0_5 = arith.constant 0 : index
      %c0_6 = arith.constant 0 : index
      %c0_7 = arith.constant 0 : index
      %11 = vector.load %arg4[%c0_5, %c0_6, %c0_7] : memref<1x128x128xbf16, #tpu.memory_space<vmem>>, vector<1x128x128xbf16>
      %12 = vector.shape_cast %11 : vector<1x128x128xbf16> to vector<128x128xbf16>
      %c0_8 = arith.constant 0 : index
      %c0_9 = arith.constant 0 : index
      %c0_10 = arith.constant 0 : index
      %13 = vector.load %arg5[%c0_8, %c0_9, %c0_10] : memref<1x128x128xbf16, #tpu.memory_space<vmem>>, vector<1x128x128xbf16>
      %14 = vector.shape_cast %13 : vector<1x128x128xbf16> to vector<128x128xbf16>
      %cst = arith.constant dense<0.000000e+00> : vector<128x128xf32>
      %15 = tpu.matmul %10, %12, %cst {dimension_numbers = #tpu.dot_dimension_numbers<[1], [1], [0], [0], [0, 0, 1, 0], [], []>} : vector<128x128xbf16>, vector<128x128xbf16>, vector<128x128xf32> -> vector<128x128xf32>
      %cst_11 = arith.constant 0.0883883461 : f32
      %16 = vector.broadcast %cst_11 : f32 to vector<128x128xf32>
      %17 = arith.mulf %15, %16 : vector<128x128xf32>
      %c128_i32 = arith.constant 128 : i32
      %18 = arith.muli %arg1, %c128_i32 : i32
      %19 = tpu.iota {dimensions = array<i32: 0>} : vector<128x128xi32>
      %20 = vector.broadcast %18 : i32 to vector<128x128xi32>
      %21 = arith.addi %20, %19 : vector<128x128xi32>
      %c128_i32_12 = arith.constant 128 : i32
      %22 = arith.muli %arg2, %c128_i32_12 : i32
      %23 = tpu.iota {dimensions = array<i32: 1>} : vector<128x128xi32>
      %24 = vector.broadcast %22 : i32 to vector<128x128xi32>
      %25 = arith.addi %24, %23 : vector<128x128xi32>
      %26 = arith.cmpi sge, %21, %25 : vector<128x128xi32>
      %cst_13 = arith.constant -1.000000e+09 : f32
      %27 = vector.broadcast %cst_13 : f32 to vector<128x128xf32>
      %28 = arith.select %26, %17, %27 : vector<128x128xi1>, vector<128x128xf32>
      %c0_14 = arith.constant 0 : index
      %c0_15 = arith.constant 0 : index
      %29 = vector.load %arg7[%c0_14, %c0_15] : memref<128x1xf32, #tpu.memory_space<vmem>>, vector<128x1xf32>
      %cst_16 = arith.constant dense<0xFF800000> : vector<128xf32>
      %30 = vector.multi_reduction <maximumf>, %28, %cst_16 [1] : vector<128x128xf32> to vector<128xf32>
      %31 = vector.shape_cast %30 : vector<128xf32> to vector<128x1xf32>
      %32 = arith.maximumf %29, %31 : vector<128x1xf32>
      %33 = arith.subf %29, %32 : vector<128x1xf32>
      %34 = math.exp %33 : vector<128x1xf32>
      %35 = vector.broadcast %32 : vector<128x1xf32> to vector<128x128xf32>
      %36 = arith.subf %28, %35 : vector<128x128xf32>
      %37 = math.exp %36 : vector<128x128xf32>
      %c0_17 = arith.constant 0 : index
      %c0_18 = arith.constant 0 : index
      %38 = vector.load %arg8[%c0_17, %c0_18] : memref<128x1xf32, #tpu.memory_space<vmem>>, vector<128x1xf32>
      %39 = arith.mulf %34, %38 : vector<128x1xf32>
      %cst_19 = arith.constant dense<0.000000e+00> : vector<128xf32>
      %40 = vector.multi_reduction <add>, %37, %cst_19 [1] : vector<128x128xf32> to vector<128xf32>
      %41 = vector.shape_cast %40 : vector<128xf32> to vector<128x1xf32>
      %42 = arith.addf %39, %41 : vector<128x1xf32>
      %c0_20 = arith.constant 0 : index
      %c0_21 = arith.constant 0 : index
      %43 = vector.load %arg8[%c0_20, %c0_21] : memref<128x1xf32, #tpu.memory_space<vmem>>, vector<128x1xf32>
      tpu.vector_store %arg8[%c0_20, %c0_21], %42 {strides = array<i32>} : memref<128x1xf32, #tpu.memory_space<vmem>>, vector<128x1xf32>,
      %c0_22 = arith.constant 0 : index
      %c0_23 = arith.constant 0 : index
      %44 = vector.load %arg9[%c0_22, %c0_23] : memref<128x128xf32, #tpu.memory_space<vmem>>, vector<128x128xf32>
      %45 = vector.broadcast %34 : vector<128x1xf32> to vector<128x128xf32>
      %46 = arith.mulf %45, %44 : vector<128x128xf32>
      %47 = arith.truncf %37 : vector<128x128xf32> to vector<128x128xbf16>
      %cst_24 = arith.constant dense<0.000000e+00> : vector<128x128xf32>
      %48 = tpu.matmul %47, %14, %cst_24 {dimension_numbers = #tpu.dot_dimension_numbers<[1], [0], [0], [1], [0, 0, 1, 1], [], []>} : vector<128x128xbf16>, vector<128x128xbf16>, vector<128x128xf32> -> vector<128x128xf32>
      %49 = arith.addf %46, %48 : vector<128x128xf32>
      %c0_25 = arith.constant 0 : index
      %c0_26 = arith.constant 0 : index
      %50 = vector.load %arg9[%c0_25, %c0_26] : memref<128x128xf32, #tpu.memory_space<vmem>>, vector<128x128xf32>
      tpu.vector_store %arg9[%c0_25, %c0_26], %49 {strides = array<i32>} : memref<128x128xf32, #tpu.memory_space<vmem>>, vector<128x128xf32>,
      %c0_27 = arith.constant 0 : index
      %c0_28 = arith.constant 0 : index
      %51 = vector.load %arg7[%c0_27, %c0_28] : memref<128x1xf32, #tpu.memory_space<vmem>>, vector<128x1xf32>
      tpu.vector_store %arg7[%c0_27, %c0_28], %32 {strides = array<i32>} : memref<128x1xf32, #tpu.memory_space<vmem>>, vector<128x1xf32>,
    } else {
    }
    %c1_i32 = arith.constant 1 : i32
    %6 = arith.cmpi eq, %arg2, %c1_i32 : i32
    %7 = arith.extui %6 : i1 to i32
    %c0_i32_2 = arith.constant 0 : i32
    %8 = arith.cmpi ne, %7, %c0_i32_2 : i32
    scf.if %8 {
      %c0 = arith.constant 0 : index
      %c0_3 = arith.constant 0 : index
      %9 = vector.load %arg8[%c0, %c0_3] : memref<128x1xf32, #tpu.memory_space<vmem>>, vector<128x1xf32>
      %10 = tpu.reciprocal %9 {approx = true} : vector<128x1xf32> -> vector<128x1xf32>
      %c0_4 = arith.constant 0 : index
      %c0_5 = arith.constant 0 : index
      %11 = vector.load %arg9[%c0_4, %c0_5] : memref<128x128xf32, #tpu.memory_space<vmem>>, vector<128x128xf32>
      %12 = vector.broadcast %10 : vector<128x1xf32> to vector<128x128xf32>
      %13 = arith.mulf %11, %12 : vector<128x128xf32>
      %14 = arith.truncf %13 : vector<128x128xf32> to vector<128x128xbf16>
      %c0_6 = arith.constant 0 : index
      %c0_7 = arith.constant 0 : index
      %c0_8 = arith.constant 0 : index
      %15 = vector.load %arg6[%c0_6, %c0_7, %c0_8] : memref<1x128x128xbf16, #tpu.memory_space<vmem>>, vector<1x128x128xbf16>
      %16 = vector.shape_cast %15 : vector<1x128x128xbf16> to vector<128x128xbf16>
      %17 = vector.shape_cast %14 : vector<128x128xbf16> to vector<1x128x128xbf16>
      tpu.vector_store %arg6[%c0_6, %c0_7, %c0_8], %17 {strides = array<i32>} : memref<1x128x128xbf16, #tpu.memory_space<vmem>>, vector<1x128x128xbf16>,
    } else {
    }
    return
  }
  func.func @transform_0(%arg0: i32, %arg1: i32, %arg2: i32) -> (i32, i32, i32) {
    %c0_i32 = arith.constant 0 : i32
    %c0_i32_0 = arith.constant 0 : i32
    return %arg0, %arg1, %c0_i32 : i32, i32, i32
  }
  func.func @transform_1(%arg0: i32, %arg1: i32, %arg2: i32) -> (i32, i32, i32) {
    %c0_i32 = arith.constant 0 : i32
    %c0_i32_0 = arith.constant 0 : i32
    return %arg0, %arg2, %c0_i32 : i32, i32, i32
  }
  func.func @transform_2(%arg0: i32, %arg1: i32, %arg2: i32) -> (i32, i32, i32) {
    %c0_i32 = arith.constant 0 : i32
    %c0_i32_0 = arith.constant 0 : i32
    return %arg0, %arg2, %c0_i32 : i32, i32, i32
  }
  func.func @transform_3(%arg0: i32, %arg1: i32, %arg2: i32) -> (i32, i32, i32) {
    %c0_i32 = arith.constant 0 : i32
    %c0_i32_0 = arith.constant 0 : i32
    return %arg0, %arg1, %c0_i32 : i32, i32, i32
  }
}

module attributes {stable_mosaic.version = 11 : i64} {
  func.func @_matmul_kernel(%arg0: i32, %arg1: i32, %arg2: memref<128x512xbf16, #tpu.memory_space<vmem>>, %arg3: memref<512x128xbf16, #tpu.memory_space<vmem>>, %arg4: memref<128x128xbf16, #tpu.memory_space<vmem>>) attributes {dimension_semantics = [#tpu.dimension_semantics<parallel>, #tpu.dimension_semantics<parallel>], iteration_bounds = array<i64: 4, 4>, scalar_prefetch = 0 : i64, scratch_operands = 0 : i64, tpu.core_type = #tpu.core_type<tc>, window_params = [{transform_indices = @transform_0, window_bounds = array<i64: 128, 512>}, {transform_indices = @transform_1, window_bounds = array<i64: 512, 128>}, {transform_indices = @transform_2, window_bounds = array<i64: 128, 128>}]} {
    %c0 = arith.constant 0 : index
    %c0_0 = arith.constant 0 : index
    %0 = vector.load %arg2[%c0, %c0_0] : memref<128x512xbf16, #tpu.memory_space<vmem>>, vector<128x512xbf16>
    %c0_1 = arith.constant 0 : index
    %c0_2 = arith.constant 0 : index
    %1 = vector.load %arg3[%c0_1, %c0_2] : memref<512x128xbf16, #tpu.memory_space<vmem>>, vector<512x128xbf16>
    %cst = arith.constant dense<0.000000e+00> : vector<128x128xf32>
    %2 = tpu.matmul %0, %1, %cst {dimension_numbers = #tpu.dot_dimension_numbers<[1], [0], [0], [1], [0, 0, 1, 1], [], []>} : vector<128x512xbf16>, vector<512x128xbf16>, vector<128x128xf32> -> vector<128x128xf32>
    %3 = arith.truncf %2 : vector<128x128xf32> to vector<128x128xbf16>
    %c0_3 = arith.constant 0 : index
    %c0_4 = arith.constant 0 : index
    %4 = vector.load %arg4[%c0_3, %c0_4] : memref<128x128xbf16, #tpu.memory_space<vmem>>, vector<128x128xbf16>
    tpu.vector_store %arg4[%c0_3, %c0_4], %3 {strides = array<i32>} : memref<128x128xbf16, #tpu.memory_space<vmem>>, vector<128x128xbf16>,
    return
  }
  func.func @transform_0(%arg0: i32, %arg1: i32) -> (i32, i32) {
    %c0_i32 = arith.constant 0 : i32
    %c0_i32_0 = arith.constant 0 : i32
    return %arg0, %c0_i32 : i32, i32
  }
  func.func @transform_1(%arg0: i32, %arg1: i32) -> (i32, i32) {
    %c0_i32 = arith.constant 0 : i32
    %c0_i32_0 = arith.constant 0 : i32
    return %c0_i32, %arg1 : i32, i32
  }
  func.func @transform_2(%arg0: i32, %arg1: i32) -> (i32, i32) {
    %c0_i32 = arith.constant 0 : i32
    return %arg0, %arg1 : i32, i32
  }
}

</mosaic_0001>

<llo_original>
// kernel: adaptive_attention_forward.7
$region0: #{adaptive_attention_forward.7}
  #allocation0 [shape = 'u32[]', space=smem, size = 0x4, offset = 0x4, fixed_abs, tag = 'smem constant byte address 0x4 - core index']
  #allocation1 [shape = 'u32[144,128]{1,0:T(1,128)}', space=vmem, size = 0x12000, scoped, tag = 'internal scratch']
  %s0 = inlined_call_operand.hbm [shape: bf16[512,512], index: 0, kind: input, shape index: {}]
  %s1 = inlined_call_operand.hbm [shape: bf16[512,512], index: 1, kind: input, shape index: {}]
  %s2 = inlined_call_operand.vmem [shape: bf16[512,512], index: 2, kind: output, shape index: {}]
  %s3 = sld [smem:[#allocation0]]
  $region86: #{adaptive_attention_forward.7} parent=0
    _
  %s5 = ssub.s32 1, %s3
  %s6 = scalar_select 0, %s5, %s3
  $region1: #{adaptive_attention_forward.7} parent=0
    #allocation2 [shape = 'u8[262144]{0}', space=vmem, size = 0x40000, scoped, tag = 'input window, operand 0']
    #allocation3 [shape = 's32[2]{0}', space=sflag, size = 0x8, scoped, tag = 'scoped memory for adaptive_attention_forward.7']
    #allocation4 [shape = 'u8[262144]{0}', space=vmem, size = 0x40000, scoped, tag = 'input window, operand 1']
    #allocation5 [shape = 's32[2]{0}', space=sflag, size = 0x8, scoped, tag = 'scoped memory for adaptive_attention_forward.7']
    #allocation6 [shape = 'u8[65536]{0}', space=vmem, size = 0x10000, scoped, tag = 'output window, operand 0']
    %7 = vsyncpa [#allocation3], 0
    %s8 = scalar_lea.sflag [#allocation3], 1
    %9 = vsyncpa %s8, 0
    %10 = vsyncpa [#allocation5], 0
    %s11 = scalar_lea.sflag [#allocation5], 1
    %12 = vsyncpa %s11, 0
    loop: start=0, step=1, limit=18
    $region2: #{adaptive_attention_forward.7} parent=1 // loop_pre_header
      _
    $region3: #{adaptive_attention_forward.7} parent=1 // loop_header
      %s14 = sphi 0, %s18
      %p15 = scmp.ge.s32.totalorder %s14, 18
      %s21 = sphi 0, %s33
      %s22 = sphi 0, %s29
      %s23 = sphi 0, %s21
      %s24 = sphi 0, %s22
      %s25 = sphi 0, %s23
      %s26 = sphi 0, %s24
      %s36 = sphi 0, %s38
      %s39 = sphi 0, %s36
      %s40 = sphi 0, %s39
      %s56 = sphi 0, %s40
      %s62 = sphi 0, %s64
      %s65 = sphi 0, %s62
      %s66 = sphi 0, %s65
      %s82 = sphi 0, %s66
      %s90 = sphi 0, %s92
      %s93 = sphi 0, %s90
      %s94 = sphi 0, %s93
      %s110 = sphi 0, %s94
    $region4: #{adaptive_attention_forward.7} parent=1 // loop_header_branch
      %17 = sbr.rel (%p15) target = $region8
    $region5: #{adaptive_attention_forward.7} parent=1 // loop_body
      %s19 = ssub.s32 %s14, 1
      %s20 = ssub.s32 %s14, 2
      %s27 = sadd.s32 1, %s22
      %p28 = scmp.ge.s32.totalorder %s27, 4
      %s29 = scalar_select %p28, 0, %s27
      %s30 = sadd.s32 1, %s21
      %s31 = scalar_select %p28, %s30, %s21
      %p32 = scmp.ge.s32.totalorder %s31, 4
      %s33 = scalar_select %p32, 0, %s31
      %s34 = ssub.s32 %s21, %s33
      %p35 = scmp.eq.s32.totalorder %s34, 0
      %s37 = sadd.s32 %s36, 1
      %s38 = scalar_select %p35, %s36, %s37
      %p41 = pneg %p35
      %p42 = scmp.eq.s32.totalorder %s14, 15
      %p43 = por %p41, %p42
      %p44 = scmp.ne.s32.totalorder %s36, %s39
      %p45 = scmp.eq.s32.totalorder %s14, 0
      %p46 = por %p44, %p45
      %p47 = scmp.ne.s32.totalorder %s36, %s39
      %p48 = scmp.eq.s32.totalorder %s19, 15
      %p49 = por %p47, %p48
      %p50 = scmp.ne.s32.totalorder %s39, %s40
      %p51 = scmp.eq.s32.totalorder %s19, 0
      %p52 = por %p50, %p51
      %p53 = scmp.ne.s32.totalorder %s39, %s40
      %p54 = scmp.eq.s32.totalorder %s20, 15
      %p55 = por %p53, %p54
      %p57 = scmp.ne.s32.totalorder %s40, %s56
      %p58 = scmp.eq.s32.totalorder %s20, 0
      %p59 = por %p57, %p58
      %s60 = ssub.s32 %s22, %s29
      %p61 = scmp.eq.s32.totalorder %s60, 0
      %s63 = sadd.s32 %s62, 1
      %s64 = scalar_select %p61, %s62, %s63
      %p67 = pneg %p61
      %p68 = scmp.eq.s32.totalorder %s14, 15
      %p69 = por %p67, %p68
      %p70 = scmp.ne.s32.totalorder %s62, %s65
      %p71 = scmp.eq.s32.totalorder %s14, 0
      %p72 = por %p70, %p71
      %p73 = scmp.ne.s32.totalorder %s62, %s65
      %p74 = scmp.eq.s32.totalorder %s19, 15
      %p75 = por %p73, %p74
      %p76 = scmp.ne.s32.totalorder %s65, %s66
      %p77 = scmp.eq.s32.totalorder %s19, 0
      %p78 = por %p76, %p77
      %p79 = scmp.ne.s32.totalorder %s65, %s66
      %p80 = scmp.eq.s32.totalorder %s20, 15
      %p81 = por %p79, %p80
      %p83 = scmp.ne.s32.totalorder %s66, %s82
      %p84 = scmp.eq.s32.totalorder %s20, 0
      %p85 = por %p83, %p84
      %s86 = ssub.s32 %s21, %s33
      %s87 = ssub.s32 %s22, %s29
      %s88 = sor.u32 %s86, %s87
      %p89 = scmp.eq.s32.totalorder %s88, 0
      %s91 = sadd.s32 %s90, 1
      %s92 = scalar_select %p89, %s90, %s91
      %p95 = pneg %p89
      %p96 = scmp.eq.s32.totalorder %s14, 15
      %p97 = por %p95, %p96
      %p98 = scmp.ne.s32.totalorder %s90, %s93
      %p99 = scmp.eq.s32.totalorder %s14, 0
      %p100 = por %p98, %p99
      %p101 = scmp.ne.s32.totalorder %s90, %s93
      %p102 = scmp.eq.s32.totalorder %s19, 15
      %p103 = por %p101, %p102
      %p104 = scmp.ne.s32.totalorder %s93, %s94
      %p105 = scmp.eq.s32.totalorder %s19, 0
      %p106 = por %p104, %p105
      %p107 = scmp.ne.s32.totalorder %s93, %s94
      %p108 = scmp.eq.s32.totalorder %s20, 15
      %p109 = por %p107, %p108
      %p111 = scmp.ne.s32.totalorder %s94, %s110
      %p112 = scmp.eq.s32.totalorder %s20, 0
      %p113 = por %p111, %p112
      %p114 = scmp.le.s32.totalorder 1, %s14
      %p115 = scmp.lt.s32.totalorder %s14, 17
      %p116 = pnand %p114, %p115
      %p117 = pneg %p116
      // Predicated region
      $region9: #{adaptive_attention_forward.7} parent=5 // pred_check
        _
      $region10: #{adaptive_attention_forward.7} parent=5 // pred_check_branch
        %119 = sbr.rel (%p116) target = $region12
      $region11: #{adaptive_attention_forward.7} parent=5 // pred_region
        %s120 = ssub.s32 %s14, 1
      $region12: #{adaptive_attention_forward.7} parent=5 // pred_fallthru
        _
      %p121 = scmp.lt.s32.totalorder %s14, 16
      // Predicated region
      $region13: #{adaptive_attention_forward.7} parent=5 // pred_check
        %p122 = pneg %p121
      $region14: #{adaptive_attention_forward.7} parent=5 // pred_check_branch
        %124 = sbr.rel (%p122) target = $region16
      $region15: #{adaptive_attention_forward.7} parent=5 // pred_region
        // Predicated region
        $region17: #{adaptive_attention_forward.7} parent=15 // pred_check
          %p125 = pneg %p46
        $region18: #{adaptive_attention_forward.7} parent=15 // pred_check_branch
          %127 = sbr.rel (%p125) target = $region20
        $region19: #{adaptive_attention_forward.7} parent=15 // pred_region
          %s128 = sand.u32 %s36, 1
          %s129 = scalar_lea.sflag [#allocation3], %s128
          %s130 = sand.u32 %s36, 1
          %s131 = smul.addr %s130, 256
          %s132 = scalar_lea.vmem [#allocation2], %s131
          %s133 = smul.u32 16, %s21
          %s135 = ssub.s32 4096, 4096
          %136 = vsyncadd %s129, %s135
          %s137 = smul.addr %s133, 4
          %s138 = smul.addr %s137, 64
          %s139 = scalar_lea.hbm %s0, %s138
          %s140 = sshll.u32 %s132, 4
          %s141 = int_to_ptr.vmem [resolvable:$true] %s140
          %146 = dma.hbm_to_vmem [thread:$0]  %s139, 4096, %s141, %s129, 256, 256, 16
        $region20: #{adaptive_attention_forward.7} parent=15 // pred_fallthru
          _
        // Predicated region
        $region21: #{adaptive_attention_forward.7} parent=15 // pred_check
          %p147 = pneg %p72
        $region22: #{adaptive_attention_forward.7} parent=15 // pred_check_branch
          %149 = sbr.rel (%p147) target = $region24
        $region23: #{adaptive_attention_forward.7} parent=15 // pred_region
          %s150 = sand.u32 %s62, 1
          %s151 = scalar_lea.sflag [#allocation5], %s150
          %s152 = sand.u32 %s62, 1
          %s153 = smul.addr %s152, 256
          %s154 = scalar_lea.vmem [#allocation4], %s153
          %s156 = ssub.s32 4096, 4096
          %157 = vsyncadd %s151, %s156
          %s158 = smul.addr %s22, 64
          %s159 = scalar_lea.hbm %s1, %s158
          %s160 = sshll.u32 %s154, 4
          %s161 = int_to_ptr.vmem [resolvable:$true] %s160
          %166 = dma.hbm_to_vmem [thread:$0]  %s159, 4096, %s161, %s151, 256, 64, 4
        $region24: #{adaptive_attention_forward.7} parent=15 // pred_fallthru
          _
      $region16: #{adaptive_attention_forward.7} parent=5 // pred_fallthru
        _
      %p167 = scmp.le.s32.totalorder 1, %s14
      %p168 = scmp.lt.s32.totalorder %s14, 17
      %p169 = pnand %p167, %p168
      %p170 = pneg %p169
      // Predicated region
      $region25: #{adaptive_attention_forward.7} parent=5 // pred_check
        _
      $region26: #{adaptive_attention_forward.7} parent=5 // pred_check_branch
        %172 = sbr.rel (%p169) target = $region28
      $region27: #{adaptive_attention_forward.7} parent=5 // pred_region
        %s173 = ssub.s32 %s14, 1
        %s174 = sand.u32 %s39, 1
        %s175 = scalar_lea.sflag [#allocation3], %s174
        %s176 = sand.u32 %s39, 1
        %s177 = smul.addr %s176, 256
        %s178 = scalar_lea.vmem [#allocation2], %s177
        // Predicated region
        $region29: #{adaptive_attention_forward.7} parent=27 // pred_check
          %p179 = pneg %p52
        $region30: #{adaptive_attention_forward.7} parent=27 // pred_check_branch
          %181 = sbr.rel (%p179) target = $region32
        $region31: #{adaptive_attention_forward.7} parent=27 // pred_region
          %182 = dma.done %s175, 4096
        $region32: #{adaptive_attention_forward.7} parent=27 // pred_fallthru
          _
        %s183 = sand.u32 %s65, 1
        %s184 = scalar_lea.sflag [#allocation5], %s183
        %s185 = sand.u32 %s65, 1
        %s186 = smul.addr %s185, 256
        %s187 = scalar_lea.vmem [#allocation4], %s186
        // Predicated region
        $region33: #{adaptive_attention_forward.7} parent=27 // pred_check
          %p188 = pneg %p78
        $region34: #{adaptive_attention_forward.7} parent=27 // pred_check_branch
          %190 = sbr.rel (%p188) target = $region36
        $region35: #{adaptive_attention_forward.7} parent=27 // pred_region
          %191 = dma.done %s184, 4096
        $region36: #{adaptive_attention_forward.7} parent=27 // pred_fallthru
          _
        %s192 = sand.u32 %s39, 1
        %s193 = scalar_lea.sflag [#allocation3], %s192
        %s194 = sand.u32 %s39, 1
        %s195 = smul.addr %s194, 256
        %s196 = scalar_lea.vmem [#allocation2], %s195
        %p197 = pneg %p52
        %p198 = pneg %p49
        %s199 = sand.u32 %s65, 1
        %s200 = scalar_lea.sflag [#allocation5], %s199
        %s201 = sand.u32 %s65, 1
        %s202 = smul.addr %s201, 256
        %s203 = scalar_lea.vmem [#allocation4], %s202
        %p204 = pneg %p78
        %p205 = pneg %p75
        %p206 = pneg %p106
        %p207 = pneg %p103
        %s208 = sand.u32 %s93, 1
        %s209 = sand.u32 %s93, 1
        %s210 = smul.addr %s209, 64
        %s211 = scalar_lea.vmem [#allocation6], %s210
        %s212 = smul.u32 16, %s23
        %s213 = smul.u32 16, %s23
        %v215 = vld [vmem:[%s178] sm:$0xff]
        %v216 = vld [vmem:[%s178 + $0x8] sm:$0xff]
        %v217 = vld [vmem:[%s178 + $0x10] sm:$0xff]
        %v218 = vld [vmem:[%s178 + $0x18] sm:$0xff]
        %v219 = vld [vmem:[%s178 + $0x20] sm:$0xff]
        %v220 = vld [vmem:[%s178 + $0x28] sm:$0xff]
        %v221 = vld [vmem:[%s178 + $0x30] sm:$0xff]
        %v222 = vld [vmem:[%s178 + $0x38] sm:$0xff]
        %v223 = vld [vmem:[%s178 + $0x40] sm:$0xff]
        %v224 = vld [vmem:[%s178 + $0x48] sm:$0xff]
        %v225 = vld [vmem:[%s178 + $0x50] sm:$0xff]
        %v226 = vld [vmem:[%s178 + $0x58] sm:$0xff]
        %v227 = vld [vmem:[%s178 + $0x60] sm:$0xff]
        %v228 = vld [vmem:[%s178 + $0x68] sm:$0xff]
        %v229 = vld [vmem:[%s178 + $0x70] sm:$0xff]
        %v230 = vld [vmem:[%s178 + $0x78] sm:$0xff]
        %v231 = vld [vmem:[%s178 + $0x80] sm:$0xff]
        %v232 = vld [vmem:[%s178 + $0x88] sm:$0xff]
        %v233 = vld [vmem:[%s178 + $0x90] sm:$0xff]
        %v234 = vld [vmem:[%s178 + $0x98] sm:$0xff]
        %v235 = vld [vmem:[%s178 + $0xa0] sm:$0xff]
        %v236 = vld [vmem:[%s178 + $0xa8] sm:$0xff]
        %v237 = vld [vmem:[%s178 + $0xb0] sm:$0xff]
        %v238 = vld [vmem:[%s178 + $0xb8] sm:$0xff]
        %v239 = vld [vmem:[%s178 + $0xc0] sm:$0xff]
        %v240 = vld [vmem:[%s178 + $0xc8] sm:$0xff]
        %v241 = vld [vmem:[%s178 + $0xd0] sm:$0xff]
        %v242 = vld [vmem:[%s178 + $0xd8] sm:$0xff]
        %v243 = vld [vmem:[%s178 + $0xe0] sm:$0xff]
        %v244 = vld [vmem:[%s178 + $0xe8] sm:$0xff]
        %v245 = vld [vmem:[%s178 + $0xf0] sm:$0xff]
        %v246 = vld [vmem:[%s178 + $0xf8] sm:$0xff]
        %v247 = vld [vmem:[%s187] sm:$0xf]
        %v248 = vld [vmem:[%s187 + $0x4] sm:$0xf]
        %v249 = vld [vmem:[%s187 + $0x8] sm:$0xf]
        %v250 = vld [vmem:[%s187 + $0xc] sm:$0xf]
        %v251 = vld [vmem:[%s187 + $0x10] sm:$0xf]
        %v252 = vld [vmem:[%s187 + $0x14] sm:$0xf]
        %v253 = vld [vmem:[%s187 + $0x18] sm:$0xf]
        %v254 = vld [vmem:[%s187 + $0x1c] sm:$0xf]
        %v255 = vld [vmem:[%s187 + $0x20] sm:$0xf]
        %v256 = vld [vmem:[%s187 + $0x24] sm:$0xf]
        %v257 = vld [vmem:[%s187 + $0x28] sm:$0xf]
        %v258 = vld [vmem:[%s187 + $0x2c] sm:$0xf]
        %v259 = vld [vmem:[%s187 + $0x30] sm:$0xf]
        %v260 = vld [vmem:[%s187 + $0x34] sm:$0xf]
        %v261 = vld [vmem:[%s187 + $0x38] sm:$0xf]
        %v262 = vld [vmem:[%s187 + $0x3c] sm:$0xf]
        %v263 = vld [vmem:[%s187 + $0x40] sm:$0xf]
        %v264 = vld [vmem:[%s187 + $0x44] sm:$0xf]
        %v265 = vld [vmem:[%s187 + $0x48] sm:$0xf]
        %v266 = vld [vmem:[%s187 + $0x4c] sm:$0xf]
        %v267 = vld [vmem:[%s187 + $0x50] sm:$0xf]
        %v268 = vld [vmem:[%s187 + $0x54] sm:$0xf]
        %v269 = vld [vmem:[%s187 + $0x58] sm:$0xf]
        %v270 = vld [vmem:[%s187 + $0x5c] sm:$0xf]
        %v271 = vld [vmem:[%s187 + $0x60] sm:$0xf]
        %v272 = vld [vmem:[%s187 + $0x64] sm:$0xf]
        %v273 = vld [vmem:[%s187 + $0x68] sm:$0xf]
        %v274 = vld [vmem:[%s187 + $0x6c] sm:$0xf]
        %v275 = vld [vmem:[%s187 + $0x70] sm:$0xf]
        %v276 = vld [vmem:[%s187 + $0x74] sm:$0xf]
        %v277 = vld [vmem:[%s187 + $0x78] sm:$0xf]
        %v278 = vld [vmem:[%s187 + $0x7c] sm:$0xf]
        %v279 = vld [vmem:[%s187 + $0x80] sm:$0xf]
        %v280 = vld [vmem:[%s187 + $0x84] sm:$0xf]
        %v281 = vld [vmem:[%s187 + $0x88] sm:$0xf]
        %v282 = vld [vmem:[%s187 + $0x8c] sm:$0xf]
        %v283 = vld [vmem:[%s187 + $0x90] sm:$0xf]
        %v284 = vld [vmem:[%s187 + $0x94] sm:$0xf]
        %v285 = vld [vmem:[%s187 + $0x98] sm:$0xf]
        %v286 = vld [vmem:[%s187 + $0x9c] sm:$0xf]
        %v287 = vld [vmem:[%s187 + $0xa0] sm:$0xf]
        %v288 = vld [vmem:[%s187 + $0xa4] sm:$0xf]
        %v289 = vld [vmem:[%s187 + $0xa8] sm:$0xf]
        %v290 = vld [vmem:[%s187 + $0xac] sm:$0xf]
        %v291 = vld [vmem:[%s187 + $0xb0] sm:$0xf]
        %v292 = vld [vmem:[%s187 + $0xb4] sm:$0xf]
        %v293 = vld [vmem:[%s187 + $0xb8] sm:$0xf]
        %v294 = vld [vmem:[%s187 + $0xbc] sm:$0xf]
        %v295 = vld [vmem:[%s187 + $0xc0] sm:$0xf]
        %v296 = vld [vmem:[%s187 + $0xc4] sm:$0xf]
        %v297 = vld [vmem:[%s187 + $0xc8] sm:$0xf]
        %v298 = vld [vmem:[%s187 + $0xcc] sm:$0xf]
        %v299 = vld [vmem:[%s187 + $0xd0] sm:$0xf]
        %v300 = vld [vmem:[%s187 + $0xd4] sm:$0xf]
        %v301 = vld [vmem:[%s187 + $0xd8] sm:$0xf]
        %v302 = vld [vmem:[%s187 + $0xdc] sm:$0xf]
        %v303 = vld [vmem:[%s187 + $0xe0] sm:$0xf]
        %v304 = vld [vmem:[%s187 + $0xe4] sm:$0xf]
        %v305 = vld [vmem:[%s187 + $0xe8] sm:$0xf]
        %v306 = vld [vmem:[%s187 + $0xec] sm:$0xf]
        %v307 = vld [vmem:[%s187 + $0xf0] sm:$0xf]
        %v308 = vld [vmem:[%s187 + $0xf4] sm:$0xf]
        %v309 = vld [vmem:[%s187 + $0xf8] sm:$0xf]
        %v310 = vld [vmem:[%s187 + $0xfc] sm:$0xf]
        %v343 = vunpack.c.l.b16 %v215
        %v344 = vunpack.c.h.b16 %v215
        %v345 = vunpack.c.l.b16 %v216
        %v346 = vunpack.c.h.b16 %v216
        %v347 = vunpack.c.l.b16 %v217
        %v348 = vunpack.c.h.b16 %v217
        %v349 = vunpack.c.l.b16 %v218
        %v350 = vunpack.c.h.b16 %v218
        %v351 = vunpack.c.l.b16 %v219
        %v352 = vunpack.c.h.b16 %v219
        %v353 = vunpack.c.l.b16 %v220
        %v354 = vunpack.c.h.b16 %v220
        %v355 = vunpack.c.l.b16 %v221
        %v356 = vunpack.c.h.b16 %v221
        %v357 = vunpack.c.l.b16 %v222
        %v358 = vunpack.c.h.b16 %v222
        %v359 = vunpack.c.l.b16 %v223
        %v360 = vunpack.c.h.b16 %v223
        %v361 = vunpack.c.l.b16 %v224
        %v362 = vunpack.c.h.b16 %v224
        %v363 = vunpack.c.l.b16 %v225
        %v364 = vunpack.c.h.b16 %v225
        %v365 = vunpack.c.l.b16 %v226
        %v366 = vunpack.c.h.b16 %v226
        %v367 = vunpack.c.l.b16 %v227
        %v368 = vunpack.c.h.b16 %v227
        %v369 = vunpack.c.l.b16 %v228
        %v370 = vunpack.c.h.b16 %v228
        %v371 = vunpack.c.l.b16 %v229
        %v372 = vunpack.c.h.b16 %v229
        %v373 = vunpack.c.l.b16 %v230
        %v374 = vunpack.c.h.b16 %v230
        %v375 = vunpack.c.l.b16 %v231
        %v376 = vunpack.c.h.b16 %v231
        %v377 = vunpack.c.l.b16 %v232
        %v378 = vunpack.c.h.b16 %v232
        %v379 = vunpack.c.l.b16 %v233
        %v380 = vunpack.c.h.b16 %v233
        %v381 = vunpack.c.l.b16 %v234
        %v382 = vunpack.c.h.b16 %v234
        %v383 = vunpack.c.l.b16 %v235
        %v384 = vunpack.c.h.b16 %v235
        %v385 = vunpack.c.l.b16 %v236
        %v386 = vunpack.c.h.b16 %v236
        %v387 = vunpack.c.l.b16 %v237
        %v388 = vunpack.c.h.b16 %v237
        %v389 = vunpack.c.l.b16 %v238
        %v390 = vunpack.c.h.b16 %v238
        %v391 = vunpack.c.l.b16 %v239
        %v392 = vunpack.c.h.b16 %v239
        %v393 = vunpack.c.l.b16 %v240
        %v394 = vunpack.c.h.b16 %v240
        %v395 = vunpack.c.l.b16 %v241
        %v396 = vunpack.c.h.b16 %v241
        %v397 = vunpack.c.l.b16 %v242
        %v398 = vunpack.c.h.b16 %v242
        %v399 = vunpack.c.l.b16 %v243
        %v400 = vunpack.c.h.b16 %v243
        %v401 = vunpack.c.l.b16 %v244
        %v402 = vunpack.c.h.b16 %v244
        %v403 = vunpack.c.l.b16 %v245
        %v404 = vunpack.c.h.b16 %v245
        %v405 = vunpack.c.l.b16 %v246
        %v406 = vunpack.c.h.b16 %v246
        %v407 = vpack.c.b16 %v347, %v343
        %v408 = vpack.c.b16 %v348, %v344
        %v409 = vpack.c.b16 %v349, %v345
        %v410 = vpack.c.b16 %v350, %v346
        %v411 = vpack.c.b16 %v355, %v351
        %v412 = vpack.c.b16 %v356, %v352
        %v413 = vpack.c.b16 %v357, %v353
        %v414 = vpack.c.b16 %v358, %v354
        %v415 = vpack.c.b16 %v363, %v359
        %v416 = vpack.c.b16 %v364, %v360
        %v417 = vpack.c.b16 %v365, %v361
        %v418 = vpack.c.b16 %v366, %v362
        %v419 = vpack.c.b16 %v371, %v367
        %v420 = vpack.c.b16 %v372, %v368
        %v421 = vpack.c.b16 %v373, %v369
        %v422 = vpack.c.b16 %v374, %v370
        %v423 = vpack.c.b16 %v379, %v375
        %v424 = vpack.c.b16 %v380, %v376
        %v425 = vpack.c.b16 %v381, %v377
        %v426 = vpack.c.b16 %v382, %v378
        %v427 = vpack.c.b16 %v387, %v383
        %v428 = vpack.c.b16 %v388, %v384
        %v429 = vpack.c.b16 %v389, %v385
        %v430 = vpack.c.b16 %v390, %v386
        %v431 = vpack.c.b16 %v395, %v391
        %v432 = vpack.c.b16 %v396, %v392
        %v433 = vpack.c.b16 %v397, %v393
        %v434 = vpack.c.b16 %v398, %v394
        %v435 = vpack.c.b16 %v403, %v399
        %v436 = vpack.c.b16 %v404, %v400
        %v437 = vpack.c.b16 %v405, %v401
        %v438 = vpack.c.b16 %v406, %v402
        %v535 = vunpack.c.l.b16 %v247
        %v536 = vunpack.c.l.b16 %v248
        %v537 = vunpack.c.l.b16 %v249
        %v538 = vunpack.c.l.b16 %v250
        %v539 = vunpack.c.l.b16 %v251
        %v540 = vunpack.c.l.b16 %v252
        %v541 = vunpack.c.l.b16 %v253
        %v542 = vunpack.c.l.b16 %v254
        %v543 = vunpack.c.l.b16 %v255
        %v544 = vunpack.c.l.b16 %v256
        %v545 = vunpack.c.l.b16 %v257
        %v546 = vunpack.c.l.b16 %v258
        %v547 = vunpack.c.l.b16 %v259
        %v548 = vunpack.c.l.b16 %v260
        %v549 = vunpack.c.l.b16 %v261
        %v550 = vunpack.c.l.b16 %v262
        %v551 = vunpack.c.l.b16 %v263
        %v552 = vunpack.c.l.b16 %v264
        %v553 = vunpack.c.l.b16 %v265
        %v554 = vunpack.c.l.b16 %v266
        %v555 = vunpack.c.l.b16 %v267
        %v556 = vunpack.c.l.b16 %v268
        %v557 = vunpack.c.l.b16 %v269
        %v558 = vunpack.c.l.b16 %v270
        %v559 = vunpack.c.l.b16 %v271
        %v560 = vunpack.c.l.b16 %v272
        %v561 = vunpack.c.l.b16 %v273
        %v562 = vunpack.c.l.b16 %v274
        %v563 = vunpack.c.l.b16 %v275
        %v564 = vunpack.c.l.b16 %v276
        %v565 = vunpack.c.l.b16 %v277
        %v566 = vunpack.c.l.b16 %v278
        %v567 = vunpack.c.l.b16 %v279
        %v568 = vunpack.c.l.b16 %v280
        %v569 = vunpack.c.l.b16 %v281
        %v570 = vunpack.c.l.b16 %v282
        %v571 = vunpack.c.l.b16 %v283
        %v572 = vunpack.c.l.b16 %v284
        %v573 = vunpack.c.l.b16 %v285
        %v574 = vunpack.c.l.b16 %v286
        %v575 = vunpack.c.l.b16 %v287
        %v576 = vunpack.c.l.b16 %v288
        %v577 = vunpack.c.l.b16 %v289
        %v578 = vunpack.c.l.b16 %v290
        %v579 = vunpack.c.l.b16 %v291
        %v580 = vunpack.c.l.b16 %v292
        %v581 = vunpack.c.l.b16 %v293
        %v582 = vunpack.c.l.b16 %v294
        %v583 = vunpack.c.l.b16 %v295
        %v584 = vunpack.c.l.b16 %v296
        %v585 = vunpack.c.l.b16 %v297
        %v586 = vunpack.c.l.b16 %v298
        %v587 = vunpack.c.l.b16 %v299
        %v588 = vunpack.c.l.b16 %v300
        %v589 = vunpack.c.l.b16 %v301
        %v590 = vunpack.c.l.b16 %v302
        %v591 = vunpack.c.l.b16 %v303
        %v592 = vunpack.c.l.b16 %v304
        %v593 = vunpack.c.l.b16 %v305
        %v594 = vunpack.c.l.b16 %v306
        %v595 = vunpack.c.l.b16 %v307
        %v596 = vunpack.c.l.b16 %v308
        %v597 = vunpack.c.l.b16 %v309
        %v598 = vunpack.c.l.b16 %v310
        %v599 = vpack.c.b16 %v536, %v535
        %v600 = vpack.c.b16 %v538, %v537
        %v601 = vpack.c.b16 %v540, %v539
        %v602 = vpack.c.b16 %v542, %v541
        %v603 = vpack.c.b16 %v544, %v543
        %v604 = vpack.c.b16 %v546, %v545
        %v605 = vpack.c.b16 %v548, %v547
        %v606 = vpack.c.b16 %v550, %v549
        %v607 = vpack.c.b16 %v552, %v551
        %v608 = vpack.c.b16 %v554, %v553
        %v609 = vpack.c.b16 %v556, %v555
        %v610 = vpack.c.b16 %v558, %v557
        %v611 = vpack.c.b16 %v560, %v559
        %v612 = vpack.c.b16 %v562, %v561
        %v613 = vpack.c.b16 %v564, %v563
        %v614 = vpack.c.b16 %v566, %v565
        %v615 = vpack.c.b16 %v568, %v567
        %v616 = vpack.c.b16 %v570, %v569
        %v617 = vpack.c.b16 %v572, %v571
        %v618 = vpack.c.b16 %v574, %v573
        %v619 = vpack.c.b16 %v576, %v575
        %v620 = vpack.c.b16 %v578, %v577
        %v621 = vpack.c.b16 %v580, %v579
        %v622 = vpack.c.b16 %v582, %v581
        %v623 = vpack.c.b16 %v584, %v583
        %v624 = vpack.c.b16 %v586, %v585
        %v625 = vpack.c.b16 %v588, %v587
        %v626 = vpack.c.b16 %v590, %v589
        %v627 = vpack.c.b16 %v592, %v591
        %v628 = vpack.c.b16 %v594, %v593
        %v629 = vpack.c.b16 %v596, %v595
        %v630 = vpack.c.b16 %v598, %v597
        %663 = vmatprep.subr.bf16.mxu0 0
        %664 = vmatpush1.bf16.msra.mxu0 %v606
        %665 = vmatprep.subr.bf16.mxu0 0
        %666 = vmatpush1.bf16.msra.mxu0 %v605
        %667 = vmatprep.subr.bf16.mxu0 0
        %668 = vmatpush1.bf16.msra.mxu0 %v604
        %669 = vmatprep.subr.bf16.mxu0 0
        %670 = vmatpush1.bf16.msra.mxu0 %v603
        %671 = vmatprep.subr.bf16.mxu0 0
        %672 = vmatpush1.bf16.msra.mxu0 %v602
        %673 = vmatprep.subr.bf16.mxu0 0
        %674 = vmatpush1.bf16.msra.mxu0 %v601
        %675 = vmatprep.subr.bf16.mxu0 0
        %676 = vmatpush1.bf16.msra.mxu0 %v600
        %677 = vmatprep.subr.bf16.mxu0 0
        %678 = vmatpush1.bf16.msra.mxu0 %v599
        %679 = vmatprep.subr.bf16.mxu0 0
        %680 = vmatpush2.bf16.msra.mxu0 %v614
        %681 = vmatprep.subr.bf16.mxu0 0
        %682 = vmatpush2.bf16.msra.mxu0 %v613
        %683 = vmatprep.subr.bf16.mxu0 0
        %684 = vmatpush2.bf16.msra.mxu0 %v612
        %685 = vmatprep.subr.bf16.mxu0 0
        %686 = vmatpush2.bf16.msra.mxu0 %v611
        %687 = vmatprep.subr.bf16.mxu0 0
        %688 = vmatpush2.bf16.msra.mxu0 %v610
        %689 = vmatprep.subr.bf16.mxu0 0
        %690 = vmatpush2.bf16.msra.mxu0 %v609
        %691 = vmatprep.subr.bf16.mxu0 0
        %692 = vmatpush2.bf16.msra.mxu0 %v608
        %693 = vmatprep.subr.bf16.mxu0 0
        %694 = vmatpush2.bf16.msra.mxu0 %v607
        %695 = vmatprep.mubr.bf16.mxu0 %v408
        %696 = vmatmul.mubr.bf16.gmra.mxu0 %v407
        %v697 = vpop.f32.mrf.mxu0
        %v698 = vadd.f32 0.0, %v697
        %v699 = vpop.f32.mrf.mxu0
        %v700 = vpop.f32.mrf.mxu0
        %v701 = vadd.f32 0.0, %v700
        %v702 = vpop.f32.mrf.mxu0
        %703 = vmatprep.mubr.bf16.mxu0 %v412
        %704 = vmatmul.mubr.bf16.gmra.mxu0 %v411
        %v705 = vpop.f32.mrf.mxu0
        %v706 = vadd.f32 0.0, %v705
        %v707 = vpop.f32.mrf.mxu0
        %v708 = vpop.f32.mrf.mxu0
        %v709 = vadd.f32 0.0, %v708
        %v710 = vpop.f32.mrf.mxu0
        %711 = vmatprep.mubr.bf16.mxu0 %v416
        %712 = vmatmul.mubr.bf16.gmra.mxu0 %v415
        %v713 = vpop.f32.mrf.mxu0
        %v714 = vadd.f32 0.0, %v713
        %v715 = vpop.f32.mrf.mxu0
        %v716 = vpop.f32.mrf.mxu0
        %v717 = vadd.f32 0.0, %v716
        %v718 = vpop.f32.mrf.mxu0
        %719 = vmatprep.mubr.bf16.mxu0 %v420
        %720 = vmatmul.mubr.bf16.gmra.mxu0 %v419
        %v721 = vpop.f32.mrf.mxu0
        %v722 = vadd.f32 0.0, %v721
        %v723 = vpop.f32.mrf.mxu0
        %v724 = vpop.f32.mrf.mxu0
        %v725 = vadd.f32 0.0, %v724
        %v726 = vpop.f32.mrf.mxu0
        %727 = vmatprep.mubr.bf16.mxu0 %v424
        %728 = vmatmul.mubr.bf16.gmra.mxu0 %v423
        %v729 = vpop.f32.mrf.mxu0
        %v730 = vadd.f32 0.0, %v729
        %v731 = vpop.f32.mrf.mxu0
        %v732 = vpop.f32.mrf.mxu0
        %v733 = vadd.f32 0.0, %v732
        %v734 = vpop.f32.mrf.mxu0
        %735 = vmatprep.mubr.bf16.mxu0 %v428
        %736 = vmatmul.mubr.bf16.gmra.mxu0 %v427
        %v737 = vpop.f32.mrf.mxu0
        %v738 = vadd.f32 0.0, %v737
        %v739 = vpop.f32.mrf.mxu0
        %v740 = vpop.f32.mrf.mxu0
        %v741 = vadd.f32 0.0, %v740
        %v742 = vpop.f32.mrf.mxu0
        %743 = vmatprep.mubr.bf16.mxu0 %v432
        %744 = vmatmul.mubr.bf16.gmra.mxu0 %v431
        %v745 = vpop.f32.mrf.mxu0
        %v746 = vadd.f32 0.0, %v745
        %v747 = vpop.f32.mrf.mxu0
        %v748 = vpop.f32.mrf.mxu0
        %v749 = vadd.f32 0.0, %v748
        %v750 = vpop.f32.mrf.mxu0
        %751 = vmatprep.mubr.bf16.mxu0 %v436
        %752 = vmatmul.mubr.bf16.gmra.mxu0 %v435
        %v753 = vpop.f32.mrf.mxu0
        %v754 = vadd.f32 0.0, %v753
        %v755 = vpop.f32.mrf.mxu0
        %v756 = vpop.f32.mrf.mxu0
        %v757 = vadd.f32 0.0, %v756
        %v758 = vpop.f32.mrf.mxu0
        %759 = vdwg.mxu0
        %760 = vmatprep.subr.bf16.mxu0 0
        %761 = vmatpush1.bf16.msra.mxu0 %v622
        %762 = vmatprep.subr.bf16.mxu0 0
        %763 = vmatpush1.bf16.msra.mxu0 %v621
        %764 = vmatprep.subr.bf16.mxu0 0
        %765 = vmatpush1.bf16.msra.mxu0 %v620
        %766 = vmatprep.subr.bf16.mxu0 0
        %767 = vmatpush1.bf16.msra.mxu0 %v619
        %768 = vmatprep.subr.bf16.mxu0 0
        %769 = vmatpush1.bf16.msra.mxu0 %v618
        %770 = vmatprep.subr.bf16.mxu0 0
        %771 = vmatpush1.bf16.msra.mxu0 %v617
        %772 = vmatprep.subr.bf16.mxu0 0
        %773 = vmatpush1.bf16.msra.mxu0 %v616
        %774 = vmatprep.subr.bf16.mxu0 0
        %775 = vmatpush1.bf16.msra.mxu0 %v615
        %776 = vmatprep.subr.bf16.mxu0 0
        %777 = vmatpush2.bf16.msra.mxu0 %v630
        %778 = vmatprep.subr.bf16.mxu0 0
        %779 = vmatpush2.bf16.msra.mxu0 %v629
        %780 = vmatprep.subr.bf16.mxu0 0
        %781 = vmatpush2.bf16.msra.mxu0 %v628
        %782 = vmatprep.subr.bf16.mxu0 0
        %783 = vmatpush2.bf16.msra.mxu0 %v627
        %784 = vmatprep.subr.bf16.mxu0 0
        %785 = vmatpush2.bf16.msra.mxu0 %v626
        %786 = vmatprep.subr.bf16.mxu0 0
        %787 = vmatpush2.bf16.msra.mxu0 %v625
        %788 = vmatprep.subr.bf16.mxu0 0
        %789 = vmatpush2.bf16.msra.mxu0 %v624
        %790 = vmatprep.subr.bf16.mxu0 0
        %791 = vmatpush2.bf16.msra.mxu0 %v623
        %792 = vmatprep.mubr.bf16.mxu0 %v410
        %793 = vmatmul.mubr.bf16.gmra.mxu0 %v409
        %v794 = vpop.f32.mrf.mxu0
        %v795 = vadd.f32 %v698, %v794
        %v796 = vpop.f32.mrf.mxu0
        %v797 = vpop.f32.mrf.mxu0
        %v798 = vadd.f32 %v701, %v797
        %v799 = vpop.f32.mrf.mxu0
        %800 = vmatprep.mubr.bf16.mxu0 %v414
        %801 = vmatmul.mubr.bf16.gmra.mxu0 %v413
        %v802 = vpop.f32.mrf.mxu0
        %v803 = vadd.f32 %v706, %v802
        %v804 = vpop.f32.mrf.mxu0
        %v805 = vpop.f32.mrf.mxu0
        %v806 = vadd.f32 %v709, %v805
        %v807 = vpop.f32.mrf.mxu0
        %808 = vmatprep.mubr.bf16.mxu0 %v418
        %809 = vmatmul.mubr.bf16.gmra.mxu0 %v417
        %v810 = vpop.f32.mrf.mxu0
        %v811 = vadd.f32 %v714, %v810
        %v812 = vpop.f32.mrf.mxu0
        %v813 = vpop.f32.mrf.mxu0
        %v814 = vadd.f32 %v717, %v813
        %v815 = vpop.f32.mrf.mxu0
        %816 = vmatprep.mubr.bf16.mxu0 %v422
        %817 = vmatmul.mubr.bf16.gmra.mxu0 %v421
        %v818 = vpop.f32.mrf.mxu0
        %v819 = vadd.f32 %v722, %v818
        %v820 = vpop.f32.mrf.mxu0
        %v821 = vpop.f32.mrf.mxu0
        %v822 = vadd.f32 %v725, %v821
        %v823 = vpop.f32.mrf.mxu0
        %824 = vmatprep.mubr.bf16.mxu0 %v426
        %825 = vmatmul.mubr.bf16.gmra.mxu0 %v425
        %v826 = vpop.f32.mrf.mxu0
        %v827 = vadd.f32 %v730, %v826
        %v828 = vpop.f32.mrf.mxu0
        %v829 = vpop.f32.mrf.mxu0
        %v830 = vadd.f32 %v733, %v829
        %v831 = vpop.f32.mrf.mxu0
        %832 = vmatprep.mubr.bf16.mxu0 %v430
        %833 = vmatmul.mubr.bf16.gmra.mxu0 %v429
        %v834 = vpop.f32.mrf.mxu0
        %v835 = vadd.f32 %v738, %v834
        %v836 = vpop.f32.mrf.mxu0
        %v837 = vpop.f32.mrf.mxu0
        %v838 = vadd.f32 %v741, %v837
        %v839 = vpop.f32.mrf.mxu0
        %840 = vmatprep.mubr.bf16.mxu0 %v434
        %841 = vmatmul.mubr.bf16.gmra.mxu0 %v433
        %v842 = vpop.f32.mrf.mxu0
        %v843 = vadd.f32 %v746, %v842
        %v844 = vpop.f32.mrf.mxu0
        %v845 = vpop.f32.mrf.mxu0
        %v846 = vadd.f32 %v749, %v845
        %v847 = vpop.f32.mrf.mxu0
        %848 = vmatprep.mubr.bf16.mxu0 %v438
        %849 = vmatmul.mubr.bf16.gmra.mxu0 %v437
        %v850 = vpop.f32.mrf.mxu0
        %v851 = vadd.f32 %v754, %v850
        %v852 = vpop.f32.mrf.mxu0
        %v853 = vpop.f32.mrf.mxu0
        %v854 = vadd.f32 %v757, %v853
        %v855 = vpop.f32.mrf.mxu0
        %856 = vdwg.mxu0
        %v857 = vpack.c.bf16 %v798, %v795
        %v858 = vpack.c.bf16 %v806, %v803
        %v859 = vpack.c.bf16 %v814, %v811
        %v860 = vpack.c.bf16 %v822, %v819
        %v861 = vpack.c.bf16 %v830, %v827
        %v862 = vpack.c.bf16 %v838, %v835
        %v863 = vpack.c.bf16 %v846, %v843
        %v864 = vpack.c.bf16 %v854, %v851
        %v873 = vunpack.c.l.b16 %v857
        %v874 = vunpack.c.h.b16 %v857
        %v875 = vunpack.c.l.b16 %v858
        %v876 = vunpack.c.h.b16 %v858
        %v877 = vunpack.c.l.b16 %v859
        %v878 = vunpack.c.h.b16 %v859
        %v879 = vunpack.c.l.b16 %v860
        %v880 = vunpack.c.h.b16 %v860
        %v881 = vunpack.c.l.b16 %v861
        %v882 = vunpack.c.h.b16 %v861
        %v883 = vunpack.c.l.b16 %v862
        %v884 = vunpack.c.h.b16 %v862
        %v885 = vunpack.c.l.b16 %v863
        %v886 = vunpack.c.h.b16 %v863
        %v887 = vunpack.c.l.b16 %v864
        %v888 = vunpack.c.h.b16 %v864
        %v889 = vpack.c.b16 %v873, %v873
        %v890 = vpack.c.b16 %v874, %v874
        %v891 = vpack.c.b16 %v875, %v875
        %v892 = vpack.c.b16 %v876, %v876
        %v893 = vpack.c.b16 %v877, %v877
        %v894 = vpack.c.b16 %v878, %v878
        %v895 = vpack.c.b16 %v879, %v879
        %v896 = vpack.c.b16 %v880, %v880
        %v897 = vpack.c.b16 %v881, %v881
        %v898 = vpack.c.b16 %v882, %v882
        %v899 = vpack.c.b16 %v883, %v883
        %v900 = vpack.c.b16 %v884, %v884
        %v901 = vpack.c.b16 %v885, %v885
        %v902 = vpack.c.b16 %v886, %v886
        %v903 = vpack.c.b16 %v887, %v887
        %v904 = vpack.c.b16 %v888, %v888
        %921 = vst [vmem:[%s211] sm:$0xf] %v889
        %922 = vst [vmem:[%s211 + $0x4] sm:$0xf] %v890
        %923 = vst [vmem:[%s211 + $0x8] sm:$0xf] %v891
        %924 = vst [vmem:[%s211 + $0xc] sm:$0xf] %v892
        %925 = vst [vmem:[%s211 + $0x10] sm:$0xf] %v893
        %926 = vst [vmem:[%s211 + $0x14] sm:$0xf] %v894
        %927 = vst [vmem:[%s211 + $0x18] sm:$0xf] %v895
        %928 = vst [vmem:[%s211 + $0x1c] sm:$0xf] %v896
        %929 = vst [vmem:[%s211 + $0x20] sm:$0xf] %v897
        %930 = vst [vmem:[%s211 + $0x24] sm:$0xf] %v898
        %931 = vst [vmem:[%s211 + $0x28] sm:$0xf] %v899
        %932 = vst [vmem:[%s211 + $0x2c] sm:$0xf] %v900
        %933 = vst [vmem:[%s211 + $0x30] sm:$0xf] %v901
        %934 = vst [vmem:[%s211 + $0x34] sm:$0xf] %v902
        %935 = vst [vmem:[%s211 + $0x38] sm:$0xf] %v903
        %936 = vst [vmem:[%s211 + $0x3c] sm:$0xf] %v904
        %s937 = sand.u32 %s93, 1
        %s938 = sand.u32 %s93, 1
        %s939 = smul.addr %s938, 64
        %s940 = scalar_lea.vmem [#allocation6], %s939
        // Predicated region
        $region37: #{adaptive_attention_forward.7} parent=27 // pred_check
          %p941 = pneg %p103
        $region38: #{adaptive_attention_forward.7} parent=27 // pred_check_branch
          %943 = sbr.rel (%p941) target = $region40
        $region39: #{adaptive_attention_forward.7} parent=27 // pred_region
          %s944 = smul.u32 16, %s23
          %s945 = smul.addr %s944, 4
          %s946 = sadd.s32 %s24, %s945
          %s947 = smul.addr %s946, 4
          %s948 = scalar_lea.vmem %s2, %s947
          // Predicated region
          $region41: #{adaptive_attention_forward.7} parent=39 // pred_check
            _
          $region42: #{adaptive_attention_forward.7} parent=39 // pred_check_branch
            %950 = sbr.rel (0) target = $region44
          $region43: #{adaptive_attention_forward.7} parent=39 // pred_region
            // Predicated region
            $region45: #{adaptive_attention_forward.7} parent=43 // pred_check
              _
            $region46: #{adaptive_attention_forward.7} parent=43 // pred_check_branch
              %952 = sbr.rel target = $region48
            $region47: #{adaptive_attention_forward.7} parent=43 // pred_region
              // Predicated region
              $region60: #{adaptive_attention_forward.7} parent=47 // pred_check
                _
              $region61: #{adaptive_attention_forward.7} parent=47 // pred_check_branch
                %998 = sbr.rel (0) target = $region63
              $region62: #{adaptive_attention_forward.7} parent=47 // pred_region
                loop: start=0, step=1, limit=1
                $region64: #{adaptive_attention_forward.7} parent=62 // loop_pre_header
                  _
                $region65: #{adaptive_attention_forward.7} parent=62 // loop_header
                  %s1000 = sphi 0, %s1004
                  %p1001 = scmp.ge.s32.totalorder %s1000, 1
                  %s1005 = sphi %s940, %s940
                  %s1006 = sphi %s948, %s948
                $region66: #{adaptive_attention_forward.7} parent=62 // loop_header_branch
                  %1003 = sbr.rel (%p1001) target = $region70
                $region67: #{adaptive_attention_forward.7} parent=62 // loop_body
                  _
                $region68: #{adaptive_attention_forward.7} parent=62 // loop_footer
                  %s1004 = sadd.s32 1, %s1000
                $region69: #{adaptive_attention_forward.7} parent=62 // loop_footer_branch
                  %999 = sbr.rel target = $region65
                $region70: #{adaptive_attention_forward.7} parent=62 // loop_exit
                  _
                %s1008 = ssub.s32 16, 1
                loop: start=0, step=1, limit=1
                $region71: #{adaptive_attention_forward.7} parent=62 // loop_pre_header
                  _
                $region72: #{adaptive_attention_forward.7} parent=62 // loop_header
                  %s1010 = sphi 0, %s1014
                  %p1011 = scmp.ge.s32.totalorder %s1010, 1
                  %s1015 = sphi %s940, %s940
                  %s1016 = sphi %s948, %s948
                $region73: #{adaptive_attention_forward.7} parent=62 // loop_header_branch
                  %1013 = sbr.rel (%p1011) target = $region77
                $region74: #{adaptive_attention_forward.7} parent=62 // loop_body
                  %v1017 = vld [vmem:[%s1015] sm:%s1008]
                  %1018 = vst [vmem:[%s1016] sm:%s1008] %v1017
                  %v1019 = vld [vmem:[%s1015 + $0x4] sm:%s1008]
                  %1020 = vst [vmem:[%s1016 + $0x10] sm:%s1008] %v1019
                  %v1021 = vld [vmem:[%s1015 + $0x8] sm:%s1008]
                  %1022 = vst [vmem:[%s1016 + $0x20] sm:%s1008] %v1021
                  %v1023 = vld [vmem:[%s1015 + $0xc] sm:%s1008]
                  %1024 = vst [vmem:[%s1016 + $0x30] sm:%s1008] %v1023
                  %v1025 = vld [vmem:[%s1015 + $0x10] sm:%s1008]
                  %1026 = vst [vmem:[%s1016 + $0x40] sm:%s1008] %v1025
                  %v1027 = vld [vmem:[%s1015 + $0x14] sm:%s1008]
                  %1028 = vst [vmem:[%s1016 + $0x50] sm:%s1008] %v1027
                  %v1029 = vld [vmem:[%s1015 + $0x18] sm:%s1008]
                  %1030 = vst [vmem:[%s1016 + $0x60] sm:%s1008] %v1029
                  %v1031 = vld [vmem:[%s1015 + $0x1c] sm:%s1008]
                  %1032 = vst [vmem:[%s1016 + $0x70] sm:%s1008] %v1031
                  %v1033 = vld [vmem:[%s1015 + $0x20] sm:%s1008]
                  %1034 = vst [vmem:[%s1016 + $0x80] sm:%s1008] %v1033
                  %v1035 = vld [vmem:[%s1015 + $0x24] sm:%s1008]
                  %1036 = vst [vmem:[%s1016 + $0x90] sm:%s1008] %v1035
                  %v1037 = vld [vmem:[%s1015 + $0x28] sm:%s1008]
                  %1038 = vst [vmem:[%s1016 + $0xa0] sm:%s1008] %v1037
                  %v1039 = vld [vmem:[%s1015 + $0x2c] sm:%s1008]
                  %1040 = vst [vmem:[%s1016 + $0xb0] sm:%s1008] %v1039
                  %v1041 = vld [vmem:[%s1015 + $0x30] sm:%s1008]
                  %1042 = vst [vmem:[%s1016 + $0xc0] sm:%s1008] %v1041
                  %v1043 = vld [vmem:[%s1015 + $0x34] sm:%s1008]
                  %1044 = vst [vmem:[%s1016 + $0xd0] sm:%s1008] %v1043
                  %v1045 = vld [vmem:[%s1015 + $0x38] sm:%s1008]
                  %1046 = vst [vmem:[%s1016 + $0xe0] sm:%s1008] %v1045
                  %v1047 = vld [vmem:[%s1015 + $0x3c] sm:%s1008]
                  %1048 = vst [vmem:[%s1016 + $0xf0] sm:%s1008] %v1047
                $region75: #{adaptive_attention_forward.7} parent=62 // loop_footer
                  %s1014 = sadd.s32 1, %s1010
                $region76: #{adaptive_attention_forward.7} parent=62 // loop_footer_branch
                  %1009 = sbr.rel target = $region72
                $region77: #{adaptive_attention_forward.7} parent=62 // loop_exit
                  _
              $region63: #{adaptive_attention_forward.7} parent=47 // pred_fallthru
                _
            $region48: #{adaptive_attention_forward.7} parent=43 // pred_fallthru
              _
            // Predicated region
            $region49: #{adaptive_attention_forward.7} parent=43 // pred_check
              _
            $region50: #{adaptive_attention_forward.7} parent=43 // pred_check_branch
              %954 = sbr.rel (0) target = $region52
            $region51: #{adaptive_attention_forward.7} parent=43 // pred_region
              %s956 = ssub.s32 16, 1
              loop: start=0, step=1, limit=1
              $region53: #{adaptive_attention_forward.7} parent=51 // loop_pre_header
                _
              $region54: #{adaptive_attention_forward.7} parent=51 // loop_header
                %s958 = sphi 0, %s962
                %p959 = scmp.ge.s32.totalorder %s958, 1
                %s963 = sphi %s940, %s940
                %s964 = sphi %s948, %s948
              $region55: #{adaptive_attention_forward.7} parent=51 // loop_header_branch
                %961 = sbr.rel (%p959) target = $region59
              $region56: #{adaptive_attention_forward.7} parent=51 // loop_body
                %v965 = vld [vmem:[%s963] sm:%s956]
                %966 = vst [vmem:[%s964] sm:%s956] %v965
                %v967 = vld [vmem:[%s963 + $0x4] sm:%s956]
                %968 = vst [vmem:[%s964 + $0x10] sm:%s956] %v967
                %v969 = vld [vmem:[%s963 + $0x8] sm:%s956]
                %970 = vst [vmem:[%s964 + $0x20] sm:%s956] %v969
                %v971 = vld [vmem:[%s963 + $0xc] sm:%s956]
                %972 = vst [vmem:[%s964 + $0x30] sm:%s956] %v971
                %v973 = vld [vmem:[%s963 + $0x10] sm:%s956]
                %974 = vst [vmem:[%s964 + $0x40] sm:%s956] %v973
                %v975 = vld [vmem:[%s963 + $0x14] sm:%s956]
                %976 = vst [vmem:[%s964 + $0x50] sm:%s956] %v975
                %v977 = vld [vmem:[%s963 + $0x18] sm:%s956]
                %978 = vst [vmem:[%s964 + $0x60] sm:%s956] %v977
                %v979 = vld [vmem:[%s963 + $0x1c] sm:%s956]
                %980 = vst [vmem:[%s964 + $0x70] sm:%s956] %v979
                %v981 = vld [vmem:[%s963 + $0x20] sm:%s956]
                %982 = vst [vmem:[%s964 + $0x80] sm:%s956] %v981
                %v983 = vld [vmem:[%s963 + $0x24] sm:%s956]
                %984 = vst [vmem:[%s964 + $0x90] sm:%s956] %v983
                %v985 = vld [vmem:[%s963 + $0x28] sm:%s956]
                %986 = vst [vmem:[%s964 + $0xa0] sm:%s956] %v985
                %v987 = vld [vmem:[%s963 + $0x2c] sm:%s956]
                %988 = vst [vmem:[%s964 + $0xb0] sm:%s956] %v987
                %v989 = vld [vmem:[%s963 + $0x30] sm:%s956]
                %990 = vst [vmem:[%s964 + $0xc0] sm:%s956] %v989
                %v991 = vld [vmem:[%s963 + $0x34] sm:%s956]
                %992 = vst [vmem:[%s964 + $0xd0] sm:%s956] %v991
                %v993 = vld [vmem:[%s963 + $0x38] sm:%s956]
                %994 = vst [vmem:[%s964 + $0xe0] sm:%s956] %v993
                %v995 = vld [vmem:[%s963 + $0x3c] sm:%s956]
                %996 = vst [vmem:[%s964 + $0xf0] sm:%s956] %v995
              $region57: #{adaptive_attention_forward.7} parent=51 // loop_footer
                %s962 = sadd.s32 1, %s958
              $region58: #{adaptive_attention_forward.7} parent=51 // loop_footer_branch
                %957 = sbr.rel target = $region54
              $region59: #{adaptive_attention_forward.7} parent=51 // loop_exit
                _
            $region52: #{adaptive_attention_forward.7} parent=43 // pred_fallthru
              _
          $region44: #{adaptive_attention_forward.7} parent=39 // pred_fallthru
            _
          %1049 = vnop
        $region40: #{adaptive_attention_forward.7} parent=27 // pred_fallthru
          _
      $region28: #{adaptive_attention_forward.7} parent=5 // pred_fallthru
        _
      %p1050 = scmp.le.s32.totalorder 2, %s14
      // Predicated region
      $region78: #{adaptive_attention_forward.7} parent=5 // pred_check
        %p1051 = pneg %p1050
      $region79: #{adaptive_attention_forward.7} parent=5 // pred_check_branch
        %1053 = sbr.rel (%p1051) target = $region81
      $region80: #{adaptive_attention_forward.7} parent=5 // pred_region
        %s1054 = ssub.s32 %s14, 2
        // Predicated region
        $region82: #{adaptive_attention_forward.7} parent=80 // pred_check
          %p1055 = pneg %p109
        $region83: #{adaptive_attention_forward.7} parent=80 // pred_check_branch
          %1057 = sbr.rel (%p1055) target = $region85
        $region84: #{adaptive_attention_forward.7} parent=80 // pred_region
          %s1058 = sand.u32 %s94, 1
          %s1059 = sand.u32 %s94, 1
          %s1060 = smul.addr %s1059, 64
          %s1061 = scalar_lea.vmem [#allocation6], %s1060
        $region85: #{adaptive_attention_forward.7} parent=80 // pred_fallthru
          _
      $region81: #{adaptive_attention_forward.7} parent=5 // pred_fallthru
        _
    $region6: #{adaptive_attention_forward.7} parent=1 // loop_footer
      %s18 = sadd.s32 1, %s14
    $region7: #{adaptive_attention_forward.7} parent=1 // loop_footer_branch
      %13 = sbr.rel target = $region3
    $region8: #{adaptive_attention_forward.7} parent=1 // loop_exit
      _
    %1062 = vsyncpa [#allocation3], 1
    %s1063 = scalar_lea.sflag [#allocation3], 1
    %1064 = vsyncpa %s1063, 1
    %1065 = vsyncpa [#allocation5], 1
    %s1066 = scalar_lea.sflag [#allocation5], 1
    %1067 = vsyncpa %s1066, 1

// kernel: adaptive_attention_forward.6
$region0: #{adaptive_attention_forward.6}
  #allocation0 [shape = 'u32[]', space=smem, size = 0x4, offset = 0x4, fixed_abs, tag = 'smem constant byte address 0x4 - core index']
  #allocation1 [shape = 'u32[144,128]{1,0:T(1,128)}', space=vmem, size = 0x12000, scoped, tag = 'internal scratch']
  %s0 = inlined_call_operand.vmem [shape: bf16[512,512], index: 0, kind: input, shape index: {}]
  %s1 = inlined_call_operand.vmem [shape: bf16[512,512], index: 1, kind: input, shape index: {}]
  %s2 = inlined_call_operand.vmem [shape: bf16[512,512], index: 2, kind: output, shape index: {}]
  %s3 = sld [smem:[#allocation0]]
  $region119: #{adaptive_attention_forward.6} parent=0
    _
  %s5 = ssub.s32 1, %s3
  %s6 = scalar_select 0, %s5, %s3
  $region1: #{adaptive_attention_forward.6} parent=0
    #allocation2 [shape = 'u8[262144]{0}', space=vmem, size = 0x40000, scoped, tag = 'input window, operand 1']
    #allocation3 [shape = 'u8[65536]{0}', space=vmem, size = 0x10000, scoped, tag = 'output window, operand 0']
    loop: start=0, step=1, limit=18
    $region2: #{adaptive_attention_forward.6} parent=1 // loop_pre_header
      _
    $region3: #{adaptive_attention_forward.6} parent=1 // loop_header
      %s8 = sphi 0, %s12
      %p9 = scmp.ge.s32.totalorder %s8, 18
      %s15 = sphi 0, %s27
      %s16 = sphi 0, %s23
      %s17 = sphi 0, %s15
      %s18 = sphi 0, %s16
      %s19 = sphi 0, %s17
      %s20 = sphi 0, %s18
      %s30 = sphi 0, %s32
      %s33 = sphi 0, %s30
      %s34 = sphi 0, %s33
      %s50 = sphi 0, %s34
      %s56 = sphi 0, %s58
      %s59 = sphi 0, %s56
      %s60 = sphi 0, %s59
      %s76 = sphi 0, %s60
      %s84 = sphi 0, %s86
      %s87 = sphi 0, %s84
      %s88 = sphi 0, %s87
      %s104 = sphi 0, %s88
    $region4: #{adaptive_attention_forward.6} parent=1 // loop_header_branch
      %11 = sbr.rel (%p9) target = $region8
    $region5: #{adaptive_attention_forward.6} parent=1 // loop_body
      %s13 = ssub.s32 %s8, 1
      %s14 = ssub.s32 %s8, 2
      %s21 = sadd.s32 1, %s16
      %p22 = scmp.ge.s32.totalorder %s21, 4
      %s23 = scalar_select %p22, 0, %s21
      %s24 = sadd.s32 1, %s15
      %s25 = scalar_select %p22, %s24, %s15
      %p26 = scmp.ge.s32.totalorder %s25, 4
      %s27 = scalar_select %p26, 0, %s25
      %s28 = ssub.s32 %s15, %s27
      %p29 = scmp.eq.s32.totalorder %s28, 0
      %s31 = sadd.s32 %s30, 1
      %s32 = scalar_select %p29, %s30, %s31
      %p35 = pneg %p29
      %p36 = scmp.eq.s32.totalorder %s8, 15
      %p37 = por %p35, %p36
      %p38 = scmp.ne.s32.totalorder %s30, %s33
      %p39 = scmp.eq.s32.totalorder %s8, 0
      %p40 = por %p38, %p39
      %p41 = scmp.ne.s32.totalorder %s30, %s33
      %p42 = scmp.eq.s32.totalorder %s13, 15
      %p43 = por %p41, %p42
      %p44 = scmp.ne.s32.totalorder %s33, %s34
      %p45 = scmp.eq.s32.totalorder %s13, 0
      %p46 = por %p44, %p45
      %p47 = scmp.ne.s32.totalorder %s33, %s34
      %p48 = scmp.eq.s32.totalorder %s14, 15
      %p49 = por %p47, %p48
      %p51 = scmp.ne.s32.totalorder %s34, %s50
      %p52 = scmp.eq.s32.totalorder %s14, 0
      %p53 = por %p51, %p52
      %s54 = ssub.s32 %s16, %s23
      %p55 = scmp.eq.s32.totalorder %s54, 0
      %s57 = sadd.s32 %s56, 1
      %s58 = scalar_select %p55, %s56, %s57
      %p61 = pneg %p55
      %p62 = scmp.eq.s32.totalorder %s8, 15
      %p63 = por %p61, %p62
      %p64 = scmp.ne.s32.totalorder %s56, %s59
      %p65 = scmp.eq.s32.totalorder %s8, 0
      %p66 = por %p64, %p65
      %p67 = scmp.ne.s32.totalorder %s56, %s59
      %p68 = scmp.eq.s32.totalorder %s13, 15
      %p69 = por %p67, %p68
      %p70 = scmp.ne.s32.totalorder %s59, %s60
      %p71 = scmp.eq.s32.totalorder %s13, 0
      %p72 = por %p70, %p71
      %p73 = scmp.ne.s32.totalorder %s59, %s60
      %p74 = scmp.eq.s32.totalorder %s14, 15
      %p75 = por %p73, %p74
      %p77 = scmp.ne.s32.totalorder %s60, %s76
      %p78 = scmp.eq.s32.totalorder %s14, 0
      %p79 = por %p77, %p78
      %s80 = ssub.s32 %s15, %s27
      %s81 = ssub.s32 %s16, %s23
      %s82 = sor.u32 %s80, %s81
      %p83 = scmp.eq.s32.totalorder %s82, 0
      %s85 = sadd.s32 %s84, 1
      %s86 = scalar_select %p83, %s84, %s85
      %p89 = pneg %p83
      %p90 = scmp.eq.s32.totalorder %s8, 15
      %p91 = por %p89, %p90
      %p92 = scmp.ne.s32.totalorder %s84, %s87
      %p93 = scmp.eq.s32.totalorder %s8, 0
      %p94 = por %p92, %p93
      %p95 = scmp.ne.s32.totalorder %s84, %s87
      %p96 = scmp.eq.s32.totalorder %s13, 15
      %p97 = por %p95, %p96
      %p98 = scmp.ne.s32.totalorder %s87, %s88
      %p99 = scmp.eq.s32.totalorder %s13, 0
      %p100 = por %p98, %p99
      %p101 = scmp.ne.s32.totalorder %s87, %s88
      %p102 = scmp.eq.s32.totalorder %s14, 15
      %p103 = por %p101, %p102
      %p105 = scmp.ne.s32.totalorder %s88, %s104
      %p106 = scmp.eq.s32.totalorder %s14, 0
      %p107 = por %p105, %p106
      %p108 = scmp.le.s32.totalorder 1, %s8
      %p109 = scmp.lt.s32.totalorder %s8, 17
      %p110 = pnand %p108, %p109
      %p111 = pneg %p110
      // Predicated region
      $region9: #{adaptive_attention_forward.6} parent=5 // pred_check
        _
      $region10: #{adaptive_attention_forward.6} parent=5 // pred_check_branch
        %113 = sbr.rel (%p110) target = $region12
      $region11: #{adaptive_attention_forward.6} parent=5 // pred_region
        %s114 = ssub.s32 %s8, 1
      $region12: #{adaptive_attention_forward.6} parent=5 // pred_fallthru
        _
      %p115 = scmp.lt.s32.totalorder %s8, 16
      // Predicated region
      $region13: #{adaptive_attention_forward.6} parent=5 // pred_check
        %p116 = pneg %p115
      $region14: #{adaptive_attention_forward.6} parent=5 // pred_check_branch
        %118 = sbr.rel (%p116) target = $region16
      $region15: #{adaptive_attention_forward.6} parent=5 // pred_region
        // Predicated region
        $region17: #{adaptive_attention_forward.6} parent=15 // pred_check
          %p119 = pneg %p40
        $region18: #{adaptive_attention_forward.6} parent=15 // pred_check_branch
          %121 = sbr.rel (%p119) target = $region20
        $region19: #{adaptive_attention_forward.6} parent=15 // pred_region
          %s122 = smul.u32 16, %s15
          %p123 = scmp.lt.s32.totalorder %s122, 63
          %s124 = scalar_select %p123, %s122, 63
          %s125 = smul.addr %s124, 4
          %s126 = smul.addr %s125, 4
          %s127 = scalar_lea.vmem %s0, %s126
          %s128 = smul.u32 16, %s15
        $region20: #{adaptive_attention_forward.6} parent=15 // pred_fallthru
          _
        // Predicated region
        $region21: #{adaptive_attention_forward.6} parent=15 // pred_check
          %p129 = pneg %p66
        $region22: #{adaptive_attention_forward.6} parent=15 // pred_check_branch
          %131 = sbr.rel (%p129) target = $region24
        $region23: #{adaptive_attention_forward.6} parent=15 // pred_region
          %s132 = sand.u32 %s56, 1
          %s133 = sand.u32 %s56, 1
          %s134 = smul.addr %s133, 256
          %s135 = scalar_lea.vmem [#allocation2], %s134
          %s136 = smul.addr %s16, 4
          %s137 = scalar_lea.vmem %s1, %s136
          // Predicated region
          $region25: #{adaptive_attention_forward.6} parent=23 // pred_check
            _
          $region26: #{adaptive_attention_forward.6} parent=23 // pred_check_branch
            %139 = sbr.rel (0) target = $region28
          $region27: #{adaptive_attention_forward.6} parent=23 // pred_region
            // Predicated region
            $region29: #{adaptive_attention_forward.6} parent=27 // pred_check
              _
            $region30: #{adaptive_attention_forward.6} parent=27 // pred_check_branch
              %141 = sbr.rel target = $region32
            $region31: #{adaptive_attention_forward.6} parent=27 // pred_region
              // Predicated region
              $region44: #{adaptive_attention_forward.6} parent=31 // pred_check
                _
              $region45: #{adaptive_attention_forward.6} parent=31 // pred_check_branch
                %283 = sbr.rel (0) target = $region47
              $region46: #{adaptive_attention_forward.6} parent=31 // pred_region
                loop: start=0, step=1, limit=1
                $region48: #{adaptive_attention_forward.6} parent=46 // loop_pre_header
                  _
                $region49: #{adaptive_attention_forward.6} parent=46 // loop_header
                  %s285 = sphi 0, %s289
                  %p286 = scmp.ge.s32.totalorder %s285, 1
                  %s290 = sphi %s137, %s137
                  %s291 = sphi %s135, %s135
                $region50: #{adaptive_attention_forward.6} parent=46 // loop_header_branch
                  %288 = sbr.rel (%p286) target = $region54
                $region51: #{adaptive_attention_forward.6} parent=46 // loop_body
                  _
                $region52: #{adaptive_attention_forward.6} parent=46 // loop_footer
                  %s289 = sadd.s32 1, %s285
                $region53: #{adaptive_attention_forward.6} parent=46 // loop_footer_branch
                  %284 = sbr.rel target = $region49
                $region54: #{adaptive_attention_forward.6} parent=46 // loop_exit
                  _
                %s293 = ssub.s32 16, 1
                loop: start=0, step=1, limit=1
                $region55: #{adaptive_attention_forward.6} parent=46 // loop_pre_header
                  _
                $region56: #{adaptive_attention_forward.6} parent=46 // loop_header
                  %s295 = sphi 0, %s299
                  %p296 = scmp.ge.s32.totalorder %s295, 1
                  %s300 = sphi %s137, %s137
                  %s301 = sphi %s135, %s135
                $region57: #{adaptive_attention_forward.6} parent=46 // loop_header_branch
                  %298 = sbr.rel (%p296) target = $region61
                $region58: #{adaptive_attention_forward.6} parent=46 // loop_body
                  %v302 = vld [vmem:[%s300] sm:%s293]
                  %303 = vst [vmem:[%s301] sm:%s293] %v302
                  %v304 = vld [vmem:[%s300 + $0x10] sm:%s293]
                  %305 = vst [vmem:[%s301 + $0x4] sm:%s293] %v304
                  %v306 = vld [vmem:[%s300 + $0x20] sm:%s293]
                  %307 = vst [vmem:[%s301 + $0x8] sm:%s293] %v306
                  %v308 = vld [vmem:[%s300 + $0x30] sm:%s293]
                  %309 = vst [vmem:[%s301 + $0xc] sm:%s293] %v308
                  %v310 = vld [vmem:[%s300 + $0x40] sm:%s293]
                  %311 = vst [vmem:[%s301 + $0x10] sm:%s293] %v310
                  %v312 = vld [vmem:[%s300 + $0x50] sm:%s293]
                  %313 = vst [vmem:[%s301 + $0x14] sm:%s293] %v312
                  %v314 = vld [vmem:[%s300 + $0x60] sm:%s293]
                  %315 = vst [vmem:[%s301 + $0x18] sm:%s293] %v314
                  %v316 = vld [vmem:[%s300 + $0x70] sm:%s293]
                  %317 = vst [vmem:[%s301 + $0x1c] sm:%s293] %v316
                  %v318 = vld [vmem:[%s300 + $0x80] sm:%s293]
                  %319 = vst [vmem:[%s301 + $0x20] sm:%s293] %v318
                  %v320 = vld [vmem:[%s300 + $0x90] sm:%s293]
                  %321 = vst [vmem:[%s301 + $0x24] sm:%s293] %v320
                  %v322 = vld [vmem:[%s300 + $0xa0] sm:%s293]
                  %323 = vst [vmem:[%s301 + $0x28] sm:%s293] %v322
                  %v324 = vld [vmem:[%s300 + $0xb0] sm:%s293]
                  %325 = vst [vmem:[%s301 + $0x2c] sm:%s293] %v324
                  %v326 = vld [vmem:[%s300 + $0xc0] sm:%s293]
                  %327 = vst [vmem:[%s301 + $0x30] sm:%s293] %v326
                  %v328 = vld [vmem:[%s300 + $0xd0] sm:%s293]
                  %329 = vst [vmem:[%s301 + $0x34] sm:%s293] %v328
                  %v330 = vld [vmem:[%s300 + $0xe0] sm:%s293]
                  %331 = vst [vmem:[%s301 + $0x38] sm:%s293] %v330
                  %v332 = vld [vmem:[%s300 + $0xf0] sm:%s293]
                  %333 = vst [vmem:[%s301 + $0x3c] sm:%s293] %v332
                  %v334 = vld [vmem:[%s300 + $0x100] sm:%s293]
                  %335 = vst [vmem:[%s301 + $0x40] sm:%s293] %v334
                  %v336 = vld [vmem:[%s300 + $0x110] sm:%s293]
                  %337 = vst [vmem:[%s301 + $0x44] sm:%s293] %v336
                  %v338 = vld [vmem:[%s300 + $0x120] sm:%s293]
                  %339 = vst [vmem:[%s301 + $0x48] sm:%s293] %v338
                  %v340 = vld [vmem:[%s300 + $0x130] sm:%s293]
                  %341 = vst [vmem:[%s301 + $0x4c] sm:%s293] %v340
                  %v342 = vld [vmem:[%s300 + $0x140] sm:%s293]
                  %343 = vst [vmem:[%s301 + $0x50] sm:%s293] %v342
                  %v344 = vld [vmem:[%s300 + $0x150] sm:%s293]
                  %345 = vst [vmem:[%s301 + $0x54] sm:%s293] %v344
                  %v346 = vld [vmem:[%s300 + $0x160] sm:%s293]
                  %347 = vst [vmem:[%s301 + $0x58] sm:%s293] %v346
                  %v348 = vld [vmem:[%s300 + $0x170] sm:%s293]
                  %349 = vst [vmem:[%s301 + $0x5c] sm:%s293] %v348
                  %v350 = vld [vmem:[%s300 + $0x180] sm:%s293]
                  %351 = vst [vmem:[%s301 + $0x60] sm:%s293] %v350
                  %v352 = vld [vmem:[%s300 + $0x190] sm:%s293]
                  %353 = vst [vmem:[%s301 + $0x64] sm:%s293] %v352
                  %v354 = vld [vmem:[%s300 + $0x1a0] sm:%s293]
                  %355 = vst [vmem:[%s301 + $0x68] sm:%s293] %v354
                  %v356 = vld [vmem:[%s300 + $0x1b0] sm:%s293]
                  %357 = vst [vmem:[%s301 + $0x6c] sm:%s293] %v356
                  %v358 = vld [vmem:[%s300 + $0x1c0] sm:%s293]
                  %359 = vst [vmem:[%s301 + $0x70] sm:%s293] %v358
                  %v360 = vld [vmem:[%s300 + $0x1d0] sm:%s293]
                  %361 = vst [vmem:[%s301 + $0x74] sm:%s293] %v360
                  %v362 = vld [vmem:[%s300 + $0x1e0] sm:%s293]
                  %363 = vst [vmem:[%s301 + $0x78] sm:%s293] %v362
                  %v364 = vld [vmem:[%s300 + $0x1f0] sm:%s293]
                  %365 = vst [vmem:[%s301 + $0x7c] sm:%s293] %v364
                  %v366 = vld [vmem:[%s300 + $0x200] sm:%s293]
                  %367 = vst [vmem:[%s301 + $0x80] sm:%s293] %v366
                  %v368 = vld [vmem:[%s300 + $0x210] sm:%s293]
                  %369 = vst [vmem:[%s301 + $0x84] sm:%s293] %v368
                  %v370 = vld [vmem:[%s300 + $0x220] sm:%s293]
                  %371 = vst [vmem:[%s301 + $0x88] sm:%s293] %v370
                  %v372 = vld [vmem:[%s300 + $0x230] sm:%s293]
                  %373 = vst [vmem:[%s301 + $0x8c] sm:%s293] %v372
                  %v374 = vld [vmem:[%s300 + $0x240] sm:%s293]
                  %375 = vst [vmem:[%s301 + $0x90] sm:%s293] %v374
                  %v376 = vld [vmem:[%s300 + $0x250] sm:%s293]
                  %377 = vst [vmem:[%s301 + $0x94] sm:%s293] %v376
                  %v378 = vld [vmem:[%s300 + $0x260] sm:%s293]
                  %379 = vst [vmem:[%s301 + $0x98] sm:%s293] %v378
                  %v380 = vld [vmem:[%s300 + $0x270] sm:%s293]
                  %381 = vst [vmem:[%s301 + $0x9c] sm:%s293] %v380
                  %v382 = vld [vmem:[%s300 + $0x280] sm:%s293]
                  %383 = vst [vmem:[%s301 + $0xa0] sm:%s293] %v382
                  %v384 = vld [vmem:[%s300 + $0x290] sm:%s293]
                  %385 = vst [vmem:[%s301 + $0xa4] sm:%s293] %v384
                  %v386 = vld [vmem:[%s300 + $0x2a0] sm:%s293]
                  %387 = vst [vmem:[%s301 + $0xa8] sm:%s293] %v386
                  %v388 = vld [vmem:[%s300 + $0x2b0] sm:%s293]
                  %389 = vst [vmem:[%s301 + $0xac] sm:%s293] %v388
                  %v390 = vld [vmem:[%s300 + $0x2c0] sm:%s293]
                  %391 = vst [vmem:[%s301 + $0xb0] sm:%s293] %v390
                  %v392 = vld [vmem:[%s300 + $0x2d0] sm:%s293]
                  %393 = vst [vmem:[%s301 + $0xb4] sm:%s293] %v392
                  %v394 = vld [vmem:[%s300 + $0x2e0] sm:%s293]
                  %395 = vst [vmem:[%s301 + $0xb8] sm:%s293] %v394
                  %v396 = vld [vmem:[%s300 + $0x2f0] sm:%s293]
                  %397 = vst [vmem:[%s301 + $0xbc] sm:%s293] %v396
                  %v398 = vld [vmem:[%s300 + $0x300] sm:%s293]
                  %399 = vst [vmem:[%s301 + $0xc0] sm:%s293] %v398
                  %v400 = vld [vmem:[%s300 + $0x310] sm:%s293]
                  %401 = vst [vmem:[%s301 + $0xc4] sm:%s293] %v400
                  %v402 = vld [vmem:[%s300 + $0x320] sm:%s293]
                  %403 = vst [vmem:[%s301 + $0xc8] sm:%s293] %v402
                  %v404 = vld [vmem:[%s300 + $0x330] sm:%s293]
                  %405 = vst [vmem:[%s301 + $0xcc] sm:%s293] %v404
                  %v406 = vld [vmem:[%s300 + $0x340] sm:%s293]
                  %407 = vst [vmem:[%s301 + $0xd0] sm:%s293] %v406
                  %v408 = vld [vmem:[%s300 + $0x350] sm:%s293]
                  %409 = vst [vmem:[%s301 + $0xd4] sm:%s293] %v408
                  %v410 = vld [vmem:[%s300 + $0x360] sm:%s293]
                  %411 = vst [vmem:[%s301 + $0xd8] sm:%s293] %v410
                  %v412 = vld [vmem:[%s300 + $0x370] sm:%s293]
                  %413 = vst [vmem:[%s301 + $0xdc] sm:%s293] %v412
                  %v414 = vld [vmem:[%s300 + $0x380] sm:%s293]
                  %415 = vst [vmem:[%s301 + $0xe0] sm:%s293] %v414
                  %v416 = vld [vmem:[%s300 + $0x390] sm:%s293]
                  %417 = vst [vmem:[%s301 + $0xe4] sm:%s293] %v416
                  %v418 = vld [vmem:[%s300 + $0x3a0] sm:%s293]
                  %419 = vst [vmem:[%s301 + $0xe8] sm:%s293] %v418
                  %v420 = vld [vmem:[%s300 + $0x3b0] sm:%s293]
                  %421 = vst [vmem:[%s301 + $0xec] sm:%s293] %v420
                  %v422 = vld [vmem:[%s300 + $0x3c0] sm:%s293]
                  %423 = vst [vmem:[%s301 + $0xf0] sm:%s293] %v422
                  %v424 = vld [vmem:[%s300 + $0x3d0] sm:%s293]
                  %425 = vst [vmem:[%s301 + $0xf4] sm:%s293] %v424
                  %v426 = vld [vmem:[%s300 + $0x3e0] sm:%s293]
                  %427 = vst [vmem:[%s301 + $0xf8] sm:%s293] %v426
                  %v428 = vld [vmem:[%s300 + $0x3f0] sm:%s293]
                  %429 = vst [vmem:[%s301 + $0xfc] sm:%s293] %v428
                $region59: #{adaptive_attention_forward.6} parent=46 // loop_footer
                  %s299 = sadd.s32 1, %s295
                $region60: #{adaptive_attention_forward.6} parent=46 // loop_footer_branch
                  %294 = sbr.rel target = $region56
                $region61: #{adaptive_attention_forward.6} parent=46 // loop_exit
                  _
              $region47: #{adaptive_attention_forward.6} parent=31 // pred_fallthru
                _
            $region32: #{adaptive_attention_forward.6} parent=27 // pred_fallthru
              _
            // Predicated region
            $region33: #{adaptive_attention_forward.6} parent=27 // pred_check
              _
            $region34: #{adaptive_attention_forward.6} parent=27 // pred_check_branch
              %143 = sbr.rel (0) target = $region36
            $region35: #{adaptive_attention_forward.6} parent=27 // pred_region
              %s145 = ssub.s32 16, 1
              loop: start=0, step=1, limit=1
              $region37: #{adaptive_attention_forward.6} parent=35 // loop_pre_header
                _
              $region38: #{adaptive_attention_forward.6} parent=35 // loop_header
                %s147 = sphi 0, %s151
                %p148 = scmp.ge.s32.totalorder %s147, 1
                %s152 = sphi %s137, %s137
                %s153 = sphi %s135, %s135
              $region39: #{adaptive_attention_forward.6} parent=35 // loop_header_branch
                %150 = sbr.rel (%p148) target = $region43
              $region40: #{adaptive_attention_forward.6} parent=35 // loop_body
                %v154 = vld [vmem:[%s152] sm:%s145]
                %155 = vst [vmem:[%s153] sm:%s145] %v154
                %v156 = vld [vmem:[%s152 + $0x10] sm:%s145]
                %157 = vst [vmem:[%s153 + $0x4] sm:%s145] %v156
                %v158 = vld [vmem:[%s152 + $0x20] sm:%s145]
                %159 = vst [vmem:[%s153 + $0x8] sm:%s145] %v158
                %v160 = vld [vmem:[%s152 + $0x30] sm:%s145]
                %161 = vst [vmem:[%s153 + $0xc] sm:%s145] %v160
                %v162 = vld [vmem:[%s152 + $0x40] sm:%s145]
                %163 = vst [vmem:[%s153 + $0x10] sm:%s145] %v162
                %v164 = vld [vmem:[%s152 + $0x50] sm:%s145]
                %165 = vst [vmem:[%s153 + $0x14] sm:%s145] %v164
                %v166 = vld [vmem:[%s152 + $0x60] sm:%s145]
                %167 = vst [vmem:[%s153 + $0x18] sm:%s145] %v166
                %v168 = vld [vmem:[%s152 + $0x70] sm:%s145]
                %169 = vst [vmem:[%s153 + $0x1c] sm:%s145] %v168
                %v170 = vld [vmem:[%s152 + $0x80] sm:%s145]
                %171 = vst [vmem:[%s153 + $0x20] sm:%s145] %v170
                %v172 = vld [vmem:[%s152 + $0x90] sm:%s145]
                %173 = vst [vmem:[%s153 + $0x24] sm:%s145] %v172
                %v174 = vld [vmem:[%s152 + $0xa0] sm:%s145]
                %175 = vst [vmem:[%s153 + $0x28] sm:%s145] %v174
                %v176 = vld [vmem:[%s152 + $0xb0] sm:%s145]
                %177 = vst [vmem:[%s153 + $0x2c] sm:%s145] %v176
                %v178 = vld [vmem:[%s152 + $0xc0] sm:%s145]
                %179 = vst [vmem:[%s153 + $0x30] sm:%s145] %v178
                %v180 = vld [vmem:[%s152 + $0xd0] sm:%s145]
                %181 = vst [vmem:[%s153 + $0x34] sm:%s145] %v180
                %v182 = vld [vmem:[%s152 + $0xe0] sm:%s145]
                %183 = vst [vmem:[%s153 + $0x38] sm:%s145] %v182
                %v184 = vld [vmem:[%s152 + $0xf0] sm:%s145]
                %185 = vst [vmem:[%s153 + $0x3c] sm:%s145] %v184
                %v186 = vld [vmem:[%s152 + $0x100] sm:%s145]
                %187 = vst [vmem:[%s153 + $0x40] sm:%s145] %v186
                %v188 = vld [vmem:[%s152 + $0x110] sm:%s145]
                %189 = vst [vmem:[%s153 + $0x44] sm:%s145] %v188
                %v190 = vld [vmem:[%s152 + $0x120] sm:%s145]
                %191 = vst [vmem:[%s153 + $0x48] sm:%s145] %v190
                %v192 = vld [vmem:[%s152 + $0x130] sm:%s145]
                %193 = vst [vmem:[%s153 + $0x4c] sm:%s145] %v192
                %v194 = vld [vmem:[%s152 + $0x140] sm:%s145]
                %195 = vst [vmem:[%s153 + $0x50] sm:%s145] %v194
                %v196 = vld [vmem:[%s152 + $0x150] sm:%s145]
                %197 = vst [vmem:[%s153 + $0x54] sm:%s145] %v196
                %v198 = vld [vmem:[%s152 + $0x160] sm:%s145]
                %199 = vst [vmem:[%s153 + $0x58] sm:%s145] %v198
                %v200 = vld [vmem:[%s152 + $0x170] sm:%s145]
                %201 = vst [vmem:[%s153 + $0x5c] sm:%s145] %v200
                %v202 = vld [vmem:[%s152 + $0x180] sm:%s145]
                %203 = vst [vmem:[%s153 + $0x60] sm:%s145] %v202
                %v204 = vld [vmem:[%s152 + $0x190] sm:%s145]
                %205 = vst [vmem:[%s153 + $0x64] sm:%s145] %v204
                %v206 = vld [vmem:[%s152 + $0x1a0] sm:%s145]
                %207 = vst [vmem:[%s153 + $0x68] sm:%s145] %v206
                %v208 = vld [vmem:[%s152 + $0x1b0] sm:%s145]
                %209 = vst [vmem:[%s153 + $0x6c] sm:%s145] %v208
                %v210 = vld [vmem:[%s152 + $0x1c0] sm:%s145]
                %211 = vst [vmem:[%s153 + $0x70] sm:%s145] %v210
                %v212 = vld [vmem:[%s152 + $0x1d0] sm:%s145]
                %213 = vst [vmem:[%s153 + $0x74] sm:%s145] %v212
                %v214 = vld [vmem:[%s152 + $0x1e0] sm:%s145]
                %215 = vst [vmem:[%s153 + $0x78] sm:%s145] %v214
                %v216 = vld [vmem:[%s152 + $0x1f0] sm:%s145]
                %217 = vst [vmem:[%s153 + $0x7c] sm:%s145] %v216
                %v218 = vld [vmem:[%s152 + $0x200] sm:%s145]
                %219 = vst [vmem:[%s153 + $0x80] sm:%s145] %v218
                %v220 = vld [vmem:[%s152 + $0x210] sm:%s145]
                %221 = vst [vmem:[%s153 + $0x84] sm:%s145] %v220
                %v222 = vld [vmem:[%s152 + $0x220] sm:%s145]
                %223 = vst [vmem:[%s153 + $0x88] sm:%s145] %v222
                %v224 = vld [vmem:[%s152 + $0x230] sm:%s145]
                %225 = vst [vmem:[%s153 + $0x8c] sm:%s145] %v224
                %v226 = vld [vmem:[%s152 + $0x240] sm:%s145]
                %227 = vst [vmem:[%s153 + $0x90] sm:%s145] %v226
                %v228 = vld [vmem:[%s152 + $0x250] sm:%s145]
                %229 = vst [vmem:[%s153 + $0x94] sm:%s145] %v228
                %v230 = vld [vmem:[%s152 + $0x260] sm:%s145]
                %231 = vst [vmem:[%s153 + $0x98] sm:%s145] %v230
                %v232 = vld [vmem:[%s152 + $0x270] sm:%s145]
                %233 = vst [vmem:[%s153 + $0x9c] sm:%s145] %v232
                %v234 = vld [vmem:[%s152 + $0x280] sm:%s145]
                %235 = vst [vmem:[%s153 + $0xa0] sm:%s145] %v234
                %v236 = vld [vmem:[%s152 + $0x290] sm:%s145]
                %237 = vst [vmem:[%s153 + $0xa4] sm:%s145] %v236
                %v238 = vld [vmem:[%s152 + $0x2a0] sm:%s145]
                %239 = vst [vmem:[%s153 + $0xa8] sm:%s145] %v238
                %v240 = vld [vmem:[%s152 + $0x2b0] sm:%s145]
                %241 = vst [vmem:[%s153 + $0xac] sm:%s145] %v240
                %v242 = vld [vmem:[%s152 + $0x2c0] sm:%s145]
                %243 = vst [vmem:[%s153 + $0xb0] sm:%s145] %v242
                %v244 = vld [vmem:[%s152 + $0x2d0] sm:%s145]
                %245 = vst [vmem:[%s153 + $0xb4] sm:%s145] %v244
                %v246 = vld [vmem:[%s152 + $0x2e0] sm:%s145]
                %247 = vst [vmem:[%s153 + $0xb8] sm:%s145] %v246
                %v248 = vld [vmem:[%s152 + $0x2f0] sm:%s145]
                %249 = vst [vmem:[%s153 + $0xbc] sm:%s145] %v248
                %v250 = vld [vmem:[%s152 + $0x300] sm:%s145]
                %251 = vst [vmem:[%s153 + $0xc0] sm:%s145] %v250
                %v252 = vld [vmem:[%s152 + $0x310] sm:%s145]
                %253 = vst [vmem:[%s153 + $0xc4] sm:%s145] %v252
                %v254 = vld [vmem:[%s152 + $0x320] sm:%s145]
                %255 = vst [vmem:[%s153 + $0xc8] sm:%s145] %v254
                %v256 = vld [vmem:[%s152 + $0x330] sm:%s145]
                %257 = vst [vmem:[%s153 + $0xcc] sm:%s145] %v256
                %v258 = vld [vmem:[%s152 + $0x340] sm:%s145]
                %259 = vst [vmem:[%s153 + $0xd0] sm:%s145] %v258
                %v260 = vld [vmem:[%s152 + $0x350] sm:%s145]
                %261 = vst [vmem:[%s153 + $0xd4] sm:%s145] %v260
                %v262 = vld [vmem:[%s152 + $0x360] sm:%s145]
                %263 = vst [vmem:[%s153 + $0xd8] sm:%s145] %v262
                %v264 = vld [vmem:[%s152 + $0x370] sm:%s145]
                %265 = vst [vmem:[%s153 + $0xdc] sm:%s145] %v264
                %v266 = vld [vmem:[%s152 + $0x380] sm:%s145]
                %267 = vst [vmem:[%s153 + $0xe0] sm:%s145] %v266
                %v268 = vld [vmem:[%s152 + $0x390] sm:%s145]
                %269 = vst [vmem:[%s153 + $0xe4] sm:%s145] %v268
                %v270 = vld [vmem:[%s152 + $0x3a0] sm:%s145]
                %271 = vst [vmem:[%s153 + $0xe8] sm:%s145] %v270
                %v272 = vld [vmem:[%s152 + $0x3b0] sm:%s145]
                %273 = vst [vmem:[%s153 + $0xec] sm:%s145] %v272
                %v274 = vld [vmem:[%s152 + $0x3c0] sm:%s145]
                %275 = vst [vmem:[%s153 + $0xf0] sm:%s145] %v274
                %v276 = vld [vmem:[%s152 + $0x3d0] sm:%s145]
                %277 = vst [vmem:[%s153 + $0xf4] sm:%s145] %v276
                %v278 = vld [vmem:[%s152 + $0x3e0] sm:%s145]
                %279 = vst [vmem:[%s153 + $0xf8] sm:%s145] %v278
                %v280 = vld [vmem:[%s152 + $0x3f0] sm:%s145]
                %281 = vst [vmem:[%s153 + $0xfc] sm:%s145] %v280
              $region41: #{adaptive_attention_forward.6} parent=35 // loop_footer
                %s151 = sadd.s32 1, %s147
              $region42: #{adaptive_attention_forward.6} parent=35 // loop_footer_branch
                %146 = sbr.rel target = $region38
              $region43: #{adaptive_attention_forward.6} parent=35 // loop_exit
                _
            $region36: #{adaptive_attention_forward.6} parent=27 // pred_fallthru
              _
          $region28: #{adaptive_attention_forward.6} parent=23 // pred_fallthru
            _
          %430 = vnop
        $region24: #{adaptive_attention_forward.6} parent=15 // pred_fallthru
          _
      $region16: #{adaptive_attention_forward.6} parent=5 // pred_fallthru
        _
      %p431 = scmp.le.s32.totalorder 1, %s8
      %p432 = scmp.lt.s32.totalorder %s8, 17
      %p433 = pnand %p431, %p432
      %p434 = pneg %p433
      // Predicated region
      $region62: #{adaptive_attention_forward.6} parent=5 // pred_check
        _
      $region63: #{adaptive_attention_forward.6} parent=5 // pred_check_branch
        %436 = sbr.rel (%p433) target = $region65
      $region64: #{adaptive_attention_forward.6} parent=5 // pred_region
        %s437 = ssub.s32 %s8, 1
        %s438 = sand.u32 %s59, 1
        %s439 = sand.u32 %s59, 1
        %s440 = smul.addr %s439, 256
        %s441 = scalar_lea.vmem [#allocation2], %s440
        // Predicated region
        $region66: #{adaptive_attention_forward.6} parent=64 // pred_check
          %p442 = pneg %p72
        $region67: #{adaptive_attention_forward.6} parent=64 // pred_check_branch
          %444 = sbr.rel (%p442) target = $region69
        $region68: #{adaptive_attention_forward.6} parent=64 // pred_region
          _
        $region69: #{adaptive_attention_forward.6} parent=64 // pred_fallthru
          _
        %s445 = smul.u32 16, %s17
        %p446 = scmp.lt.s32.totalorder %s445, 63
        %s447 = scalar_select %p446, %s445, 63
        %s448 = smul.addr %s447, 4
        %s449 = smul.addr %s448, 4
        %s450 = scalar_lea.vmem %s0, %s449
        %p451 = pneg %p46
        %p452 = pneg %p43
        %s453 = sand.u32 %s59, 1
        %s454 = sand.u32 %s59, 1
        %s455 = smul.addr %s454, 256
        %s456 = scalar_lea.vmem [#allocation2], %s455
        %p457 = pneg %p72
        %p458 = pneg %p69
        %p459 = pneg %p100
        %p460 = pneg %p97
        %s461 = sand.u32 %s87, 1
        %s462 = sand.u32 %s87, 1
        %s463 = smul.addr %s462, 64
        %s464 = scalar_lea.vmem [#allocation3], %s463
        %s465 = smul.u32 16, %s17
        %p466 = scmp.lt.s32.totalorder %s465, 63
        %s467 = scalar_select %p466, %s465, 63
        %s468 = smul.addr %s467, 4
        %s469 = smul.addr %s468, 4
        %s470 = scalar_lea.vmem %s0, %s469
        %s471 = smul.u32 16, %s17
        %s472 = smul.u32 16, %s17
        %v474 = vld [vmem:[%s470] sm:$0xff]
        %v475 = vld [vmem:[%s470 + $0x8] sm:$0xff]
        %v476 = vld [vmem:[%s470 + $0x10] sm:$0xff]
        %v477 = vld [vmem:[%s470 + $0x18] sm:$0xff]
        %v478 = vld [vmem:[%s470 + $0x20] sm:$0xff]
        %v479 = vld [vmem:[%s470 + $0x28] sm:$0xff]
        %v480 = vld [vmem:[%s470 + $0x30] sm:$0xff]
        %v481 = vld [vmem:[%s470 + $0x38] sm:$0xff]
        %v482 = vld [vmem:[%s470 + $0x40] sm:$0xff]
        %v483 = vld [vmem:[%s470 + $0x48] sm:$0xff]
        %v484 = vld [vmem:[%s470 + $0x50] sm:$0xff]
        %v485 = vld [vmem:[%s470 + $0x58] sm:$0xff]
        %v486 = vld [vmem:[%s470 + $0x60] sm:$0xff]
        %v487 = vld [vmem:[%s470 + $0x68] sm:$0xff]
        %v488 = vld [vmem:[%s470 + $0x70] sm:$0xff]
        %v489 = vld [vmem:[%s470 + $0x78] sm:$0xff]
        %v490 = vld [vmem:[%s470 + $0x80] sm:$0xff]
        %v491 = vld [vmem:[%s470 + $0x88] sm:$0xff]
        %v492 = vld [vmem:[%s470 + $0x90] sm:$0xff]
        %v493 = vld [vmem:[%s470 + $0x98] sm:$0xff]
        %v494 = vld [vmem:[%s470 + $0xa0] sm:$0xff]
        %v495 = vld [vmem:[%s470 + $0xa8] sm:$0xff]
        %v496 = vld [vmem:[%s470 + $0xb0] sm:$0xff]
        %v497 = vld [vmem:[%s470 + $0xb8] sm:$0xff]
        %v498 = vld [vmem:[%s470 + $0xc0] sm:$0xff]
        %v499 = vld [vmem:[%s470 + $0xc8] sm:$0xff]
        %v500 = vld [vmem:[%s470 + $0xd0] sm:$0xff]
        %v501 = vld [vmem:[%s470 + $0xd8] sm:$0xff]
        %v502 = vld [vmem:[%s470 + $0xe0] sm:$0xff]
        %v503 = vld [vmem:[%s470 + $0xe8] sm:$0xff]
        %v504 = vld [vmem:[%s470 + $0xf0] sm:$0xff]
        %v505 = vld [vmem:[%s470 + $0xf8] sm:$0xff]
        %v506 = vld [vmem:[%s441] sm:$0xf]
        %v507 = vld [vmem:[%s441 + $0x4] sm:$0xf]
        %v508 = vld [vmem:[%s441 + $0x8] sm:$0xf]
        %v509 = vld [vmem:[%s441 + $0xc] sm:$0xf]
        %v510 = vld [vmem:[%s441 + $0x10] sm:$0xf]
        %v511 = vld [vmem:[%s441 + $0x14] sm:$0xf]
        %v512 = vld [vmem:[%s441 + $0x18] sm:$0xf]
        %v513 = vld [vmem:[%s441 + $0x1c] sm:$0xf]
        %v514 = vld [vmem:[%s441 + $0x20] sm:$0xf]
        %v515 = vld [vmem:[%s441 + $0x24] sm:$0xf]
        %v516 = vld [vmem:[%s441 + $0x28] sm:$0xf]
        %v517 = vld [vmem:[%s441 + $0x2c] sm:$0xf]
        %v518 = vld [vmem:[%s441 + $0x30] sm:$0xf]
        %v519 = vld [vmem:[%s441 + $0x34] sm:$0xf]
        %v520 = vld [vmem:[%s441 + $0x38] sm:$0xf]
        %v521 = vld [vmem:[%s441 + $0x3c] sm:$0xf]
        %v522 = vld [vmem:[%s441 + $0x40] sm:$0xf]
        %v523 = vld [vmem:[%s441 + $0x44] sm:$0xf]
        %v524 = vld [vmem:[%s441 + $0x48] sm:$0xf]
        %v525 = vld [vmem:[%s441 + $0x4c] sm:$0xf]
        %v526 = vld [vmem:[%s441 + $0x50] sm:$0xf]
        %v527 = vld [vmem:[%s441 + $0x54] sm:$0xf]
        %v528 = vld [vmem:[%s441 + $0x58] sm:$0xf]
        %v529 = vld [vmem:[%s441 + $0x5c] sm:$0xf]
        %v530 = vld [vmem:[%s441 + $0x60] sm:$0xf]
        %v531 = vld [vmem:[%s441 + $0x64] sm:$0xf]
        %v532 = vld [vmem:[%s441 + $0x68] sm:$0xf]
        %v533 = vld [vmem:[%s441 + $0x6c] sm:$0xf]
        %v534 = vld [vmem:[%s441 + $0x70] sm:$0xf]
        %v535 = vld [vmem:[%s441 + $0x74] sm:$0xf]
        %v536 = vld [vmem:[%s441 + $0x78] sm:$0xf]
        %v537 = vld [vmem:[%s441 + $0x7c] sm:$0xf]
        %v538 = vld [vmem:[%s441 + $0x80] sm:$0xf]
        %v539 = vld [vmem:[%s441 + $0x84] sm:$0xf]
        %v540 = vld [vmem:[%s441 + $0x88] sm:$0xf]
        %v541 = vld [vmem:[%s441 + $0x8c] sm:$0xf]
        %v542 = vld [vmem:[%s441 + $0x90] sm:$0xf]
        %v543 = vld [vmem:[%s441 + $0x94] sm:$0xf]
        %v544 = vld [vmem:[%s441 + $0x98] sm:$0xf]
        %v545 = vld [vmem:[%s441 + $0x9c] sm:$0xf]
        %v546 = vld [vmem:[%s441 + $0xa0] sm:$0xf]
        %v547 = vld [vmem:[%s441 + $0xa4] sm:$0xf]
        %v548 = vld [vmem:[%s441 + $0xa8] sm:$0xf]
        %v549 = vld [vmem:[%s441 + $0xac] sm:$0xf]
        %v550 = vld [vmem:[%s441 + $0xb0] sm:$0xf]
        %v551 = vld [vmem:[%s441 + $0xb4] sm:$0xf]
        %v552 = vld [vmem:[%s441 + $0xb8] sm:$0xf]
        %v553 = vld [vmem:[%s441 + $0xbc] sm:$0xf]
        %v554 = vld [vmem:[%s441 + $0xc0] sm:$0xf]
        %v555 = vld [vmem:[%s441 + $0xc4] sm:$0xf]
        %v556 = vld [vmem:[%s441 + $0xc8] sm:$0xf]
        %v557 = vld [vmem:[%s441 + $0xcc] sm:$0xf]
        %v558 = vld [vmem:[%s441 + $0xd0] sm:$0xf]
        %v559 = vld [vmem:[%s441 + $0xd4] sm:$0xf]
        %v560 = vld [vmem:[%s441 + $0xd8] sm:$0xf]
        %v561 = vld [vmem:[%s441 + $0xdc] sm:$0xf]
        %v562 = vld [vmem:[%s441 + $0xe0] sm:$0xf]
        %v563 = vld [vmem:[%s441 + $0xe4] sm:$0xf]
        %v564 = vld [vmem:[%s441 + $0xe8] sm:$0xf]
        %v565 = vld [vmem:[%s441 + $0xec] sm:$0xf]
        %v566 = vld [vmem:[%s441 + $0xf0] sm:$0xf]
        %v567 = vld [vmem:[%s441 + $0xf4] sm:$0xf]
        %v568 = vld [vmem:[%s441 + $0xf8] sm:$0xf]
        %v569 = vld [vmem:[%s441 + $0xfc] sm:$0xf]
        %v602 = vunpack.c.l.b16 %v474
        %v603 = vunpack.c.h.b16 %v474
        %v604 = vunpack.c.l.b16 %v475
        %v605 = vunpack.c.h.b16 %v475
        %v606 = vunpack.c.l.b16 %v476
        %v607 = vunpack.c.h.b16 %v476
        %v608 = vunpack.c.l.b16 %v477
        %v609 = vunpack.c.h.b16 %v477
        %v610 = vunpack.c.l.b16 %v478
        %v611 = vunpack.c.h.b16 %v478
        %v612 = vunpack.c.l.b16 %v479
        %v613 = vunpack.c.h.b16 %v479
        %v614 = vunpack.c.l.b16 %v480
        %v615 = vunpack.c.h.b16 %v480
        %v616 = vunpack.c.l.b16 %v481
        %v617 = vunpack.c.h.b16 %v481
        %v618 = vunpack.c.l.b16 %v482
        %v619 = vunpack.c.h.b16 %v482
        %v620 = vunpack.c.l.b16 %v483
        %v621 = vunpack.c.h.b16 %v483
        %v622 = vunpack.c.l.b16 %v484
        %v623 = vunpack.c.h.b16 %v484
        %v624 = vunpack.c.l.b16 %v485
        %v625 = vunpack.c.h.b16 %v485
        %v626 = vunpack.c.l.b16 %v486
        %v627 = vunpack.c.h.b16 %v486
        %v628 = vunpack.c.l.b16 %v487
        %v629 = vunpack.c.h.b16 %v487
        %v630 = vunpack.c.l.b16 %v488
        %v631 = vunpack.c.h.b16 %v488
        %v632 = vunpack.c.l.b16 %v489
        %v633 = vunpack.c.h.b16 %v489
        %v634 = vunpack.c.l.b16 %v490
        %v635 = vunpack.c.h.b16 %v490
        %v636 = vunpack.c.l.b16 %v491
        %v637 = vunpack.c.h.b16 %v491
        %v638 = vunpack.c.l.b16 %v492
        %v639 = vunpack.c.h.b16 %v492
        %v640 = vunpack.c.l.b16 %v493
        %v641 = vunpack.c.h.b16 %v493
        %v642 = vunpack.c.l.b16 %v494
        %v643 = vunpack.c.h.b16 %v494
        %v644 = vunpack.c.l.b16 %v495
        %v645 = vunpack.c.h.b16 %v495
        %v646 = vunpack.c.l.b16 %v496
        %v647 = vunpack.c.h.b16 %v496
        %v648 = vunpack.c.l.b16 %v497
        %v649 = vunpack.c.h.b16 %v497
        %v650 = vunpack.c.l.b16 %v498
        %v651 = vunpack.c.h.b16 %v498
        %v652 = vunpack.c.l.b16 %v499
        %v653 = vunpack.c.h.b16 %v499
        %v654 = vunpack.c.l.b16 %v500
        %v655 = vunpack.c.h.b16 %v500
        %v656 = vunpack.c.l.b16 %v501
        %v657 = vunpack.c.h.b16 %v501
        %v658 = vunpack.c.l.b16 %v502
        %v659 = vunpack.c.h.b16 %v502
        %v660 = vunpack.c.l.b16 %v503
        %v661 = vunpack.c.h.b16 %v503
        %v662 = vunpack.c.l.b16 %v504
        %v663 = vunpack.c.h.b16 %v504
        %v664 = vunpack.c.l.b16 %v505
        %v665 = vunpack.c.h.b16 %v505
        %v666 = vpack.c.b16 %v606, %v602
        %v667 = vpack.c.b16 %v607, %v603
        %v668 = vpack.c.b16 %v608, %v604
        %v669 = vpack.c.b16 %v609, %v605
        %v670 = vpack.c.b16 %v614, %v610
        %v671 = vpack.c.b16 %v615, %v611
        %v672 = vpack.c.b16 %v616, %v612
        %v673 = vpack.c.b16 %v617, %v613
        %v674 = vpack.c.b16 %v622, %v618
        %v675 = vpack.c.b16 %v623, %v619
        %v676 = vpack.c.b16 %v624, %v620
        %v677 = vpack.c.b16 %v625, %v621
        %v678 = vpack.c.b16 %v630, %v626
        %v679 = vpack.c.b16 %v631, %v627
        %v680 = vpack.c.b16 %v632, %v628
        %v681 = vpack.c.b16 %v633, %v629
        %v682 = vpack.c.b16 %v638, %v634
        %v683 = vpack.c.b16 %v639, %v635
        %v684 = vpack.c.b16 %v640, %v636
        %v685 = vpack.c.b16 %v641, %v637
        %v686 = vpack.c.b16 %v646, %v642
        %v687 = vpack.c.b16 %v647, %v643
        %v688 = vpack.c.b16 %v648, %v644
        %v689 = vpack.c.b16 %v649, %v645
        %v690 = vpack.c.b16 %v654, %v650
        %v691 = vpack.c.b16 %v655, %v651
        %v692 = vpack.c.b16 %v656, %v652
        %v693 = vpack.c.b16 %v657, %v653
        %v694 = vpack.c.b16 %v662, %v658
        %v695 = vpack.c.b16 %v663, %v659
        %v696 = vpack.c.b16 %v664, %v660
        %v697 = vpack.c.b16 %v665, %v661
        %v794 = vunpack.c.l.b16 %v506
        %v795 = vunpack.c.l.b16 %v507
        %v796 = vunpack.c.l.b16 %v508
        %v797 = vunpack.c.l.b16 %v509
        %v798 = vunpack.c.l.b16 %v510
        %v799 = vunpack.c.l.b16 %v511
        %v800 = vunpack.c.l.b16 %v512
        %v801 = vunpack.c.l.b16 %v513
        %v802 = vunpack.c.l.b16 %v514
        %v803 = vunpack.c.l.b16 %v515
        %v804 = vunpack.c.l.b16 %v516
        %v805 = vunpack.c.l.b16 %v517
        %v806 = vunpack.c.l.b16 %v518
        %v807 = vunpack.c.l.b16 %v519
        %v808 = vunpack.c.l.b16 %v520
        %v809 = vunpack.c.l.b16 %v521
        %v810 = vunpack.c.l.b16 %v522
        %v811 = vunpack.c.l.b16 %v523
        %v812 = vunpack.c.l.b16 %v524
        %v813 = vunpack.c.l.b16 %v525
        %v814 = vunpack.c.l.b16 %v526
        %v815 = vunpack.c.l.b16 %v527
        %v816 = vunpack.c.l.b16 %v528
        %v817 = vunpack.c.l.b16 %v529
        %v818 = vunpack.c.l.b16 %v530
        %v819 = vunpack.c.l.b16 %v531
        %v820 = vunpack.c.l.b16 %v532
        %v821 = vunpack.c.l.b16 %v533
        %v822 = vunpack.c.l.b16 %v534
        %v823 = vunpack.c.l.b16 %v535
        %v824 = vunpack.c.l.b16 %v536
        %v825 = vunpack.c.l.b16 %v537
        %v826 = vunpack.c.l.b16 %v538
        %v827 = vunpack.c.l.b16 %v539
        %v828 = vunpack.c.l.b16 %v540
        %v829 = vunpack.c.l.b16 %v541
        %v830 = vunpack.c.l.b16 %v542
        %v831 = vunpack.c.l.b16 %v543
        %v832 = vunpack.c.l.b16 %v544
        %v833 = vunpack.c.l.b16 %v545
        %v834 = vunpack.c.l.b16 %v546
        %v835 = vunpack.c.l.b16 %v547
        %v836 = vunpack.c.l.b16 %v548
        %v837 = vunpack.c.l.b16 %v549
        %v838 = vunpack.c.l.b16 %v550
        %v839 = vunpack.c.l.b16 %v551
        %v840 = vunpack.c.l.b16 %v552
        %v841 = vunpack.c.l.b16 %v553
        %v842 = vunpack.c.l.b16 %v554
        %v843 = vunpack.c.l.b16 %v555
        %v844 = vunpack.c.l.b16 %v556
        %v845 = vunpack.c.l.b16 %v557
        %v846 = vunpack.c.l.b16 %v558
        %v847 = vunpack.c.l.b16 %v559
        %v848 = vunpack.c.l.b16 %v560
        %v849 = vunpack.c.l.b16 %v561
        %v850 = vunpack.c.l.b16 %v562
        %v851 = vunpack.c.l.b16 %v563
        %v852 = vunpack.c.l.b16 %v564
        %v853 = vunpack.c.l.b16 %v565
        %v854 = vunpack.c.l.b16 %v566
        %v855 = vunpack.c.l.b16 %v567
        %v856 = vunpack.c.l.b16 %v568
        %v857 = vunpack.c.l.b16 %v569
        %v858 = vpack.c.b16 %v795, %v794
        %v859 = vpack.c.b16 %v797, %v796
        %v860 = vpack.c.b16 %v799, %v798
        %v861 = vpack.c.b16 %v801, %v800
        %v862 = vpack.c.b16 %v803, %v802
        %v863 = vpack.c.b16 %v805, %v804
        %v864 = vpack.c.b16 %v807, %v806
        %v865 = vpack.c.b16 %v809, %v808
        %v866 = vpack.c.b16 %v811, %v810
        %v867 = vpack.c.b16 %v813, %v812
        %v868 = vpack.c.b16 %v815, %v814
        %v869 = vpack.c.b16 %v817, %v816
        %v870 = vpack.c.b16 %v819, %v818
        %v871 = vpack.c.b16 %v821, %v820
        %v872 = vpack.c.b16 %v823, %v822
        %v873 = vpack.c.b16 %v825, %v824
        %v874 = vpack.c.b16 %v827, %v826
        %v875 = vpack.c.b16 %v829, %v828
        %v876 = vpack.c.b16 %v831, %v830
        %v877 = vpack.c.b16 %v833, %v832
        %v878 = vpack.c.b16 %v835, %v834
        %v879 = vpack.c.b16 %v837, %v836
        %v880 = vpack.c.b16 %v839, %v838
        %v881 = vpack.c.b16 %v841, %v840
        %v882 = vpack.c.b16 %v843, %v842
        %v883 = vpack.c.b16 %v845, %v844
        %v884 = vpack.c.b16 %v847, %v846
        %v885 = vpack.c.b16 %v849, %v848
        %v886 = vpack.c.b16 %v851, %v850
        %v887 = vpack.c.b16 %v853, %v852
        %v888 = vpack.c.b16 %v855, %v854
        %v889 = vpack.c.b16 %v857, %v856
        %922 = vmatprep.subr.bf16.mxu0 0
        %923 = vmatpush1.bf16.msra.mxu0 %v865
        %924 = vmatprep.subr.bf16.mxu0 0
        %925 = vmatpush1.bf16.msra.mxu0 %v864
        %926 = vmatprep.subr.bf16.mxu0 0
        %927 = vmatpush1.bf16.msra.mxu0 %v863
        %928 = vmatprep.subr.bf16.mxu0 0
        %929 = vmatpush1.bf16.msra.mxu0 %v862
        %930 = vmatprep.subr.bf16.mxu0 0
        %931 = vmatpush1.bf16.msra.mxu0 %v861
        %932 = vmatprep.subr.bf16.mxu0 0
        %933 = vmatpush1.bf16.msra.mxu0 %v860
        %934 = vmatprep.subr.bf16.mxu0 0
        %935 = vmatpush1.bf16.msra.mxu0 %v859
        %936 = vmatprep.subr.bf16.mxu0 0
        %937 = vmatpush1.bf16.msra.mxu0 %v858
        %938 = vmatprep.subr.bf16.mxu0 0
        %939 = vmatpush2.bf16.msra.mxu0 %v873
        %940 = vmatprep.subr.bf16.mxu0 0
        %941 = vmatpush2.bf16.msra.mxu0 %v872
        %942 = vmatprep.subr.bf16.mxu0 0
        %943 = vmatpush2.bf16.msra.mxu0 %v871
        %944 = vmatprep.subr.bf16.mxu0 0
        %945 = vmatpush2.bf16.msra.mxu0 %v870
        %946 = vmatprep.subr.bf16.mxu0 0
        %947 = vmatpush2.bf16.msra.mxu0 %v869
        %948 = vmatprep.subr.bf16.mxu0 0
        %949 = vmatpush2.bf16.msra.mxu0 %v868
        %950 = vmatprep.subr.bf16.mxu0 0
        %951 = vmatpush2.bf16.msra.mxu0 %v867
        %952 = vmatprep.subr.bf16.mxu0 0
        %953 = vmatpush2.bf16.msra.mxu0 %v866
        %954 = vmatprep.mubr.bf16.mxu0 %v667
        %955 = vmatmul.mubr.bf16.gmra.mxu0 %v666
        %v956 = vpop.f32.mrf.mxu0
        %v957 = vadd.f32 0.0, %v956
        %v958 = vpop.f32.mrf.mxu0
        %v959 = vpop.f32.mrf.mxu0
        %v960 = vadd.f32 0.0, %v959
        %v961 = vpop.f32.mrf.mxu0
        %962 = vmatprep.mubr.bf16.mxu0 %v671
        %963 = vmatmul.mubr.bf16.gmra.mxu0 %v670
        %v964 = vpop.f32.mrf.mxu0
        %v965 = vadd.f32 0.0, %v964
        %v966 = vpop.f32.mrf.mxu0
        %v967 = vpop.f32.mrf.mxu0
        %v968 = vadd.f32 0.0, %v967
        %v969 = vpop.f32.mrf.mxu0
        %970 = vmatprep.mubr.bf16.mxu0 %v675
        %971 = vmatmul.mubr.bf16.gmra.mxu0 %v674
        %v972 = vpop.f32.mrf.mxu0
        %v973 = vadd.f32 0.0, %v972
        %v974 = vpop.f32.mrf.mxu0
        %v975 = vpop.f32.mrf.mxu0
        %v976 = vadd.f32 0.0, %v975
        %v977 = vpop.f32.mrf.mxu0
        %978 = vmatprep.mubr.bf16.mxu0 %v679
        %979 = vmatmul.mubr.bf16.gmra.mxu0 %v678
        %v980 = vpop.f32.mrf.mxu0
        %v981 = vadd.f32 0.0, %v980
        %v982 = vpop.f32.mrf.mxu0
        %v983 = vpop.f32.mrf.mxu0
        %v984 = vadd.f32 0.0, %v983
        %v985 = vpop.f32.mrf.mxu0
        %986 = vmatprep.mubr.bf16.mxu0 %v683
        %987 = vmatmul.mubr.bf16.gmra.mxu0 %v682
        %v988 = vpop.f32.mrf.mxu0
        %v989 = vadd.f32 0.0, %v988
        %v990 = vpop.f32.mrf.mxu0
        %v991 = vpop.f32.mrf.mxu0
        %v992 = vadd.f32 0.0, %v991
        %v993 = vpop.f32.mrf.mxu0
        %994 = vmatprep.mubr.bf16.mxu0 %v687
        %995 = vmatmul.mubr.bf16.gmra.mxu0 %v686
        %v996 = vpop.f32.mrf.mxu0
        %v997 = vadd.f32 0.0, %v996
        %v998 = vpop.f32.mrf.mxu0
        %v999 = vpop.f32.mrf.mxu0
        %v1000 = vadd.f32 0.0, %v999
        %v1001 = vpop.f32.mrf.mxu0
        %1002 = vmatprep.mubr.bf16.mxu0 %v691
        %1003 = vmatmul.mubr.bf16.gmra.mxu0 %v690
        %v1004 = vpop.f32.mrf.mxu0
        %v1005 = vadd.f32 0.0, %v1004
        %v1006 = vpop.f32.mrf.mxu0
        %v1007 = vpop.f32.mrf.mxu0
        %v1008 = vadd.f32 0.0, %v1007
        %v1009 = vpop.f32.mrf.mxu0
        %1010 = vmatprep.mubr.bf16.mxu0 %v695
        %1011 = vmatmul.mubr.bf16.gmra.mxu0 %v694
        %v1012 = vpop.f32.mrf.mxu0
        %v1013 = vadd.f32 0.0, %v1012
        %v1014 = vpop.f32.mrf.mxu0
        %v1015 = vpop.f32.mrf.mxu0
        %v1016 = vadd.f32 0.0, %v1015
        %v1017 = vpop.f32.mrf.mxu0
        %1018 = vdwg.mxu0
        %1019 = vmatprep.subr.bf16.mxu0 0
        %1020 = vmatpush1.bf16.msra.mxu0 %v881
        %1021 = vmatprep.subr.bf16.mxu0 0
        %1022 = vmatpush1.bf16.msra.mxu0 %v880
        %1023 = vmatprep.subr.bf16.mxu0 0
        %1024 = vmatpush1.bf16.msra.mxu0 %v879
        %1025 = vmatprep.subr.bf16.mxu0 0
        %1026 = vmatpush1.bf16.msra.mxu0 %v878
        %1027 = vmatprep.subr.bf16.mxu0 0
        %1028 = vmatpush1.bf16.msra.mxu0 %v877
        %1029 = vmatprep.subr.bf16.mxu0 0
        %1030 = vmatpush1.bf16.msra.mxu0 %v876
        %1031 = vmatprep.subr.bf16.mxu0 0
        %1032 = vmatpush1.bf16.msra.mxu0 %v875
        %1033 = vmatprep.subr.bf16.mxu0 0
        %1034 = vmatpush1.bf16.msra.mxu0 %v874
        %1035 = vmatprep.subr.bf16.mxu0 0
        %1036 = vmatpush2.bf16.msra.mxu0 %v889
        %1037 = vmatprep.subr.bf16.mxu0 0
        %1038 = vmatpush2.bf16.msra.mxu0 %v888
        %1039 = vmatprep.subr.bf16.mxu0 0
        %1040 = vmatpush2.bf16.msra.mxu0 %v887
        %1041 = vmatprep.subr.bf16.mxu0 0
        %1042 = vmatpush2.bf16.msra.mxu0 %v886
        %1043 = vmatprep.subr.bf16.mxu0 0
        %1044 = vmatpush2.bf16.msra.mxu0 %v885
        %1045 = vmatprep.subr.bf16.mxu0 0
        %1046 = vmatpush2.bf16.msra.mxu0 %v884
        %1047 = vmatprep.subr.bf16.mxu0 0
        %1048 = vmatpush2.bf16.msra.mxu0 %v883
        %1049 = vmatprep.subr.bf16.mxu0 0
        %1050 = vmatpush2.bf16.msra.mxu0 %v882
        %1051 = vmatprep.mubr.bf16.mxu0 %v669
        %1052 = vmatmul.mubr.bf16.gmra.mxu0 %v668
        %v1053 = vpop.f32.mrf.mxu0
        %v1054 = vadd.f32 %v957, %v1053
        %v1055 = vpop.f32.mrf.mxu0
        %v1056 = vpop.f32.mrf.mxu0
        %v1057 = vadd.f32 %v960, %v1056
        %v1058 = vpop.f32.mrf.mxu0
        %1059 = vmatprep.mubr.bf16.mxu0 %v673
        %1060 = vmatmul.mubr.bf16.gmra.mxu0 %v672
        %v1061 = vpop.f32.mrf.mxu0
        %v1062 = vadd.f32 %v965, %v1061
        %v1063 = vpop.f32.mrf.mxu0
        %v1064 = vpop.f32.mrf.mxu0
        %v1065 = vadd.f32 %v968, %v1064
        %v1066 = vpop.f32.mrf.mxu0
        %1067 = vmatprep.mubr.bf16.mxu0 %v677
        %1068 = vmatmul.mubr.bf16.gmra.mxu0 %v676
        %v1069 = vpop.f32.mrf.mxu0
        %v1070 = vadd.f32 %v973, %v1069
        %v1071 = vpop.f32.mrf.mxu0
        %v1072 = vpop.f32.mrf.mxu0
        %v1073 = vadd.f32 %v976, %v1072
        %v1074 = vpop.f32.mrf.mxu0
        %1075 = vmatprep.mubr.bf16.mxu0 %v681
        %1076 = vmatmul.mubr.bf16.gmra.mxu0 %v680
        %v1077 = vpop.f32.mrf.mxu0
        %v1078 = vadd.f32 %v981, %v1077
        %v1079 = vpop.f32.mrf.mxu0
        %v1080 = vpop.f32.mrf.mxu0
        %v1081 = vadd.f32 %v984, %v1080
        %v1082 = vpop.f32.mrf.mxu0
        %1083 = vmatprep.mubr.bf16.mxu0 %v685
        %1084 = vmatmul.mubr.bf16.gmra.mxu0 %v684
        %v1085 = vpop.f32.mrf.mxu0
        %v1086 = vadd.f32 %v989, %v1085
        %v1087 = vpop.f32.mrf.mxu0
        %v1088 = vpop.f32.mrf.mxu0
        %v1089 = vadd.f32 %v992, %v1088
        %v1090 = vpop.f32.mrf.mxu0
        %1091 = vmatprep.mubr.bf16.mxu0 %v689
        %1092 = vmatmul.mubr.bf16.gmra.mxu0 %v688
        %v1093 = vpop.f32.mrf.mxu0
        %v1094 = vadd.f32 %v997, %v1093
        %v1095 = vpop.f32.mrf.mxu0
        %v1096 = vpop.f32.mrf.mxu0
        %v1097 = vadd.f32 %v1000, %v1096
        %v1098 = vpop.f32.mrf.mxu0
        %1099 = vmatprep.mubr.bf16.mxu0 %v693
        %1100 = vmatmul.mubr.bf16.gmra.mxu0 %v692
        %v1101 = vpop.f32.mrf.mxu0
        %v1102 = vadd.f32 %v1005, %v1101
        %v1103 = vpop.f32.mrf.mxu0
        %v1104 = vpop.f32.mrf.mxu0
        %v1105 = vadd.f32 %v1008, %v1104
        %v1106 = vpop.f32.mrf.mxu0
        %1107 = vmatprep.mubr.bf16.mxu0 %v697
        %1108 = vmatmul.mubr.bf16.gmra.mxu0 %v696
        %v1109 = vpop.f32.mrf.mxu0
        %v1110 = vadd.f32 %v1013, %v1109
        %v1111 = vpop.f32.mrf.mxu0
        %v1112 = vpop.f32.mrf.mxu0
        %v1113 = vadd.f32 %v1016, %v1112
        %v1114 = vpop.f32.mrf.mxu0
        %1115 = vdwg.mxu0
        %v1116 = vpack.c.bf16 %v1057, %v1054
        %v1117 = vpack.c.bf16 %v1065, %v1062
        %v1118 = vpack.c.bf16 %v1073, %v1070
        %v1119 = vpack.c.bf16 %v1081, %v1078
        %v1120 = vpack.c.bf16 %v1089, %v1086
        %v1121 = vpack.c.bf16 %v1097, %v1094
        %v1122 = vpack.c.bf16 %v1105, %v1102
        %v1123 = vpack.c.bf16 %v1113, %v1110
        %v1132 = vunpack.c.l.b16 %v1116
        %v1133 = vunpack.c.h.b16 %v1116
        %v1134 = vunpack.c.l.b16 %v1117
        %v1135 = vunpack.c.h.b16 %v1117
        %v1136 = vunpack.c.l.b16 %v1118
        %v1137 = vunpack.c.h.b16 %v1118
        %v1138 = vunpack.c.l.b16 %v1119
        %v1139 = vunpack.c.h.b16 %v1119
        %v1140 = vunpack.c.l.b16 %v1120
        %v1141 = vunpack.c.h.b16 %v1120
        %v1142 = vunpack.c.l.b16 %v1121
        %v1143 = vunpack.c.h.b16 %v1121
        %v1144 = vunpack.c.l.b16 %v1122
        %v1145 = vunpack.c.h.b16 %v1122
        %v1146 = vunpack.c.l.b16 %v1123
        %v1147 = vunpack.c.h.b16 %v1123
        %v1148 = vpack.c.b16 %v1132, %v1132
        %v1149 = vpack.c.b16 %v1133, %v1133
        %v1150 = vpack.c.b16 %v1134, %v1134
        %v1151 = vpack.c.b16 %v1135, %v1135
        %v1152 = vpack.c.b16 %v1136, %v1136
        %v1153 = vpack.c.b16 %v1137, %v1137
        %v1154 = vpack.c.b16 %v1138, %v1138
        %v1155 = vpack.c.b16 %v1139, %v1139
        %v1156 = vpack.c.b16 %v1140, %v1140
        %v1157 = vpack.c.b16 %v1141, %v1141
        %v1158 = vpack.c.b16 %v1142, %v1142
        %v1159 = vpack.c.b16 %v1143, %v1143
        %v1160 = vpack.c.b16 %v1144, %v1144
        %v1161 = vpack.c.b16 %v1145, %v1145
        %v1162 = vpack.c.b16 %v1146, %v1146
        %v1163 = vpack.c.b16 %v1147, %v1147
        %1180 = vst [vmem:[%s464] sm:$0xf] %v1148
        %1181 = vst [vmem:[%s464 + $0x4] sm:$0xf] %v1149
        %1182 = vst [vmem:[%s464 + $0x8] sm:$0xf] %v1150
        %1183 = vst [vmem:[%s464 + $0xc] sm:$0xf] %v1151
        %1184 = vst [vmem:[%s464 + $0x10] sm:$0xf] %v1152
        %1185 = vst [vmem:[%s464 + $0x14] sm:$0xf] %v1153
        %1186 = vst [vmem:[%s464 + $0x18] sm:$0xf] %v1154
        %1187 = vst [vmem:[%s464 + $0x1c] sm:$0xf] %v1155
        %1188 = vst [vmem:[%s464 + $0x20] sm:$0xf] %v1156
        %1189 = vst [vmem:[%s464 + $0x24] sm:$0xf] %v1157
        %1190 = vst [vmem:[%s464 + $0x28] sm:$0xf] %v1158
        %1191 = vst [vmem:[%s464 + $0x2c] sm:$0xf] %v1159
        %1192 = vst [vmem:[%s464 + $0x30] sm:$0xf] %v1160
        %1193 = vst [vmem:[%s464 + $0x34] sm:$0xf] %v1161
        %1194 = vst [vmem:[%s464 + $0x38] sm:$0xf] %v1162
        %1195 = vst [vmem:[%s464 + $0x3c] sm:$0xf] %v1163
        %s1196 = sand.u32 %s87, 1
        %s1197 = sand.u32 %s87, 1
        %s1198 = smul.addr %s1197, 64
        %s1199 = scalar_lea.vmem [#allocation3], %s1198
        // Predicated region
        $region70: #{adaptive_attention_forward.6} parent=64 // pred_check
          %p1200 = pneg %p97
        $region71: #{adaptive_attention_forward.6} parent=64 // pred_check_branch
          %1202 = sbr.rel (%p1200) target = $region73
        $region72: #{adaptive_attention_forward.6} parent=64 // pred_region
          %s1203 = smul.u32 16, %s17
          %s1204 = smul.addr %s1203, 4
          %s1205 = sadd.s32 %s18, %s1204
          %s1206 = smul.addr %s1205, 4
          %s1207 = scalar_lea.vmem %s2, %s1206
          // Predicated region
          $region74: #{adaptive_attention_forward.6} parent=72 // pred_check
            _
          $region75: #{adaptive_attention_forward.6} parent=72 // pred_check_branch
            %1209 = sbr.rel (0) target = $region77
          $region76: #{adaptive_attention_forward.6} parent=72 // pred_region
            // Predicated region
            $region78: #{adaptive_attention_forward.6} parent=76 // pred_check
              _
            $region79: #{adaptive_attention_forward.6} parent=76 // pred_check_branch
              %1211 = sbr.rel target = $region81
            $region80: #{adaptive_attention_forward.6} parent=76 // pred_region
              // Predicated region
              $region93: #{adaptive_attention_forward.6} parent=80 // pred_check
                _
              $region94: #{adaptive_attention_forward.6} parent=80 // pred_check_branch
                %1257 = sbr.rel (0) target = $region96
              $region95: #{adaptive_attention_forward.6} parent=80 // pred_region
                loop: start=0, step=1, limit=1
                $region97: #{adaptive_attention_forward.6} parent=95 // loop_pre_header
                  _
                $region98: #{adaptive_attention_forward.6} parent=95 // loop_header
                  %s1259 = sphi 0, %s1263
                  %p1260 = scmp.ge.s32.totalorder %s1259, 1
                  %s1264 = sphi %s1199, %s1199
                  %s1265 = sphi %s1207, %s1207
                $region99: #{adaptive_attention_forward.6} parent=95 // loop_header_branch
                  %1262 = sbr.rel (%p1260) target = $region103
                $region100: #{adaptive_attention_forward.6} parent=95 // loop_body
                  _
                $region101: #{adaptive_attention_forward.6} parent=95 // loop_footer
                  %s1263 = sadd.s32 1, %s1259
                $region102: #{adaptive_attention_forward.6} parent=95 // loop_footer_branch
                  %1258 = sbr.rel target = $region98
                $region103: #{adaptive_attention_forward.6} parent=95 // loop_exit
                  _
                %s1267 = ssub.s32 16, 1
                loop: start=0, step=1, limit=1
                $region104: #{adaptive_attention_forward.6} parent=95 // loop_pre_header
                  _
                $region105: #{adaptive_attention_forward.6} parent=95 // loop_header
                  %s1269 = sphi 0, %s1273
                  %p1270 = scmp.ge.s32.totalorder %s1269, 1
                  %s1274 = sphi %s1199, %s1199
                  %s1275 = sphi %s1207, %s1207
                $region106: #{adaptive_attention_forward.6} parent=95 // loop_header_branch
                  %1272 = sbr.rel (%p1270) target = $region110
                $region107: #{adaptive_attention_forward.6} parent=95 // loop_body
                  %v1276 = vld [vmem:[%s1274] sm:%s1267]
                  %1277 = vst [vmem:[%s1275] sm:%s1267] %v1276
                  %v1278 = vld [vmem:[%s1274 + $0x4] sm:%s1267]
                  %1279 = vst [vmem:[%s1275 + $0x10] sm:%s1267] %v1278
                  %v1280 = vld [vmem:[%s1274 + $0x8] sm:%s1267]
                  %1281 = vst [vmem:[%s1275 + $0x20] sm:%s1267] %v1280
                  %v1282 = vld [vmem:[%s1274 + $0xc] sm:%s1267]
                  %1283 = vst [vmem:[%s1275 + $0x30] sm:%s1267] %v1282
                  %v1284 = vld [vmem:[%s1274 + $0x10] sm:%s1267]
                  %1285 = vst [vmem:[%s1275 + $0x40] sm:%s1267] %v1284
                  %v1286 = vld [vmem:[%s1274 + $0x14] sm:%s1267]
                  %1287 = vst [vmem:[%s1275 + $0x50] sm:%s1267] %v1286
                  %v1288 = vld [vmem:[%s1274 + $0x18] sm:%s1267]
                  %1289 = vst [vmem:[%s1275 + $0x60] sm:%s1267] %v1288
                  %v1290 = vld [vmem:[%s1274 + $0x1c] sm:%s1267]
                  %1291 = vst [vmem:[%s1275 + $0x70] sm:%s1267] %v1290
                  %v1292 = vld [vmem:[%s1274 + $0x20] sm:%s1267]
                  %1293 = vst [vmem:[%s1275 + $0x80] sm:%s1267] %v1292
                  %v1294 = vld [vmem:[%s1274 + $0x24] sm:%s1267]
                  %1295 = vst [vmem:[%s1275 + $0x90] sm:%s1267] %v1294
                  %v1296 = vld [vmem:[%s1274 + $0x28] sm:%s1267]
                  %1297 = vst [vmem:[%s1275 + $0xa0] sm:%s1267] %v1296
                  %v1298 = vld [vmem:[%s1274 + $0x2c] sm:%s1267]
                  %1299 = vst [vmem:[%s1275 + $0xb0] sm:%s1267] %v1298
                  %v1300 = vld [vmem:[%s1274 + $0x30] sm:%s1267]
                  %1301 = vst [vmem:[%s1275 + $0xc0] sm:%s1267] %v1300
                  %v1302 = vld [vmem:[%s1274 + $0x34] sm:%s1267]
                  %1303 = vst [vmem:[%s1275 + $0xd0] sm:%s1267] %v1302
                  %v1304 = vld [vmem:[%s1274 + $0x38] sm:%s1267]
                  %1305 = vst [vmem:[%s1275 + $0xe0] sm:%s1267] %v1304
                  %v1306 = vld [vmem:[%s1274 + $0x3c] sm:%s1267]
                  %1307 = vst [vmem:[%s1275 + $0xf0] sm:%s1267] %v1306
                $region108: #{adaptive_attention_forward.6} parent=95 // loop_footer
                  %s1273 = sadd.s32 1, %s1269
                $region109: #{adaptive_attention_forward.6} parent=95 // loop_footer_branch
                  %1268 = sbr.rel target = $region105
                $region110: #{adaptive_attention_forward.6} parent=95 // loop_exit
                  _
              $region96: #{adaptive_attention_forward.6} parent=80 // pred_fallthru
                _
            $region81: #{adaptive_attention_forward.6} parent=76 // pred_fallthru
              _
            // Predicated region
            $region82: #{adaptive_attention_forward.6} parent=76 // pred_check
              _
            $region83: #{adaptive_attention_forward.6} parent=76 // pred_check_branch
              %1213 = sbr.rel (0) target = $region85
            $region84: #{adaptive_attention_forward.6} parent=76 // pred_region
              %s1215 = ssub.s32 16, 1
              loop: start=0, step=1, limit=1
              $region86: #{adaptive_attention_forward.6} parent=84 // loop_pre_header
                _
              $region87: #{adaptive_attention_forward.6} parent=84 // loop_header
                %s1217 = sphi 0, %s1221
                %p1218 = scmp.ge.s32.totalorder %s1217, 1
                %s1222 = sphi %s1199, %s1199
                %s1223 = sphi %s1207, %s1207
              $region88: #{adaptive_attention_forward.6} parent=84 // loop_header_branch
                %1220 = sbr.rel (%p1218) target = $region92
              $region89: #{adaptive_attention_forward.6} parent=84 // loop_body
                %v1224 = vld [vmem:[%s1222] sm:%s1215]
                %1225 = vst [vmem:[%s1223] sm:%s1215] %v1224
                %v1226 = vld [vmem:[%s1222 + $0x4] sm:%s1215]
                %1227 = vst [vmem:[%s1223 + $0x10] sm:%s1215] %v1226
                %v1228 = vld [vmem:[%s1222 + $0x8] sm:%s1215]
                %1229 = vst [vmem:[%s1223 + $0x20] sm:%s1215] %v1228
                %v1230 = vld [vmem:[%s1222 + $0xc] sm:%s1215]
                %1231 = vst [vmem:[%s1223 + $0x30] sm:%s1215] %v1230
                %v1232 = vld [vmem:[%s1222 + $0x10] sm:%s1215]
                %1233 = vst [vmem:[%s1223 + $0x40] sm:%s1215] %v1232
                %v1234 = vld [vmem:[%s1222 + $0x14] sm:%s1215]
                %1235 = vst [vmem:[%s1223 + $0x50] sm:%s1215] %v1234
                %v1236 = vld [vmem:[%s1222 + $0x18] sm:%s1215]
                %1237 = vst [vmem:[%s1223 + $0x60] sm:%s1215] %v1236
                %v1238 = vld [vmem:[%s1222 + $0x1c] sm:%s1215]
                %1239 = vst [vmem:[%s1223 + $0x70] sm:%s1215] %v1238
                %v1240 = vld [vmem:[%s1222 + $0x20] sm:%s1215]
                %1241 = vst [vmem:[%s1223 + $0x80] sm:%s1215] %v1240
                %v1242 = vld [vmem:[%s1222 + $0x24] sm:%s1215]
                %1243 = vst [vmem:[%s1223 + $0x90] sm:%s1215] %v1242
                %v1244 = vld [vmem:[%s1222 + $0x28] sm:%s1215]
                %1245 = vst [vmem:[%s1223 + $0xa0] sm:%s1215] %v1244
                %v1246 = vld [vmem:[%s1222 + $0x2c] sm:%s1215]
                %1247 = vst [vmem:[%s1223 + $0xb0] sm:%s1215] %v1246
                %v1248 = vld [vmem:[%s1222 + $0x30] sm:%s1215]
                %1249 = vst [vmem:[%s1223 + $0xc0] sm:%s1215] %v1248
                %v1250 = vld [vmem:[%s1222 + $0x34] sm:%s1215]
                %1251 = vst [vmem:[%s1223 + $0xd0] sm:%s1215] %v1250
                %v1252 = vld [vmem:[%s1222 + $0x38] sm:%s1215]
                %1253 = vst [vmem:[%s1223 + $0xe0] sm:%s1215] %v1252
                %v1254 = vld [vmem:[%s1222 + $0x3c] sm:%s1215]
                %1255 = vst [vmem:[%s1223 + $0xf0] sm:%s1215] %v1254
              $region90: #{adaptive_attention_forward.6} parent=84 // loop_footer
                %s1221 = sadd.s32 1, %s1217
              $region91: #{adaptive_attention_forward.6} parent=84 // loop_footer_branch
                %1216 = sbr.rel target = $region87
              $region92: #{adaptive_attention_forward.6} parent=84 // loop_exit
                _
            $region85: #{adaptive_attention_forward.6} parent=76 // pred_fallthru
              _
          $region77: #{adaptive_attention_forward.6} parent=72 // pred_fallthru
            _
          %1308 = vnop
        $region73: #{adaptive_attention_forward.6} parent=64 // pred_fallthru
          _
      $region65: #{adaptive_attention_forward.6} parent=5 // pred_fallthru
        _
      %p1309 = scmp.le.s32.totalorder 2, %s8
      // Predicated region
      $region111: #{adaptive_attention_forward.6} parent=5 // pred_check
        %p1310 = pneg %p1309
      $region112: #{adaptive_attention_forward.6} parent=5 // pred_check_branch
        %1312 = sbr.rel (%p1310) target = $region114
      $region113: #{adaptive_attention_forward.6} parent=5 // pred_region
        %s1313 = ssub.s32 %s8, 2
        // Predicated region
        $region115: #{adaptive_attention_forward.6} parent=113 // pred_check
          %p1314 = pneg %p103
        $region116: #{adaptive_attention_forward.6} parent=113 // pred_check_branch
          %1316 = sbr.rel (%p1314) target = $region118
        $region117: #{adaptive_attention_forward.6} parent=113 // pred_region
          %s1317 = sand.u32 %s88, 1
          %s1318 = sand.u32 %s88, 1
          %s1319 = smul.addr %s1318, 64
          %s1320 = scalar_lea.vmem [#allocation3], %s1319
        $region118: #{adaptive_attention_forward.6} parent=113 // pred_fallthru
          _
      $region114: #{adaptive_attention_forward.6} parent=5 // pred_fallthru
        _
    $region6: #{adaptive_attention_forward.6} parent=1 // loop_footer
      %s12 = sadd.s32 1, %s8
    $region7: #{adaptive_attention_forward.6} parent=1 // loop_footer_branch
      %7 = sbr.rel target = $region3
    $region8: #{adaptive_attention_forward.6} parent=1 // loop_exit
      _

// kernel: adaptive_attention_forward.8
$region0: #{adaptive_attention_forward.8}
  #allocation0 [shape = 'u32[]', space=smem, size = 0x4, offset = 0x4, fixed_abs, tag = 'smem constant byte address 0x4 - core index']
  #allocation1 [shape = 'u32[144,128]{1,0:T(1,128)}', space=vmem, size = 0x12000, scoped, tag = 'internal scratch']
  #allocation2 [shape = 'f32[128,1]{1,0:T(8,128)}', space=vmem, size = 0x10000, scoped, tag = 'scratch operand']
  #allocation3 [shape = 'f32[128,1]{1,0:T(8,128)}', space=vmem, size = 0x10000, scoped, tag = 'scratch operand']
  #allocation4 [shape = 'f32[128,128]{1,0:T(8,128)}', space=vmem, size = 0x10000, scoped, tag = 'scratch operand']
  %s0 = inlined_call_operand.vmem [shape: bf16[8,256,128], index: 0, kind: input, shape index: {}]
  %s1 = inlined_call_operand.vmem [shape: bf16[8,256,128], index: 1, kind: input, shape index: {}]
  %s2 = inlined_call_operand.vmem [shape: bf16[8,256,128], index: 2, kind: input, shape index: {}]
  %s3 = inlined_call_operand.vmem [shape: bf16[8,256,128], index: 3, kind: output, shape index: {}]
  %s4 = sld [smem:[#allocation0]]
  $region57: #{adaptive_attention_forward.8} parent=0
    _
  %s6 = ssub.s32 1, %s4
  %s7 = scalar_select 0, %s6, %s4
  loop: start=0, step=1, limit=34
  $region2: #{adaptive_attention_forward.8} parent=0 // loop_pre_header
    _
  $region3: #{adaptive_attention_forward.8} parent=0 // loop_header
    %s9 = sphi 0, %s13
    %p10 = scmp.ge.s32.totalorder %s9, 34
    %s16 = sphi 0, %s35
    %s17 = sphi 0, %s31
    %s18 = sphi 0, %s27
    %s19 = sphi 0, %s16
    %s20 = sphi 0, %s17
    %s21 = sphi 0, %s18
    %s22 = sphi 0, %s19
    %s23 = sphi 0, %s20
    %s24 = sphi 0, %s21
    %s40 = sphi 0, %s42
    %s43 = sphi 0, %s40
    %s44 = sphi 0, %s43
    %s60 = sphi 0, %s44
    %s68 = sphi 0, %s70
    %s71 = sphi 0, %s68
    %s72 = sphi 0, %s71
    %s88 = sphi 0, %s72
    %s96 = sphi 0, %s98
    %s99 = sphi 0, %s96
    %s100 = sphi 0, %s99
    %s116 = sphi 0, %s100
    %s124 = sphi 0, %s126
    %s127 = sphi 0, %s124
    %s128 = sphi 0, %s127
    %s144 = sphi 0, %s128
  $region4: #{adaptive_attention_forward.8} parent=0 // loop_header_branch
    %12 = sbr.rel (%p10) target = $region8
  $region5: #{adaptive_attention_forward.8} parent=0 // loop_body
    %s14 = ssub.s32 %s9, 1
    %s15 = ssub.s32 %s9, 2
    %s25 = sadd.s32 1, %s18
    %p26 = scmp.ge.s32.totalorder %s25, 2
    %s27 = scalar_select %p26, 0, %s25
    %s28 = sadd.s32 1, %s17
    %s29 = scalar_select %p26, %s28, %s17
    %p30 = scmp.ge.s32.totalorder %s29, 2
    %s31 = scalar_select %p30, 0, %s29
    %s32 = sadd.s32 1, %s16
    %s33 = scalar_select %p30, %s32, %s16
    %p34 = scmp.ge.s32.totalorder %s33, 8
    %s35 = scalar_select %p34, 0, %s33
    %s36 = ssub.s32 %s16, %s35
    %s37 = ssub.s32 %s17, %s31
    %s38 = sor.u32 %s36, %s37
    %p39 = scmp.eq.s32.totalorder %s38, 0
    %s41 = sadd.s32 %s40, 1
    %s42 = scalar_select %p39, %s40, %s41
    %p45 = pneg %p39
    %p46 = scmp.eq.s32.totalorder %s9, 31
    %p47 = por %p45, %p46
    %p48 = scmp.ne.s32.totalorder %s40, %s43
    %p49 = scmp.eq.s32.totalorder %s9, 0
    %p50 = por %p48, %p49
    %p51 = scmp.ne.s32.totalorder %s40, %s43
    %p52 = scmp.eq.s32.totalorder %s14, 31
    %p53 = por %p51, %p52
    %p54 = scmp.ne.s32.totalorder %s43, %s44
    %p55 = scmp.eq.s32.totalorder %s14, 0
    %p56 = por %p54, %p55
    %p57 = scmp.ne.s32.totalorder %s43, %s44
    %p58 = scmp.eq.s32.totalorder %s15, 31
    %p59 = por %p57, %p58
    %p61 = scmp.ne.s32.totalorder %s44, %s60
    %p62 = scmp.eq.s32.totalorder %s15, 0
    %p63 = por %p61, %p62
    %s64 = ssub.s32 %s16, %s35
    %s65 = ssub.s32 %s18, %s27
    %s66 = sor.u32 %s64, %s65
    %p67 = scmp.eq.s32.totalorder %s66, 0
    %s69 = sadd.s32 %s68, 1
    %s70 = scalar_select %p67, %s68, %s69
    %p73 = pneg %p67
    %p74 = scmp.eq.s32.totalorder %s9, 31
    %p75 = por %p73, %p74
    %p76 = scmp.ne.s32.totalorder %s68, %s71
    %p77 = scmp.eq.s32.totalorder %s9, 0
    %p78 = por %p76, %p77
    %p79 = scmp.ne.s32.totalorder %s68, %s71
    %p80 = scmp.eq.s32.totalorder %s14, 31
    %p81 = por %p79, %p80
    %p82 = scmp.ne.s32.totalorder %s71, %s72
    %p83 = scmp.eq.s32.totalorder %s14, 0
    %p84 = por %p82, %p83
    %p85 = scmp.ne.s32.totalorder %s71, %s72
    %p86 = scmp.eq.s32.totalorder %s15, 31
    %p87 = por %p85, %p86
    %p89 = scmp.ne.s32.totalorder %s72, %s88
    %p90 = scmp.eq.s32.totalorder %s15, 0
    %p91 = por %p89, %p90
    %s92 = ssub.s32 %s16, %s35
    %s93 = ssub.s32 %s18, %s27
    %s94 = sor.u32 %s92, %s93
    %p95 = scmp.eq.s32.totalorder %s94, 0
    %s97 = sadd.s32 %s96, 1
    %s98 = scalar_select %p95, %s96, %s97
    %p101 = pneg %p95
    %p102 = scmp.eq.s32.totalorder %s9, 31
    %p103 = por %p101, %p102
    %p104 = scmp.ne.s32.totalorder %s96, %s99
    %p105 = scmp.eq.s32.totalorder %s9, 0
    %p106 = por %p104, %p105
    %p107 = scmp.ne.s32.totalorder %s96, %s99
    %p108 = scmp.eq.s32.totalorder %s14, 31
    %p109 = por %p107, %p108
    %p110 = scmp.ne.s32.totalorder %s99, %s100
    %p111 = scmp.eq.s32.totalorder %s14, 0
    %p112 = por %p110, %p111
    %p113 = scmp.ne.s32.totalorder %s99, %s100
    %p114 = scmp.eq.s32.totalorder %s15, 31
    %p115 = por %p113, %p114
    %p117 = scmp.ne.s32.totalorder %s100, %s116
    %p118 = scmp.eq.s32.totalorder %s15, 0
    %p119 = por %p117, %p118
    %s120 = ssub.s32 %s16, %s35
    %s121 = ssub.s32 %s17, %s31
    %s122 = sor.u32 %s120, %s121
    %p123 = scmp.eq.s32.totalorder %s122, 0
    %s125 = sadd.s32 %s124, 1
    %s126 = scalar_select %p123, %s124, %s125
    %p129 = pneg %p123
    %p130 = scmp.eq.s32.totalorder %s9, 31
    %p131 = por %p129, %p130
    %p132 = scmp.ne.s32.totalorder %s124, %s127
    %p133 = scmp.eq.s32.totalorder %s9, 0
    %p134 = por %p132, %p133
    %p135 = scmp.ne.s32.totalorder %s124, %s127
    %p136 = scmp.eq.s32.totalorder %s14, 31
    %p137 = por %p135, %p136
    %p138 = scmp.ne.s32.totalorder %s127, %s128
    %p139 = scmp.eq.s32.totalorder %s14, 0
    %p140 = por %p138, %p139
    %p141 = scmp.ne.s32.totalorder %s127, %s128
    %p142 = scmp.eq.s32.totalorder %s15, 31
    %p143 = por %p141, %p142
    %p145 = scmp.ne.s32.totalorder %s128, %s144
    %p146 = scmp.eq.s32.totalorder %s15, 0
    %p147 = por %p145, %p146
    %p148 = scmp.le.s32.totalorder 1, %s9
    %p149 = scmp.lt.s32.totalorder %s9, 33
    %p150 = pnand %p148, %p149
    %p151 = pneg %p150
    // Predicated region
    $region9: #{adaptive_attention_forward.8} parent=5 // pred_check
      _
    $region10: #{adaptive_attention_forward.8} parent=5 // pred_check_branch
      %153 = sbr.rel (%p150) target = $region12
    $region11: #{adaptive_attention_forward.8} parent=5 // pred_region
      %s154 = ssub.s32 %s9, 1
    $region12: #{adaptive_attention_forward.8} parent=5 // pred_fallthru
      _
    %p155 = scmp.lt.s32.totalorder %s9, 32
    // Predicated region
    $region13: #{adaptive_attention_forward.8} parent=5 // pred_check
      %p156 = pneg %p155
    $region14: #{adaptive_attention_forward.8} parent=5 // pred_check_branch
      %158 = sbr.rel (%p156) target = $region16
    $region15: #{adaptive_attention_forward.8} parent=5 // pred_region
      // Predicated region
      $region17: #{adaptive_attention_forward.8} parent=15 // pred_check
        %p159 = pneg %p50
      $region18: #{adaptive_attention_forward.8} parent=15 // pred_check_branch
        %161 = sbr.rel (%p159) target = $region20
      $region19: #{adaptive_attention_forward.8} parent=15 // pred_region
        %s162 = smul.u32 16, %s17
        %p163 = scmp.lt.s32.totalorder %s16, 7
        %s164 = scalar_select %p163, %s16, 7
        %p165 = scmp.lt.s32.totalorder %s162, 31
        %s166 = scalar_select %p165, %s162, 31
        %s167 = smul.addr %s164, 32
        %s168 = sadd.s32 %s166, %s167
        %s169 = smul.addr %s168, 4
        %s170 = scalar_lea.vmem %s0, %s169
        %s171 = smul.u32 16, %s17
      $region20: #{adaptive_attention_forward.8} parent=15 // pred_fallthru
        _
      // Predicated region
      $region21: #{adaptive_attention_forward.8} parent=15 // pred_check
        %p172 = pneg %p78
      $region22: #{adaptive_attention_forward.8} parent=15 // pred_check_branch
        %174 = sbr.rel (%p172) target = $region24
      $region23: #{adaptive_attention_forward.8} parent=15 // pred_region
        %s175 = smul.u32 16, %s18
        %p176 = scmp.lt.s32.totalorder %s16, 7
        %s177 = scalar_select %p176, %s16, 7
        %p178 = scmp.lt.s32.totalorder %s175, 31
        %s179 = scalar_select %p178, %s175, 31
        %s180 = smul.addr %s177, 32
        %s181 = sadd.s32 %s179, %s180
        %s182 = smul.addr %s181, 4
        %s183 = scalar_lea.vmem %s1, %s182
        %s184 = smul.u32 16, %s18
      $region24: #{adaptive_attention_forward.8} parent=15 // pred_fallthru
        _
      // Predicated region
      $region25: #{adaptive_attention_forward.8} parent=15 // pred_check
        %p185 = pneg %p106
      $region26: #{adaptive_attention_forward.8} parent=15 // pred_check_branch
        %187 = sbr.rel (%p185) target = $region28
      $region27: #{adaptive_attention_forward.8} parent=15 // pred_region
        %s188 = smul.u32 16, %s18
        %p189 = scmp.lt.s32.totalorder %s16, 7
        %s190 = scalar_select %p189, %s16, 7
        %p191 = scmp.lt.s32.totalorder %s188, 31
        %s192 = scalar_select %p191, %s188, 31
        %s193 = smul.addr %s190, 32
        %s194 = sadd.s32 %s192, %s193
        %s195 = smul.addr %s194, 4
        %s196 = scalar_lea.vmem %s2, %s195
        %s197 = smul.u32 16, %s18
      $region28: #{adaptive_attention_forward.8} parent=15 // pred_fallthru
        _
    $region16: #{adaptive_attention_forward.8} parent=5 // pred_fallthru
      _
    %p198 = scmp.le.s32.totalorder 1, %s9
    %p199 = scmp.lt.s32.totalorder %s9, 33
    %p200 = pnand %p198, %p199
    %p201 = pneg %p200
    // Predicated region
    $region29: #{adaptive_attention_forward.8} parent=5 // pred_check
      _
    $region30: #{adaptive_attention_forward.8} parent=5 // pred_check_branch
      %203 = sbr.rel (%p200) target = $region32
    $region31: #{adaptive_attention_forward.8} parent=5 // pred_region
      %s204 = ssub.s32 %s9, 1
      %s205 = smul.u32 16, %s20
      %p206 = scmp.lt.s32.totalorder %s19, 7
      %s207 = scalar_select %p206, %s19, 7
      %p208 = scmp.lt.s32.totalorder %s205, 31
      %s209 = scalar_select %p208, %s205, 31
      %s210 = smul.addr %s207, 32
      %s211 = sadd.s32 %s209, %s210
      %s212 = smul.addr %s211, 4
      %s213 = scalar_lea.vmem %s0, %s212
      %p214 = pneg %p56
      %p215 = pneg %p53
      %s216 = smul.u32 16, %s21
      %p217 = scmp.lt.s32.totalorder %s19, 7
      %s218 = scalar_select %p217, %s19, 7
      %p219 = scmp.lt.s32.totalorder %s216, 31
      %s220 = scalar_select %p219, %s216, 31
      %s221 = smul.addr %s218, 32
      %s222 = sadd.s32 %s220, %s221
      %s223 = smul.addr %s222, 4
      %s224 = scalar_lea.vmem %s1, %s223
      %p225 = pneg %p84
      %p226 = pneg %p81
      %s227 = smul.u32 16, %s21
      %p228 = scmp.lt.s32.totalorder %s19, 7
      %s229 = scalar_select %p228, %s19, 7
      %p230 = scmp.lt.s32.totalorder %s227, 31
      %s231 = scalar_select %p230, %s227, 31
      %s232 = smul.addr %s229, 32
      %s233 = sadd.s32 %s231, %s232
      %s234 = smul.addr %s233, 4
      %s235 = scalar_lea.vmem %s2, %s234
      %p236 = pneg %p112
      %p237 = pneg %p109
      %p238 = pneg %p140
      %p239 = pneg %p137
      %s240 = smul.u32 16, %s20
      %p241 = scmp.lt.s32.totalorder %s19, 7
      %s242 = scalar_select %p241, %s19, 7
      %p243 = scmp.lt.s32.totalorder %s240, 31
      %s244 = scalar_select %p243, %s240, 31
      %s245 = smul.addr %s242, 32
      %s246 = sadd.s32 %s244, %s245
      %s247 = smul.addr %s246, 4
      %s248 = scalar_lea.vmem %s3, %s247
      %s249 = smul.u32 16, %s20
      %p250 = scmp.lt.s32.totalorder %s19, 7
      %s251 = scalar_select %p250, %s19, 7
      %p252 = scmp.lt.s32.totalorder %s249, 31
      %s253 = scalar_select %p252, %s249, 31
      %s254 = smul.addr %s251, 32
      %s255 = sadd.s32 %s253, %s254
      %s256 = smul.addr %s255, 4
      %s257 = scalar_lea.vmem %s0, %s256
      %s258 = smul.u32 16, %s20
      %s259 = smul.u32 16, %s21
      %p260 = scmp.lt.s32.totalorder %s19, 7
      %s261 = scalar_select %p260, %s19, 7
      %p262 = scmp.lt.s32.totalorder %s259, 31
      %s263 = scalar_select %p262, %s259, 31
      %s264 = smul.addr %s261, 32
      %s265 = sadd.s32 %s263, %s264
      %s266 = smul.addr %s265, 4
      %s267 = scalar_lea.vmem %s1, %s266
      %s268 = smul.u32 16, %s21
      %s269 = smul.u32 16, %s21
      %p270 = scmp.lt.s32.totalorder %s19, 7
      %s271 = scalar_select %p270, %s19, 7
      %p272 = scmp.lt.s32.totalorder %s269, 31
      %s273 = scalar_select %p272, %s269, 31
      %s274 = smul.addr %s271, 32
      %s275 = sadd.s32 %s273, %s274
      %s276 = smul.addr %s275, 4
      %s277 = scalar_lea.vmem %s2, %s276
      %s278 = smul.u32 16, %s21
      %s279 = smul.u32 16, %s20
      %p280 = scmp.lt.s32.totalorder %s19, 7
      %s281 = scalar_select %p280, %s19, 7
      %p282 = scmp.lt.s32.totalorder %s279, 31
      %s283 = scalar_select %p282, %s279, 31
      %s284 = smul.addr %s281, 32
      %s285 = sadd.s32 %s283, %s284
      %s286 = smul.addr %s285, 4
      %s287 = scalar_lea.vmem %s3, %s286
      %s288 = smul.u32 16, %s20
      %p290 = scmp.eq.s32.totalorder %s21, 0
      // Predicated region
      $region33: #{adaptive_attention_forward.8} parent=31 // pred_check
        %p291 = pneg %p290
      $region34: #{adaptive_attention_forward.8} parent=31 // pred_check_branch
        %293 = sbr.rel (%p291) target = $region36
      $region35: #{adaptive_attention_forward.8} parent=31 // pred_region
        %vm294 = vcmask 7168
        %295 = vst.msk [vmem:[#allocation2] sm:$0xff] %vm294, -inf
        %296 = vst.msk [vmem:[#allocation2 + $0x8] sm:$0xff] %vm294, -inf
        %297 = vst.msk [vmem:[#allocation2 + $0x10] sm:$0xff] %vm294, -inf
        %298 = vst.msk [vmem:[#allocation2 + $0x18] sm:$0xff] %vm294, -inf
        %299 = vst.msk [vmem:[#allocation2 + $0x20] sm:$0xff] %vm294, -inf
        %300 = vst.msk [vmem:[#allocation2 + $0x28] sm:$0xff] %vm294, -inf
        %301 = vst.msk [vmem:[#allocation2 + $0x30] sm:$0xff] %vm294, -inf
        %302 = vst.msk [vmem:[#allocation2 + $0x38] sm:$0xff] %vm294, -inf
        %303 = vst.msk [vmem:[#allocation2 + $0x40] sm:$0xff] %vm294, -inf
        %304 = vst.msk [vmem:[#allocation2 + $0x48] sm:$0xff] %vm294, -inf
        %305 = vst.msk [vmem:[#allocation2 + $0x50] sm:$0xff] %vm294, -inf
        %306 = vst.msk [vmem:[#allocation2 + $0x58] sm:$0xff] %vm294, -inf
        %307 = vst.msk [vmem:[#allocation2 + $0x60] sm:$0xff] %vm294, -inf
        %308 = vst.msk [vmem:[#allocation2 + $0x68] sm:$0xff] %vm294, -inf
        %309 = vst.msk [vmem:[#allocation2 + $0x70] sm:$0xff] %vm294, -inf
        %310 = vst.msk [vmem:[#allocation2 + $0x78] sm:$0xff] %vm294, -inf
        %311 = vst.msk [vmem:[#allocation3] sm:$0xff] %vm294, 0.0
        %312 = vst.msk [vmem:[#allocation3 + $0x8] sm:$0xff] %vm294, 0.0
        %313 = vst.msk [vmem:[#allocation3 + $0x10] sm:$0xff] %vm294, 0.0
        %314 = vst.msk [vmem:[#allocation3 + $0x18] sm:$0xff] %vm294, 0.0
        %315 = vst.msk [vmem:[#allocation3 + $0x20] sm:$0xff] %vm294, 0.0
        %316 = vst.msk [vmem:[#allocation3 + $0x28] sm:$0xff] %vm294, 0.0
        %317 = vst.msk [vmem:[#allocation3 + $0x30] sm:$0xff] %vm294, 0.0
        %318 = vst.msk [vmem:[#allocation3 + $0x38] sm:$0xff] %vm294, 0.0
        %319 = vst.msk [vmem:[#allocation3 + $0x40] sm:$0xff] %vm294, 0.0
        %320 = vst.msk [vmem:[#allocation3 + $0x48] sm:$0xff] %vm294, 0.0
        %321 = vst.msk [vmem:[#allocation3 + $0x50] sm:$0xff] %vm294, 0.0
        %322 = vst.msk [vmem:[#allocation3 + $0x58] sm:$0xff] %vm294, 0.0
        %323 = vst.msk [vmem:[#allocation3 + $0x60] sm:$0xff] %vm294, 0.0
        %324 = vst.msk [vmem:[#allocation3 + $0x68] sm:$0xff] %vm294, 0.0
        %325 = vst.msk [vmem:[#allocation3 + $0x70] sm:$0xff] %vm294, 0.0
        %326 = vst.msk [vmem:[#allocation3 + $0x78] sm:$0xff] %vm294, 0.0
        %327 = vst [vmem:[#allocation4] sm:$0xff] 0.0
        %328 = vst [vmem:[#allocation4 + $0x8] sm:$0xff] 0.0
        %329 = vst [vmem:[#allocation4 + $0x10] sm:$0xff] 0.0
        %330 = vst [vmem:[#allocation4 + $0x18] sm:$0xff] 0.0
        %331 = vst [vmem:[#allocation4 + $0x20] sm:$0xff] 0.0
        %332 = vst [vmem:[#allocation4 + $0x28] sm:$0xff] 0.0
        %333 = vst [vmem:[#allocation4 + $0x30] sm:$0xff] 0.0
        %334 = vst [vmem:[#allocation4 + $0x38] sm:$0xff] 0.0
        %335 = vst [vmem:[#allocation4 + $0x40] sm:$0xff] 0.0
        %336 = vst [vmem:[#allocation4 + $0x48] sm:$0xff] 0.0
        %337 = vst [vmem:[#allocation4 + $0x50] sm:$0xff] 0.0
        %338 = vst [vmem:[#allocation4 + $0x58] sm:$0xff] 0.0
        %339 = vst [vmem:[#allocation4 + $0x60] sm:$0xff] 0.0
        %340 = vst [vmem:[#allocation4 + $0x68] sm:$0xff] 0.0
        %341 = vst [vmem:[#allocation4 + $0x70] sm:$0xff] 0.0
        %342 = vst [vmem:[#allocation4 + $0x78] sm:$0xff] 0.0
      $region36: #{adaptive_attention_forward.8} parent=31 // pred_fallthru
        _
      %p343 = scmp.le.s32.totalorder %s21, %s20
      // Predicated region
      $region37: #{adaptive_attention_forward.8} parent=31 // pred_check
        %p344 = pneg %p343
      $region38: #{adaptive_attention_forward.8} parent=31 // pred_check_branch
        %346 = sbr.rel (%p344) target = $region40
      $region39: #{adaptive_attention_forward.8} parent=31 // pred_region
        %v347 = vld [vmem:[%s257] sm:$0xf]
        %v348 = vld [vmem:[%s257 + $0x4] sm:$0xf]
        %v349 = vld [vmem:[%s257 + $0x8] sm:$0xf]
        %v350 = vld [vmem:[%s257 + $0xc] sm:$0xf]
        %v351 = vld [vmem:[%s257 + $0x10] sm:$0xf]
        %v352 = vld [vmem:[%s257 + $0x14] sm:$0xf]
        %v353 = vld [vmem:[%s257 + $0x18] sm:$0xf]
        %v354 = vld [vmem:[%s257 + $0x1c] sm:$0xf]
        %v355 = vld [vmem:[%s257 + $0x20] sm:$0xf]
        %v356 = vld [vmem:[%s257 + $0x24] sm:$0xf]
        %v357 = vld [vmem:[%s257 + $0x28] sm:$0xf]
        %v358 = vld [vmem:[%s257 + $0x2c] sm:$0xf]
        %v359 = vld [vmem:[%s257 + $0x30] sm:$0xf]
        %v360 = vld [vmem:[%s257 + $0x34] sm:$0xf]
        %v361 = vld [vmem:[%s257 + $0x38] sm:$0xf]
        %v362 = vld [vmem:[%s257 + $0x3c] sm:$0xf]
        %v363 = vld [vmem:[%s267] sm:$0xf]
        %v364 = vld [vmem:[%s267 + $0x4] sm:$0xf]
        %v365 = vld [vmem:[%s267 + $0x8] sm:$0xf]
        %v366 = vld [vmem:[%s267 + $0xc] sm:$0xf]
        %v367 = vld [vmem:[%s267 + $0x10] sm:$0xf]
        %v368 = vld [vmem:[%s267 + $0x14] sm:$0xf]
        %v369 = vld [vmem:[%s267 + $0x18] sm:$0xf]
        %v370 = vld [vmem:[%s267 + $0x1c] sm:$0xf]
        %v371 = vld [vmem:[%s267 + $0x20] sm:$0xf]
        %v372 = vld [vmem:[%s267 + $0x24] sm:$0xf]
        %v373 = vld [vmem:[%s267 + $0x28] sm:$0xf]
        %v374 = vld [vmem:[%s267 + $0x2c] sm:$0xf]
        %v375 = vld [vmem:[%s267 + $0x30] sm:$0xf]
        %v376 = vld [vmem:[%s267 + $0x34] sm:$0xf]
        %v377 = vld [vmem:[%s267 + $0x38] sm:$0xf]
        %v378 = vld [vmem:[%s267 + $0x3c] sm:$0xf]
        %v379 = vld [vmem:[%s277] sm:$0xf]
        %v380 = vld [vmem:[%s277 + $0x4] sm:$0xf]
        %v381 = vld [vmem:[%s277 + $0x8] sm:$0xf]
        %v382 = vld [vmem:[%s277 + $0xc] sm:$0xf]
        %v383 = vld [vmem:[%s277 + $0x10] sm:$0xf]
        %v384 = vld [vmem:[%s277 + $0x14] sm:$0xf]
        %v385 = vld [vmem:[%s277 + $0x18] sm:$0xf]
        %v386 = vld [vmem:[%s277 + $0x1c] sm:$0xf]
        %v387 = vld [vmem:[%s277 + $0x20] sm:$0xf]
        %v388 = vld [vmem:[%s277 + $0x24] sm:$0xf]
        %v389 = vld [vmem:[%s277 + $0x28] sm:$0xf]
        %v390 = vld [vmem:[%s277 + $0x2c] sm:$0xf]
        %v391 = vld [vmem:[%s277 + $0x30] sm:$0xf]
        %v392 = vld [vmem:[%s277 + $0x34] sm:$0xf]
        %v393 = vld [vmem:[%s277 + $0x38] sm:$0xf]
        %v394 = vld [vmem:[%s277 + $0x3c] sm:$0xf]
        %v411 = vunpack.c.l.b16 %v347
        %v412 = vunpack.c.l.b16 %v348
        %v413 = vunpack.c.l.b16 %v349
        %v414 = vunpack.c.l.b16 %v350
        %v415 = vunpack.c.l.b16 %v351
        %v416 = vunpack.c.l.b16 %v352
        %v417 = vunpack.c.l.b16 %v353
        %v418 = vunpack.c.l.b16 %v354
        %v419 = vunpack.c.l.b16 %v355
        %v420 = vunpack.c.l.b16 %v356
        %v421 = vunpack.c.l.b16 %v357
        %v422 = vunpack.c.l.b16 %v358
        %v423 = vunpack.c.l.b16 %v359
        %v424 = vunpack.c.l.b16 %v360
        %v425 = vunpack.c.l.b16 %v361
        %v426 = vunpack.c.l.b16 %v362
        %v427 = vpack.c.b16 %v412, %v411
        %v428 = vpack.c.b16 %v414, %v413
        %v429 = vpack.c.b16 %v416, %v415
        %v430 = vpack.c.b16 %v418, %v417
        %v431 = vpack.c.b16 %v420, %v419
        %v432 = vpack.c.b16 %v422, %v421
        %v433 = vpack.c.b16 %v424, %v423
        %v434 = vpack.c.b16 %v426, %v425
        %v459 = vunpack.c.l.b16 %v363
        %v460 = vunpack.c.l.b16 %v364
        %v461 = vunpack.c.l.b16 %v365
        %v462 = vunpack.c.l.b16 %v366
        %v463 = vunpack.c.l.b16 %v367
        %v464 = vunpack.c.l.b16 %v368
        %v465 = vunpack.c.l.b16 %v369
        %v466 = vunpack.c.l.b16 %v370
        %v467 = vunpack.c.l.b16 %v371
        %v468 = vunpack.c.l.b16 %v372
        %v469 = vunpack.c.l.b16 %v373
        %v470 = vunpack.c.l.b16 %v374
        %v471 = vunpack.c.l.b16 %v375
        %v472 = vunpack.c.l.b16 %v376
        %v473 = vunpack.c.l.b16 %v377
        %v474 = vunpack.c.l.b16 %v378
        %v475 = vpack.c.b16 %v460, %v459
        %v476 = vpack.c.b16 %v462, %v461
        %v477 = vpack.c.b16 %v464, %v463
        %v478 = vpack.c.b16 %v466, %v465
        %v479 = vpack.c.b16 %v468, %v467
        %v480 = vpack.c.b16 %v470, %v469
        %v481 = vpack.c.b16 %v472, %v471
        %v482 = vpack.c.b16 %v474, %v473
        %491 = vmatprep.subr.bf16.mxu0 0
        %492 = vmatpush1.bf16.xpose.msra.mxu0 %v482
        %493 = vmatprep.subr.bf16.mxu0 0
        %494 = vmatpush1.bf16.xpose.msra.mxu0 %v481
        %495 = vmatprep.subr.bf16.mxu0 0
        %496 = vmatpush1.bf16.xpose.msra.mxu0 %v480
        %497 = vmatprep.subr.bf16.mxu0 0
        %498 = vmatpush1.bf16.xpose.msra.mxu0 %v479
        %499 = vmatprep.subr.bf16.mxu0 0
        %500 = vmatpush1.bf16.xpose.msra.mxu0 %v478
        %501 = vmatprep.subr.bf16.mxu0 0
        %502 = vmatpush1.bf16.xpose.msra.mxu0 %v477
        %503 = vmatprep.subr.bf16.mxu0 0
        %504 = vmatpush1.bf16.xpose.msra.mxu0 %v476
        %505 = vmatprep.subr.bf16.mxu0 0
        %506 = vmatpush1.bf16.xpose.msra.mxu0 %v475
        %507 = vmatprep.subr.bf16.mxu0 0
        %508 = vmatpush2.bf16.xpose.msra.mxu0 0
        %509 = vmatprep.subr.bf16.mxu0 0
        %510 = vmatpush2.bf16.xpose.msra.mxu0 0
        %511 = vmatprep.subr.bf16.mxu0 0
        %512 = vmatpush2.bf16.xpose.msra.mxu0 0
        %513 = vmatprep.subr.bf16.mxu0 0
        %514 = vmatpush2.bf16.xpose.msra.mxu0 0
        %515 = vmatprep.subr.bf16.mxu0 0
        %516 = vmatpush2.bf16.xpose.msra.mxu0 0
        %517 = vmatprep.subr.bf16.mxu0 0
        %518 = vmatpush2.bf16.xpose.msra.mxu0 0
        %519 = vmatprep.subr.bf16.mxu0 0
        %520 = vmatpush2.bf16.xpose.msra.mxu0 0
        %521 = vmatprep.subr.bf16.mxu0 0
        %522 = vmatpush2.bf16.xpose.msra.mxu0 0
        %523 = vmatprep.mubr.bf16.mxu0 0
        %524 = vmatmul.mubr.bf16.gmra.mxu0 %v427
        %v525 = vpop.f32.mrf.mxu0
        %v526 = vadd.f32 0.0, %v525
        %v527 = vpop.f32.mrf.mxu0
        %v528 = vpop.f32.mrf.mxu0
        %v529 = vadd.f32 0.0, %v528
        %v530 = vpop.f32.mrf.mxu0
        %531 = vmatprep.mubr.bf16.mxu0 0
        %532 = vmatmul.mubr.bf16.gmra.mxu0 %v428
        %v533 = vpop.f32.mrf.mxu0
        %v534 = vadd.f32 0.0, %v533
        %v535 = vpop.f32.mrf.mxu0
        %v536 = vpop.f32.mrf.mxu0
        %v537 = vadd.f32 0.0, %v536
        %v538 = vpop.f32.mrf.mxu0
        %539 = vmatprep.mubr.bf16.mxu0 0
        %540 = vmatmul.mubr.bf16.gmra.mxu0 %v429
        %v541 = vpop.f32.mrf.mxu0
        %v542 = vadd.f32 0.0, %v541
        %v543 = vpop.f32.mrf.mxu0
        %v544 = vpop.f32.mrf.mxu0
        %v545 = vadd.f32 0.0, %v544
        %v546 = vpop.f32.mrf.mxu0
        %547 = vmatprep.mubr.bf16.mxu0 0
        %548 = vmatmul.mubr.bf16.gmra.mxu0 %v430
        %v549 = vpop.f32.mrf.mxu0
        %v550 = vadd.f32 0.0, %v549
        %v551 = vpop.f32.mrf.mxu0
        %v552 = vpop.f32.mrf.mxu0
        %v553 = vadd.f32 0.0, %v552
        %v554 = vpop.f32.mrf.mxu0
        %555 = vmatprep.mubr.bf16.mxu0 0
        %556 = vmatmul.mubr.bf16.gmra.mxu0 %v431
        %v557 = vpop.f32.mrf.mxu0
        %v558 = vadd.f32 0.0, %v557
        %v559 = vpop.f32.mrf.mxu0
        %v560 = vpop.f32.mrf.mxu0
        %v561 = vadd.f32 0.0, %v560
        %v562 = vpop.f32.mrf.mxu0
        %563 = vmatprep.mubr.bf16.mxu0 0
        %564 = vmatmul.mubr.bf16.gmra.mxu0 %v432
        %v565 = vpop.f32.mrf.mxu0
        %v566 = vadd.f32 0.0, %v565
        %v567 = vpop.f32.mrf.mxu0
        %v568 = vpop.f32.mrf.mxu0
        %v569 = vadd.f32 0.0, %v568
        %v570 = vpop.f32.mrf.mxu0
        %571 = vmatprep.mubr.bf16.mxu0 0
        %572 = vmatmul.mubr.bf16.gmra.mxu0 %v433
        %v573 = vpop.f32.mrf.mxu0
        %v574 = vadd.f32 0.0, %v573
        %v575 = vpop.f32.mrf.mxu0
        %v576 = vpop.f32.mrf.mxu0
        %v577 = vadd.f32 0.0, %v576
        %v578 = vpop.f32.mrf.mxu0
        %579 = vmatprep.mubr.bf16.mxu0 0
        %580 = vmatmul.mubr.bf16.gmra.mxu0 %v434
        %v581 = vpop.f32.mrf.mxu0
        %v582 = vadd.f32 0.0, %v581
        %v583 = vpop.f32.mrf.mxu0
        %v584 = vpop.f32.mrf.mxu0
        %v585 = vadd.f32 0.0, %v584
        %v586 = vpop.f32.mrf.mxu0
        %587 = vdwg.mxu0
        %v588 = vmul.f32 %v526, 0.088388346
        %v589 = vmul.f32 %v529, 0.088388346
        %v590 = vmul.f32 %v534, 0.088388346
        %v591 = vmul.f32 %v537, 0.088388346
        %v592 = vmul.f32 %v542, 0.088388346
        %v593 = vmul.f32 %v545, 0.088388346
        %v594 = vmul.f32 %v550, 0.088388346
        %v595 = vmul.f32 %v553, 0.088388346
        %v596 = vmul.f32 %v558, 0.088388346
        %v597 = vmul.f32 %v561, 0.088388346
        %v598 = vmul.f32 %v566, 0.088388346
        %v599 = vmul.f32 %v569, 0.088388346
        %v600 = vmul.f32 %v574, 0.088388346
        %v601 = vmul.f32 %v577, 0.088388346
        %v602 = vmul.f32 %v582, 0.088388346
        %v603 = vmul.f32 %v585, 0.088388346
        %s604 = smul.u32 %s20, 128
        %v605 = vlaneseq
        %v606 = vshrl.u32 %v605, 7
        %v607 = vadd.s32 %v606, 8
        %v608 = vadd.s32 %v606, 16
        %v609 = vadd.s32 %v606, 24
        %v610 = vadd.s32 %v606, 32
        %v611 = vadd.s32 %v606, 40
        %v612 = vadd.s32 %v606, 48
        %v613 = vadd.s32 %v606, 56
        %v614 = vadd.s32 %v606, 64
        %v615 = vadd.s32 %v606, 72
        %v616 = vadd.s32 %v606, 80
        %v617 = vadd.s32 %v606, 88
        %v618 = vadd.s32 %v606, 96
        %v619 = vadd.s32 %v606, 104
        %v620 = vadd.s32 %v606, 112
        %v621 = vadd.s32 %v606, 120
        %v622 = vstv %s604
        %v623 = vadd.s32 %v622, %v606
        %v624 = vadd.s32 %v622, %v607
        %v625 = vadd.s32 %v622, %v608
        %v626 = vadd.s32 %v622, %v609
        %v627 = vadd.s32 %v622, %v610
        %v628 = vadd.s32 %v622, %v611
        %v629 = vadd.s32 %v622, %v612
        %v630 = vadd.s32 %v622, %v613
        %v631 = vadd.s32 %v622, %v614
        %v632 = vadd.s32 %v622, %v615
        %v633 = vadd.s32 %v622, %v616
        %v634 = vadd.s32 %v622, %v617
        %v635 = vadd.s32 %v622, %v618
        %v636 = vadd.s32 %v622, %v619
        %v637 = vadd.s32 %v622, %v620
        %v638 = vadd.s32 %v622, %v621
        %s639 = smul.u32 %s21, 128
        %v640 = vlaneseq
        %v641 = vand.u32 %v640, 127
        %v642 = vstv %s639
        %v643 = vadd.s32 %v642, %v641
        %vm644 = vcmp.ge.s32.totalorder %v623, %v643
        %vm645 = vcmp.ge.s32.totalorder %v624, %v643
        %vm646 = vcmp.ge.s32.totalorder %v625, %v643
        %vm647 = vcmp.ge.s32.totalorder %v626, %v643
        %vm648 = vcmp.ge.s32.totalorder %v627, %v643
        %vm649 = vcmp.ge.s32.totalorder %v628, %v643
        %vm650 = vcmp.ge.s32.totalorder %v629, %v643
        %vm651 = vcmp.ge.s32.totalorder %v630, %v643
        %vm652 = vcmp.ge.s32.totalorder %v631, %v643
        %vm653 = vcmp.ge.s32.totalorder %v632, %v643
        %vm654 = vcmp.ge.s32.totalorder %v633, %v643
        %vm655 = vcmp.ge.s32.totalorder %v634, %v643
        %vm656 = vcmp.ge.s32.totalorder %v635, %v643
        %vm657 = vcmp.ge.s32.totalorder %v636, %v643
        %vm658 = vcmp.ge.s32.totalorder %v637, %v643
        %vm659 = vcmp.ge.s32.totalorder %v638, %v643
        %v660 = vsel %vm644, %v588, -1e+09
        %v661 = vsel %vm645, %v589, -1e+09
        %v662 = vsel %vm646, %v590, -1e+09
        %v663 = vsel %vm647, %v591, -1e+09
        %v664 = vsel %vm648, %v592, -1e+09
        %v665 = vsel %vm649, %v593, -1e+09
        %v666 = vsel %vm650, %v594, -1e+09
        %v667 = vsel %vm651, %v595, -1e+09
        %v668 = vsel %vm652, %v596, -1e+09
        %v669 = vsel %vm653, %v597, -1e+09
        %v670 = vsel %vm654, %v598, -1e+09
        %v671 = vsel %vm655, %v599, -1e+09
        %v672 = vsel %vm656, %v600, -1e+09
        %v673 = vsel %vm657, %v601, -1e+09
        %v674 = vsel %vm658, %v602, -1e+09
        %v675 = vsel %vm659, %v603, -1e+09
        %v676 = vld [vmem:[#allocation2] sm:$0xff]
        %v677 = vld [vmem:[#allocation2 + $0x8] sm:$0xff]
        %v678 = vld [vmem:[#allocation2 + $0x10] sm:$0xff]
        %v679 = vld [vmem:[#allocation2 + $0x18] sm:$0xff]
        %v680 = vld [vmem:[#allocation2 + $0x20] sm:$0xff]
        %v681 = vld [vmem:[#allocation2 + $0x28] sm:$0xff]
        %v682 = vld [vmem:[#allocation2 + $0x30] sm:$0xff]
        %v683 = vld [vmem:[#allocation2 + $0x38] sm:$0xff]
        %v684 = vld [vmem:[#allocation2 + $0x40] sm:$0xff]
        %v685 = vld [vmem:[#allocation2 + $0x48] sm:$0xff]
        %v686 = vld [vmem:[#allocation2 + $0x50] sm:$0xff]
        %v687 = vld [vmem:[#allocation2 + $0x58] sm:$0xff]
        %v688 = vld [vmem:[#allocation2 + $0x60] sm:$0xff]
        %v689 = vld [vmem:[#allocation2 + $0x68] sm:$0xff]
        %v690 = vld [vmem:[#allocation2 + $0x70] sm:$0xff]
        %v691 = vld [vmem:[#allocation2 + $0x78] sm:$0xff]
        %692 = vmax.xlane.f32.xlu0 %v660
        %v693 = vpop.xlane.xlu0 %692
        %694 = vmax.xlane.f32.xlu0 %v661
        %v695 = vpop.xlane.xlu0 %694
        %696 = vmax.xlane.f32.xlu0 %v662
        %v697 = vpop.xlane.xlu0 %696
        %698 = vmax.xlane.f32.xlu0 %v663
        %v699 = vpop.xlane.xlu0 %698
        %700 = vmax.xlane.f32.xlu0 %v664
        %v701 = vpop.xlane.xlu0 %700
        %702 = vmax.xlane.f32.xlu0 %v665
        %v703 = vpop.xlane.xlu0 %702
        %704 = vmax.xlane.f32.xlu0 %v666
        %v705 = vpop.xlane.xlu0 %704
        %706 = vmax.xlane.f32.xlu0 %v667
        %v707 = vpop.xlane.xlu0 %706
        %708 = vmax.xlane.f32.xlu0 %v668
        %v709 = vpop.xlane.xlu0 %708
        %710 = vmax.xlane.f32.xlu0 %v669
        %v711 = vpop.xlane.xlu0 %710
        %712 = vmax.xlane.f32.xlu0 %v670
        %v713 = vpop.xlane.xlu0 %712
        %714 = vmax.xlane.f32.xlu0 %v671
        %v715 = vpop.xlane.xlu0 %714
        %716 = vmax.xlane.f32.xlu0 %v672
        %v717 = vpop.xlane.xlu0 %716
        %718 = vmax.xlane.f32.xlu0 %v673
        %v719 = vpop.xlane.xlu0 %718
        %720 = vmax.xlane.f32.xlu0 %v674
        %v721 = vpop.xlane.xlu0 %720
        %722 = vmax.xlane.f32.xlu0 %v675
        %v723 = vpop.xlane.xlu0 %722
        %v724 = vmax.f32 %v676, %v693
        %v725 = vmax.f32 %v677, %v695
        %v726 = vmax.f32 %v678, %v697
        %v727 = vmax.f32 %v679, %v699
        %v728 = vmax.f32 %v680, %v701
        %v729 = vmax.f32 %v681, %v703
        %v730 = vmax.f32 %v682, %v705
        %v731 = vmax.f32 %v683, %v707
        %v732 = vmax.f32 %v684, %v709
        %v733 = vmax.f32 %v685, %v711
        %v734 = vmax.f32 %v686, %v713
        %v735 = vmax.f32 %v687, %v715
        %v736 = vmax.f32 %v688, %v717
        %v737 = vmax.f32 %v689, %v719
        %v738 = vmax.f32 %v690, %v721
        %v739 = vmax.f32 %v691, %v723
        %v740 = vsub.f32 %v676, %v724
        %v741 = vsub.f32 %v677, %v725
        %v742 = vsub.f32 %v678, %v726
        %v743 = vsub.f32 %v679, %v727
        %v744 = vsub.f32 %v680, %v728
        %v745 = vsub.f32 %v681, %v729
        %v746 = vsub.f32 %v682, %v730
        %v747 = vsub.f32 %v683, %v731
        %v748 = vsub.f32 %v684, %v732
        %v749 = vsub.f32 %v685, %v733
        %v750 = vsub.f32 %v686, %v734
        %v751 = vsub.f32 %v687, %v735
        %v752 = vsub.f32 %v688, %v736
        %v753 = vsub.f32 %v689, %v737
        %v754 = vsub.f32 %v690, %v738
        %v755 = vsub.f32 %v691, %v739
        %v756 = vmul.f32 %v740, 1.442695
        %v757 = vpow.pop %v756
        %v758 = vmul.f32 %v741, 1.442695
        %v759 = vpow.pop %v758
        %v760 = vmul.f32 %v742, 1.442695
        %v761 = vpow.pop %v760
        %v762 = vmul.f32 %v743, 1.442695
        %v763 = vpow.pop %v762
        %v764 = vmul.f32 %v744, 1.442695
        %v765 = vpow.pop %v764
        %v766 = vmul.f32 %v745, 1.442695
        %v767 = vpow.pop %v766
        %v768 = vmul.f32 %v746, 1.442695
        %v769 = vpow.pop %v768
        %v770 = vmul.f32 %v747, 1.442695
        %v771 = vpow.pop %v770
        %v772 = vmul.f32 %v748, 1.442695
        %v773 = vpow.pop %v772
        %v774 = vmul.f32 %v749, 1.442695
        %v775 = vpow.pop %v774
        %v776 = vmul.f32 %v750, 1.442695
        %v777 = vpow.pop %v776
        %v778 = vmul.f32 %v751, 1.442695
        %v779 = vpow.pop %v778
        %v780 = vmul.f32 %v752, 1.442695
        %v781 = vpow.pop %v780
        %v782 = vmul.f32 %v753, 1.442695
        %v783 = vpow.pop %v782
        %v784 = vmul.f32 %v754, 1.442695
        %v785 = vpow.pop %v784
        %v786 = vmul.f32 %v755, 1.442695
        %v787 = vpow.pop %v786
        %789 = vset.pattern.permute.xlu0 0
        %790 = vperm.xlu0 %789, %v724
        %v791 = vpop.permute.xlu0 %790
        %794 = vset.pattern.permute.xlu0 0
        %795 = vperm.xlu0 %794, %v725
        %v796 = vpop.permute.xlu0 %795
        %799 = vset.pattern.permute.xlu0 0
        %800 = vperm.xlu0 %799, %v726
        %v801 = vpop.permute.xlu0 %800
        %804 = vset.pattern.permute.xlu0 0
        %805 = vperm.xlu0 %804, %v727
        %v806 = vpop.permute.xlu0 %805
        %809 = vset.pattern.permute.xlu0 0
        %810 = vperm.xlu0 %809, %v728
        %v811 = vpop.permute.xlu0 %810
        %814 = vset.pattern.permute.xlu0 0
        %815 = vperm.xlu0 %814, %v729
        %v816 = vpop.permute.xlu0 %815
        %819 = vset.pattern.permute.xlu0 0
        %820 = vperm.xlu0 %819, %v730
        %v821 = vpop.permute.xlu0 %820
        %824 = vset.pattern.permute.xlu0 0
        %825 = vperm.xlu0 %824, %v731
        %v826 = vpop.permute.xlu0 %825
        %829 = vset.pattern.permute.xlu0 0
        %830 = vperm.xlu0 %829, %v732
        %v831 = vpop.permute.xlu0 %830
        %834 = vset.pattern.permute.xlu0 0
        %835 = vperm.xlu0 %834, %v733
        %v836 = vpop.permute.xlu0 %835
        %839 = vset.pattern.permute.xlu0 0
        %840 = vperm.xlu0 %839, %v734
        %v841 = vpop.permute.xlu0 %840
        %844 = vset.pattern.permute.xlu0 0
        %845 = vperm.xlu0 %844, %v735
        %v846 = vpop.permute.xlu0 %845
        %849 = vset.pattern.permute.xlu0 0
        %850 = vperm.xlu0 %849, %v736
        %v851 = vpop.permute.xlu0 %850
        %854 = vset.pattern.permute.xlu0 0
        %855 = vperm.xlu0 %854, %v737
        %v856 = vpop.permute.xlu0 %855
        %859 = vset.pattern.permute.xlu0 0
        %860 = vperm.xlu0 %859, %v738
        %v861 = vpop.permute.xlu0 %860
        %864 = vset.pattern.permute.xlu0 0
        %865 = vperm.xlu0 %864, %v739
        %v866 = vpop.permute.xlu0 %865
        %v868 = vsub.f32 %v660, %v791
        %v869 = vsub.f32 %v661, %v796
        %v870 = vsub.f32 %v662, %v801
        %v871 = vsub.f32 %v663, %v806
        %v872 = vsub.f32 %v664, %v811
        %v873 = vsub.f32 %v665, %v816
        %v874 = vsub.f32 %v666, %v821
        %v875 = vsub.f32 %v667, %v826
        %v876 = vsub.f32 %v668, %v831
        %v877 = vsub.f32 %v669, %v836
        %v878 = vsub.f32 %v670, %v841
        %v879 = vsub.f32 %v671, %v846
        %v880 = vsub.f32 %v672, %v851
        %v881 = vsub.f32 %v673, %v856
        %v882 = vsub.f32 %v674, %v861
        %v883 = vsub.f32 %v675, %v866
        %v884 = vmul.f32 %v868, 1.442695
        %v885 = vpow.pop %v884
        %v886 = vmul.f32 %v869, 1.442695
        %v887 = vpow.pop %v886
        %v888 = vmul.f32 %v870, 1.442695
        %v889 = vpow.pop %v888
        %v890 = vmul.f32 %v871, 1.442695
        %v891 = vpow.pop %v890
        %v892 = vmul.f32 %v872, 1.442695
        %v893 = vpow.pop %v892
        %v894 = vmul.f32 %v873, 1.442695
        %v895 = vpow.pop %v894
        %v896 = vmul.f32 %v874, 1.442695
        %v897 = vpow.pop %v896
        %v898 = vmul.f32 %v875, 1.442695
        %v899 = vpow.pop %v898
        %v900 = vmul.f32 %v876, 1.442695
        %v901 = vpow.pop %v900
        %v902 = vmul.f32 %v877, 1.442695
        %v903 = vpow.pop %v902
        %v904 = vmul.f32 %v878, 1.442695
        %v905 = vpow.pop %v904
        %v906 = vmul.f32 %v879, 1.442695
        %v907 = vpow.pop %v906
        %v908 = vmul.f32 %v880, 1.442695
        %v909 = vpow.pop %v908
        %v910 = vmul.f32 %v881, 1.442695
        %v911 = vpow.pop %v910
        %v912 = vmul.f32 %v882, 1.442695
        %v913 = vpow.pop %v912
        %v914 = vmul.f32 %v883, 1.442695
        %v915 = vpow.pop %v914
        %v916 = vld [vmem:[#allocation3] sm:$0xff]
        %v917 = vld [vmem:[#allocation3 + $0x8] sm:$0xff]
        %v918 = vld [vmem:[#allocation3 + $0x10] sm:$0xff]
        %v919 = vld [vmem:[#allocation3 + $0x18] sm:$0xff]
        %v920 = vld [vmem:[#allocation3 + $0x20] sm:$0xff]
        %v921 = vld [vmem:[#allocation3 + $0x28] sm:$0xff]
        %v922 = vld [vmem:[#allocation3 + $0x30] sm:$0xff]
        %v923 = vld [vmem:[#allocation3 + $0x38] sm:$0xff]
        %v924 = vld [vmem:[#allocation3 + $0x40] sm:$0xff]
        %v925 = vld [vmem:[#allocation3 + $0x48] sm:$0xff]
        %v926 = vld [vmem:[#allocation3 + $0x50] sm:$0xff]
        %v927 = vld [vmem:[#allocation3 + $0x58] sm:$0xff]
        %v928 = vld [vmem:[#allocation3 + $0x60] sm:$0xff]
        %v929 = vld [vmem:[#allocation3 + $0x68] sm:$0xff]
        %v930 = vld [vmem:[#allocation3 + $0x70] sm:$0xff]
        %v931 = vld [vmem:[#allocation3 + $0x78] sm:$0xff]
        %v932 = vmul.f32 %v757, %v916
        %v933 = vmul.f32 %v759, %v917
        %v934 = vmul.f32 %v761, %v918
        %v935 = vmul.f32 %v763, %v919
        %v936 = vmul.f32 %v765, %v920
        %v937 = vmul.f32 %v767, %v921
        %v938 = vmul.f32 %v769, %v922
        %v939 = vmul.f32 %v771, %v923
        %v940 = vmul.f32 %v773, %v924
        %v941 = vmul.f32 %v775, %v925
        %v942 = vmul.f32 %v777, %v926
        %v943 = vmul.f32 %v779, %v927
        %v944 = vmul.f32 %v781, %v928
        %v945 = vmul.f32 %v783, %v929
        %v946 = vmul.f32 %v785, %v930
        %v947 = vmul.f32 %v787, %v931
        %948 = vadd.xlane.f32.xlu0 %v885
        %v949 = vpop.xlane.xlu0 %948
        %950 = vadd.xlane.f32.xlu0 %v887
        %v951 = vpop.xlane.xlu0 %950
        %952 = vadd.xlane.f32.xlu0 %v889
        %v953 = vpop.xlane.xlu0 %952
        %954 = vadd.xlane.f32.xlu0 %v891
        %v955 = vpop.xlane.xlu0 %954
        %956 = vadd.xlane.f32.xlu0 %v893
        %v957 = vpop.xlane.xlu0 %956
        %958 = vadd.xlane.f32.xlu0 %v895
        %v959 = vpop.xlane.xlu0 %958
        %960 = vadd.xlane.f32.xlu0 %v897
        %v961 = vpop.xlane.xlu0 %960
        %962 = vadd.xlane.f32.xlu0 %v899
        %v963 = vpop.xlane.xlu0 %962
        %964 = vadd.xlane.f32.xlu0 %v901
        %v965 = vpop.xlane.xlu0 %964
        %966 = vadd.xlane.f32.xlu0 %v903
        %v967 = vpop.xlane.xlu0 %966
        %968 = vadd.xlane.f32.xlu0 %v905
        %v969 = vpop.xlane.xlu0 %968
        %970 = vadd.xlane.f32.xlu0 %v907
        %v971 = vpop.xlane.xlu0 %970
        %972 = vadd.xlane.f32.xlu0 %v909
        %v973 = vpop.xlane.xlu0 %972
        %974 = vadd.xlane.f32.xlu0 %v911
        %v975 = vpop.xlane.xlu0 %974
        %976 = vadd.xlane.f32.xlu0 %v913
        %v977 = vpop.xlane.xlu0 %976
        %978 = vadd.xlane.f32.xlu0 %v915
        %v979 = vpop.xlane.xlu0 %978
        %v980 = vadd.f32 %v932, %v949
        %v981 = vadd.f32 %v933, %v951
        %v982 = vadd.f32 %v934, %v953
        %v983 = vadd.f32 %v935, %v955
        %v984 = vadd.f32 %v936, %v957
        %v985 = vadd.f32 %v937, %v959
        %v986 = vadd.f32 %v938, %v961
        %v987 = vadd.f32 %v939, %v963
        %v988 = vadd.f32 %v940, %v965
        %v989 = vadd.f32 %v941, %v967
        %v990 = vadd.f32 %v942, %v969
        %v991 = vadd.f32 %v943, %v971
        %v992 = vadd.f32 %v944, %v973
        %v993 = vadd.f32 %v945, %v975
        %v994 = vadd.f32 %v946, %v977
        %v995 = vadd.f32 %v947, %v979
        %vm996 = vcmask 7168
        %997 = vst.msk [vmem:[#allocation3] sm:$0xff] %vm996, %v980
        %998 = vst.msk [vmem:[#allocation3 + $0x8] sm:$0xff] %vm996, %v981
        %999 = vst.msk [vmem:[#allocation3 + $0x10] sm:$0xff] %vm996, %v982
        %1000 = vst.msk [vmem:[#allocation3 + $0x18] sm:$0xff] %vm996, %v983
        %1001 = vst.msk [vmem:[#allocation3 + $0x20] sm:$0xff] %vm996, %v984
        %1002 = vst.msk [vmem:[#allocation3 + $0x28] sm:$0xff] %vm996, %v985
        %1003 = vst.msk [vmem:[#allocation3 + $0x30] sm:$0xff] %vm996, %v986
        %1004 = vst.msk [vmem:[#allocation3 + $0x38] sm:$0xff] %vm996, %v987
        %1005 = vst.msk [vmem:[#allocation3 + $0x40] sm:$0xff] %vm996, %v988
        %1006 = vst.msk [vmem:[#allocation3 + $0x48] sm:$0xff] %vm996, %v989
        %1007 = vst.msk [vmem:[#allocation3 + $0x50] sm:$0xff] %vm996, %v990
        %1008 = vst.msk [vmem:[#allocation3 + $0x58] sm:$0xff] %vm996, %v991
        %1009 = vst.msk [vmem:[#allocation3 + $0x60] sm:$0xff] %vm996, %v992
        %1010 = vst.msk [vmem:[#allocation3 + $0x68] sm:$0xff] %vm996, %v993
        %1011 = vst.msk [vmem:[#allocation3 + $0x70] sm:$0xff] %vm996, %v994
        %1012 = vst.msk [vmem:[#allocation3 + $0x78] sm:$0xff] %vm996, %v995
        %v1013 = vld [vmem:[#allocation4] sm:$0xff]
        %v1014 = vld [vmem:[#allocation4 + $0x8] sm:$0xff]
        %v1015 = vld [vmem:[#allocation4 + $0x10] sm:$0xff]
        %v1016 = vld [vmem:[#allocation4 + $0x18] sm:$0xff]
        %v1017 = vld [vmem:[#allocation4 + $0x20] sm:$0xff]
        %v1018 = vld [vmem:[#allocation4 + $0x28] sm:$0xff]
        %v1019 = vld [vmem:[#allocation4 + $0x30] sm:$0xff]
        %v1020 = vld [vmem:[#allocation4 + $0x38] sm:$0xff]
        %v1021 = vld [vmem:[#allocation4 + $0x40] sm:$0xff]
        %v1022 = vld [vmem:[#allocation4 + $0x48] sm:$0xff]
        %v1023 = vld [vmem:[#allocation4 + $0x50] sm:$0xff]
        %v1024 = vld [vmem:[#allocation4 + $0x58] sm:$0xff]
        %v1025 = vld [vmem:[#allocation4 + $0x60] sm:$0xff]
        %v1026 = vld [vmem:[#allocation4 + $0x68] sm:$0xff]
        %v1027 = vld [vmem:[#allocation4 + $0x70] sm:$0xff]
        %v1028 = vld [vmem:[#allocation4 + $0x78] sm:$0xff]
        %1030 = vset.pattern.permute.xlu0 0
        %1031 = vperm.xlu0 %1030, %v757
        %v1032 = vpop.permute.xlu0 %1031
        %1035 = vset.pattern.permute.xlu0 0
        %1036 = vperm.xlu0 %1035, %v759
        %v1037 = vpop.permute.xlu0 %1036
        %1040 = vset.pattern.permute.xlu0 0
        %1041 = vperm.xlu0 %1040, %v761
        %v1042 = vpop.permute.xlu0 %1041
        %1045 = vset.pattern.permute.xlu0 0
        %1046 = vperm.xlu0 %1045, %v763
        %v1047 = vpop.permute.xlu0 %1046
        %1050 = vset.pattern.permute.xlu0 0
        %1051 = vperm.xlu0 %1050, %v765
        %v1052 = vpop.permute.xlu0 %1051
        %1055 = vset.pattern.permute.xlu0 0
        %1056 = vperm.xlu0 %1055, %v767
        %v1057 = vpop.permute.xlu0 %1056
        %1060 = vset.pattern.permute.xlu0 0
        %1061 = vperm.xlu0 %1060, %v769
        %v1062 = vpop.permute.xlu0 %1061
        %1065 = vset.pattern.permute.xlu0 0
        %1066 = vperm.xlu0 %1065, %v771
        %v1067 = vpop.permute.xlu0 %1066
        %1070 = vset.pattern.permute.xlu0 0
        %1071 = vperm.xlu0 %1070, %v773
        %v1072 = vpop.permute.xlu0 %1071
        %1075 = vset.pattern.permute.xlu0 0
        %1076 = vperm.xlu0 %1075, %v775
        %v1077 = vpop.permute.xlu0 %1076
        %1080 = vset.pattern.permute.xlu0 0
        %1081 = vperm.xlu0 %1080, %v777
        %v1082 = vpop.permute.xlu0 %1081
        %1085 = vset.pattern.permute.xlu0 0
        %1086 = vperm.xlu0 %1085, %v779
        %v1087 = vpop.permute.xlu0 %1086
        %1090 = vset.pattern.permute.xlu0 0
        %1091 = vperm.xlu0 %1090, %v781
        %v1092 = vpop.permute.xlu0 %1091
        %1095 = vset.pattern.permute.xlu0 0
        %1096 = vperm.xlu0 %1095, %v783
        %v1097 = vpop.permute.xlu0 %1096
        %1100 = vset.pattern.permute.xlu0 0
        %1101 = vperm.xlu0 %1100, %v785
        %v1102 = vpop.permute.xlu0 %1101
        %1105 = vset.pattern.permute.xlu0 0
        %1106 = vperm.xlu0 %1105, %v787
        %v1107 = vpop.permute.xlu0 %1106
        %v1109 = vmul.f32 %v1032, %v1013
        %v1110 = vmul.f32 %v1037, %v1014
        %v1111 = vmul.f32 %v1042, %v1015
        %v1112 = vmul.f32 %v1047, %v1016
        %v1113 = vmul.f32 %v1052, %v1017
        %v1114 = vmul.f32 %v1057, %v1018
        %v1115 = vmul.f32 %v1062, %v1019
        %v1116 = vmul.f32 %v1067, %v1020
        %v1117 = vmul.f32 %v1072, %v1021
        %v1118 = vmul.f32 %v1077, %v1022
        %v1119 = vmul.f32 %v1082, %v1023
        %v1120 = vmul.f32 %v1087, %v1024
        %v1121 = vmul.f32 %v1092, %v1025
        %v1122 = vmul.f32 %v1097, %v1026
        %v1123 = vmul.f32 %v1102, %v1027
        %v1124 = vmul.f32 %v1107, %v1028
        %v1125 = vpack.c.bf16 %v887, %v885
        %v1126 = vpack.c.bf16 %v891, %v889
        %v1127 = vpack.c.bf16 %v895, %v893
        %v1128 = vpack.c.bf16 %v899, %v897
        %v1129 = vpack.c.bf16 %v903, %v901
        %v1130 = vpack.c.bf16 %v907, %v905
        %v1131 = vpack.c.bf16 %v911, %v909
        %v1132 = vpack.c.bf16 %v915, %v913
        %v1149 = vunpack.c.l.b16 %v379
        %v1150 = vunpack.c.l.b16 %v380
        %v1151 = vunpack.c.l.b16 %v381
        %v1152 = vunpack.c.l.b16 %v382
        %v1153 = vunpack.c.l.b16 %v383
        %v1154 = vunpack.c.l.b16 %v384
        %v1155 = vunpack.c.l.b16 %v385
        %v1156 = vunpack.c.l.b16 %v386
        %v1157 = vunpack.c.l.b16 %v387
        %v1158 = vunpack.c.l.b16 %v388
        %v1159 = vunpack.c.l.b16 %v389
        %v1160 = vunpack.c.l.b16 %v390
        %v1161 = vunpack.c.l.b16 %v391
        %v1162 = vunpack.c.l.b16 %v392
        %v1163 = vunpack.c.l.b16 %v393
        %v1164 = vunpack.c.l.b16 %v394
        %v1165 = vpack.c.b16 %v1150, %v1149
        %v1166 = vpack.c.b16 %v1152, %v1151
        %v1167 = vpack.c.b16 %v1154, %v1153
        %v1168 = vpack.c.b16 %v1156, %v1155
        %v1169 = vpack.c.b16 %v1158, %v1157
        %v1170 = vpack.c.b16 %v1160, %v1159
        %v1171 = vpack.c.b16 %v1162, %v1161
        %v1172 = vpack.c.b16 %v1164, %v1163
        %1181 = vmatprep.subr.bf16.mxu0 0
        %1182 = vmatpush1.bf16.msra.mxu0 %v1172
        %1183 = vmatprep.subr.bf16.mxu0 0
        %1184 = vmatpush1.bf16.msra.mxu0 %v1171
        %1185 = vmatprep.subr.bf16.mxu0 0
        %1186 = vmatpush1.bf16.msra.mxu0 %v1170
        %1187 = vmatprep.subr.bf16.mxu0 0
        %1188 = vmatpush1.bf16.msra.mxu0 %v1169
        %1189 = vmatprep.subr.bf16.mxu0 0
        %1190 = vmatpush1.bf16.msra.mxu0 %v1168
        %1191 = vmatprep.subr.bf16.mxu0 0
        %1192 = vmatpush1.bf16.msra.mxu0 %v1167
        %1193 = vmatprep.subr.bf16.mxu0 0
        %1194 = vmatpush1.bf16.msra.mxu0 %v1166
        %1195 = vmatprep.subr.bf16.mxu0 0
        %1196 = vmatpush1.bf16.msra.mxu0 %v1165
        %1197 = vmatprep.subr.bf16.mxu0 0
        %1198 = vmatpush2.bf16.msra.mxu0 0
        %1199 = vmatprep.subr.bf16.mxu0 0
        %1200 = vmatpush2.bf16.msra.mxu0 0
        %1201 = vmatprep.subr.bf16.mxu0 0
        %1202 = vmatpush2.bf16.msra.mxu0 0
        %1203 = vmatprep.subr.bf16.mxu0 0
        %1204 = vmatpush2.bf16.msra.mxu0 0
        %1205 = vmatprep.subr.bf16.mxu0 0
        %1206 = vmatpush2.bf16.msra.mxu0 0
        %1207 = vmatprep.subr.bf16.mxu0 0
        %1208 = vmatpush2.bf16.msra.mxu0 0
        %1209 = vmatprep.subr.bf16.mxu0 0
        %1210 = vmatpush2.bf16.msra.mxu0 0
        %1211 = vmatprep.subr.bf16.mxu0 0
        %1212 = vmatpush2.bf16.msra.mxu0 0
        %1213 = vmatprep.mubr.bf16.mxu0 0
        %1214 = vmatmul.mubr.bf16.gmra.mxu0 %v1125
        %v1215 = vpop.f32.mrf.mxu0
        %v1216 = vadd.f32 0.0, %v1215
        %v1217 = vpop.f32.mrf.mxu0
        %v1218 = vpop.f32.mrf.mxu0
        %v1219 = vadd.f32 0.0, %v1218
        %v1220 = vpop.f32.mrf.mxu0
        %1221 = vmatprep.mubr.bf16.mxu0 0
        %1222 = vmatmul.mubr.bf16.gmra.mxu0 %v1126
        %v1223 = vpop.f32.mrf.mxu0
        %v1224 = vadd.f32 0.0, %v1223
        %v1225 = vpop.f32.mrf.mxu0
        %v1226 = vpop.f32.mrf.mxu0
        %v1227 = vadd.f32 0.0, %v1226
        %v1228 = vpop.f32.mrf.mxu0
        %1229 = vmatprep.mubr.bf16.mxu0 0
        %1230 = vmatmul.mubr.bf16.gmra.mxu0 %v1127
        %v1231 = vpop.f32.mrf.mxu0
        %v1232 = vadd.f32 0.0, %v1231
        %v1233 = vpop.f32.mrf.mxu0
        %v1234 = vpop.f32.mrf.mxu0
        %v1235 = vadd.f32 0.0, %v1234
        %v1236 = vpop.f32.mrf.mxu0
        %1237 = vmatprep.mubr.bf16.mxu0 0
        %1238 = vmatmul.mubr.bf16.gmra.mxu0 %v1128
        %v1239 = vpop.f32.mrf.mxu0
        %v1240 = vadd.f32 0.0, %v1239
        %v1241 = vpop.f32.mrf.mxu0
        %v1242 = vpop.f32.mrf.mxu0
        %v1243 = vadd.f32 0.0, %v1242
        %v1244 = vpop.f32.mrf.mxu0
        %1245 = vmatprep.mubr.bf16.mxu0 0
        %1246 = vmatmul.mubr.bf16.gmra.mxu0 %v1129
        %v1247 = vpop.f32.mrf.mxu0
        %v1248 = vadd.f32 0.0, %v1247
        %v1249 = vpop.f32.mrf.mxu0
        %v1250 = vpop.f32.mrf.mxu0
        %v1251 = vadd.f32 0.0, %v1250
        %v1252 = vpop.f32.mrf.mxu0
        %1253 = vmatprep.mubr.bf16.mxu0 0
        %1254 = vmatmul.mubr.bf16.gmra.mxu0 %v1130
        %v1255 = vpop.f32.mrf.mxu0
        %v1256 = vadd.f32 0.0, %v1255
        %v1257 = vpop.f32.mrf.mxu0
        %v1258 = vpop.f32.mrf.mxu0
        %v1259 = vadd.f32 0.0, %v1258
        %v1260 = vpop.f32.mrf.mxu0
        %1261 = vmatprep.mubr.bf16.mxu0 0
        %1262 = vmatmul.mubr.bf16.gmra.mxu0 %v1131
        %v1263 = vpop.f32.mrf.mxu0
        %v1264 = vadd.f32 0.0, %v1263
        %v1265 = vpop.f32.mrf.mxu0
        %v1266 = vpop.f32.mrf.mxu0
        %v1267 = vadd.f32 0.0, %v1266
        %v1268 = vpop.f32.mrf.mxu0
        %1269 = vmatprep.mubr.bf16.mxu0 0
        %1270 = vmatmul.mubr.bf16.gmra.mxu0 %v1132
        %v1271 = vpop.f32.mrf.mxu0
        %v1272 = vadd.f32 0.0, %v1271
        %v1273 = vpop.f32.mrf.mxu0
        %v1274 = vpop.f32.mrf.mxu0
        %v1275 = vadd.f32 0.0, %v1274
        %v1276 = vpop.f32.mrf.mxu0
        %1277 = vdwg.mxu0
        %v1278 = vadd.f32 %v1109, %v1216
        %v1279 = vadd.f32 %v1110, %v1219
        %v1280 = vadd.f32 %v1111, %v1224
        %v1281 = vadd.f32 %v1112, %v1227
        %v1282 = vadd.f32 %v1113, %v1232
        %v1283 = vadd.f32 %v1114, %v1235
        %v1284 = vadd.f32 %v1115, %v1240
        %v1285 = vadd.f32 %v1116, %v1243
        %v1286 = vadd.f32 %v1117, %v1248
        %v1287 = vadd.f32 %v1118, %v1251
        %v1288 = vadd.f32 %v1119, %v1256
        %v1289 = vadd.f32 %v1120, %v1259
        %v1290 = vadd.f32 %v1121, %v1264
        %v1291 = vadd.f32 %v1122, %v1267
        %v1292 = vadd.f32 %v1123, %v1272
        %v1293 = vadd.f32 %v1124, %v1275
        %1294 = vst [vmem:[#allocation4] sm:$0xff] %v1278
        %1295 = vst [vmem:[#allocation4 + $0x8] sm:$0xff] %v1279
        %1296 = vst [vmem:[#allocation4 + $0x10] sm:$0xff] %v1280
        %1297 = vst [vmem:[#allocation4 + $0x18] sm:$0xff] %v1281
        %1298 = vst [vmem:[#allocation4 + $0x20] sm:$0xff] %v1282
        %1299 = vst [vmem:[#allocation4 + $0x28] sm:$0xff] %v1283
        %1300 = vst [vmem:[#allocation4 + $0x30] sm:$0xff] %v1284
        %1301 = vst [vmem:[#allocation4 + $0x38] sm:$0xff] %v1285
        %1302 = vst [vmem:[#allocation4 + $0x40] sm:$0xff] %v1286
        %1303 = vst [vmem:[#allocation4 + $0x48] sm:$0xff] %v1287
        %1304 = vst [vmem:[#allocation4 + $0x50] sm:$0xff] %v1288
        %1305 = vst [vmem:[#allocation4 + $0x58] sm:$0xff] %v1289
        %1306 = vst [vmem:[#allocation4 + $0x60] sm:$0xff] %v1290
        %1307 = vst [vmem:[#allocation4 + $0x68] sm:$0xff] %v1291
        %1308 = vst [vmem:[#allocation4 + $0x70] sm:$0xff] %v1292
        %1309 = vst [vmem:[#allocation4 + $0x78] sm:$0xff] %v1293
        %1310 = vst.msk [vmem:[#allocation2] sm:$0xff] %vm996, %v724
        %1311 = vst.msk [vmem:[#allocation2 + $0x8] sm:$0xff] %vm996, %v725
        %1312 = vst.msk [vmem:[#allocation2 + $0x10] sm:$0xff] %vm996, %v726
        %1313 = vst.msk [vmem:[#allocation2 + $0x18] sm:$0xff] %vm996, %v727
        %1314 = vst.msk [vmem:[#allocation2 + $0x20] sm:$0xff] %vm996, %v728
        %1315 = vst.msk [vmem:[#allocation2 + $0x28] sm:$0xff] %vm996, %v729
        %1316 = vst.msk [vmem:[#allocation2 + $0x30] sm:$0xff] %vm996, %v730
        %1317 = vst.msk [vmem:[#allocation2 + $0x38] sm:$0xff] %vm996, %v731
        %1318 = vst.msk [vmem:[#allocation2 + $0x40] sm:$0xff] %vm996, %v732
        %1319 = vst.msk [vmem:[#allocation2 + $0x48] sm:$0xff] %vm996, %v733
        %1320 = vst.msk [vmem:[#allocation2 + $0x50] sm:$0xff] %vm996, %v734
        %1321 = vst.msk [vmem:[#allocation2 + $0x58] sm:$0xff] %vm996, %v735
        %1322 = vst.msk [vmem:[#allocation2 + $0x60] sm:$0xff] %vm996, %v736
        %1323 = vst.msk [vmem:[#allocation2 + $0x68] sm:$0xff] %vm996, %v737
        %1324 = vst.msk [vmem:[#allocation2 + $0x70] sm:$0xff] %vm996, %v738
        %1325 = vst.msk [vmem:[#allocation2 + $0x78] sm:$0xff] %vm996, %v739
      $region40: #{adaptive_attention_forward.8} parent=31 // pred_fallthru
        _
      %p1326 = scmp.eq.s32.totalorder %s21, 1
      // Predicated region
      $region41: #{adaptive_attention_forward.8} parent=31 // pred_check
        %p1327 = pneg %p1326
      $region42: #{adaptive_attention_forward.8} parent=31 // pred_check_branch
        %1329 = sbr.rel (%p1327) target = $region44
      $region43: #{adaptive_attention_forward.8} parent=31 // pred_region
        %v1330 = vld [vmem:[#allocation3] sm:$0xff]
        %v1331 = vld [vmem:[#allocation3 + $0x8] sm:$0xff]
        %v1332 = vld [vmem:[#allocation3 + $0x10] sm:$0xff]
        %v1333 = vld [vmem:[#allocation3 + $0x18] sm:$0xff]
        %v1334 = vld [vmem:[#allocation3 + $0x20] sm:$0xff]
        %v1335 = vld [vmem:[#allocation3 + $0x28] sm:$0xff]
        %v1336 = vld [vmem:[#allocation3 + $0x30] sm:$0xff]
        %v1337 = vld [vmem:[#allocation3 + $0x38] sm:$0xff]
        %v1338 = vld [vmem:[#allocation3 + $0x40] sm:$0xff]
        %v1339 = vld [vmem:[#allocation3 + $0x48] sm:$0xff]
        %v1340 = vld [vmem:[#allocation3 + $0x50] sm:$0xff]
        %v1341 = vld [vmem:[#allocation3 + $0x58] sm:$0xff]
        %v1342 = vld [vmem:[#allocation3 + $0x60] sm:$0xff]
        %v1343 = vld [vmem:[#allocation3 + $0x68] sm:$0xff]
        %v1344 = vld [vmem:[#allocation3 + $0x70] sm:$0xff]
        %v1345 = vld [vmem:[#allocation3 + $0x78] sm:$0xff]
        %v1346 = vrcp.pop %v1330
        %v1347 = vrcp.pop %v1331
        %v1348 = vrcp.pop %v1332
        %v1349 = vrcp.pop %v1333
        %v1350 = vrcp.pop %v1334
        %v1351 = vrcp.pop %v1335
        %v1352 = vrcp.pop %v1336
        %v1353 = vrcp.pop %v1337
        %v1354 = vrcp.pop %v1338
        %v1355 = vrcp.pop %v1339
        %v1356 = vrcp.pop %v1340
        %v1357 = vrcp.pop %v1341
        %v1358 = vrcp.pop %v1342
        %v1359 = vrcp.pop %v1343
        %v1360 = vrcp.pop %v1344
        %v1361 = vrcp.pop %v1345
        %v1362 = vld [vmem:[#allocation4] sm:$0xff]
        %v1363 = vld [vmem:[#allocation4 + $0x8] sm:$0xff]
        %v1364 = vld [vmem:[#allocation4 + $0x10] sm:$0xff]
        %v1365 = vld [vmem:[#allocation4 + $0x18] sm:$0xff]
        %v1366 = vld [vmem:[#allocation4 + $0x20] sm:$0xff]
        %v1367 = vld [vmem:[#allocation4 + $0x28] sm:$0xff]
        %v1368 = vld [vmem:[#allocation4 + $0x30] sm:$0xff]
        %v1369 = vld [vmem:[#allocation4 + $0x38] sm:$0xff]
        %v1370 = vld [vmem:[#allocation4 + $0x40] sm:$0xff]
        %v1371 = vld [vmem:[#allocation4 + $0x48] sm:$0xff]
        %v1372 = vld [vmem:[#allocation4 + $0x50] sm:$0xff]
        %v1373 = vld [vmem:[#allocation4 + $0x58] sm:$0xff]
        %v1374 = vld [vmem:[#allocation4 + $0x60] sm:$0xff]
        %v1375 = vld [vmem:[#allocation4 + $0x68] sm:$0xff]
        %v1376 = vld [vmem:[#allocation4 + $0x70] sm:$0xff]
        %v1377 = vld [vmem:[#allocation4 + $0x78] sm:$0xff]
        %1379 = vset.pattern.permute.xlu0 0
        %1380 = vperm.xlu0 %1379, %v1346
        %v1381 = vpop.permute.xlu0 %1380
        %1384 = vset.pattern.permute.xlu0 0
        %1385 = vperm.xlu0 %1384, %v1347
        %v1386 = vpop.permute.xlu0 %1385
        %1389 = vset.pattern.permute.xlu0 0
        %1390 = vperm.xlu0 %1389, %v1348
        %v1391 = vpop.permute.xlu0 %1390
        %1394 = vset.pattern.permute.xlu0 0
        %1395 = vperm.xlu0 %1394, %v1349
        %v1396 = vpop.permute.xlu0 %1395
        %1399 = vset.pattern.permute.xlu0 0
        %1400 = vperm.xlu0 %1399, %v1350
        %v1401 = vpop.permute.xlu0 %1400
        %1404 = vset.pattern.permute.xlu0 0
        %1405 = vperm.xlu0 %1404, %v1351
        %v1406 = vpop.permute.xlu0 %1405
        %1409 = vset.pattern.permute.xlu0 0
        %1410 = vperm.xlu0 %1409, %v1352
        %v1411 = vpop.permute.xlu0 %1410
        %1414 = vset.pattern.permute.xlu0 0
        %1415 = vperm.xlu0 %1414, %v1353
        %v1416 = vpop.permute.xlu0 %1415
        %1419 = vset.pattern.permute.xlu0 0
        %1420 = vperm.xlu0 %1419, %v1354
        %v1421 = vpop.permute.xlu0 %1420
        %1424 = vset.pattern.permute.xlu0 0
        %1425 = vperm.xlu0 %1424, %v1355
        %v1426 = vpop.permute.xlu0 %1425
        %1429 = vset.pattern.permute.xlu0 0
        %1430 = vperm.xlu0 %1429, %v1356
        %v1431 = vpop.permute.xlu0 %1430
        %1434 = vset.pattern.permute.xlu0 0
        %1435 = vperm.xlu0 %1434, %v1357
        %v1436 = vpop.permute.xlu0 %1435
        %1439 = vset.pattern.permute.xlu0 0
        %1440 = vperm.xlu0 %1439, %v1358
        %v1441 = vpop.permute.xlu0 %1440
        %1444 = vset.pattern.permute.xlu0 0
        %1445 = vperm.xlu0 %1444, %v1359
        %v1446 = vpop.permute.xlu0 %1445
        %1449 = vset.pattern.permute.xlu0 0
        %1450 = vperm.xlu0 %1449, %v1360
        %v1451 = vpop.permute.xlu0 %1450
        %1454 = vset.pattern.permute.xlu0 0
        %1455 = vperm.xlu0 %1454, %v1361
        %v1456 = vpop.permute.xlu0 %1455
        %v1458 = vmul.f32 %v1362, %v1381
        %v1459 = vmul.f32 %v1363, %v1386
        %v1460 = vmul.f32 %v1364, %v1391
        %v1461 = vmul.f32 %v1365, %v1396
        %v1462 = vmul.f32 %v1366, %v1401
        %v1463 = vmul.f32 %v1367, %v1406
        %v1464 = vmul.f32 %v1368, %v1411
        %v1465 = vmul.f32 %v1369, %v1416
        %v1466 = vmul.f32 %v1370, %v1421
        %v1467 = vmul.f32 %v1371, %v1426
        %v1468 = vmul.f32 %v1372, %v1431
        %v1469 = vmul.f32 %v1373, %v1436
        %v1470 = vmul.f32 %v1374, %v1441
        %v1471 = vmul.f32 %v1375, %v1446
        %v1472 = vmul.f32 %v1376, %v1451
        %v1473 = vmul.f32 %v1377, %v1456
        %v1474 = vpack.c.bf16 %v1459, %v1458
        %v1475 = vpack.c.bf16 %v1461, %v1460
        %v1476 = vpack.c.bf16 %v1463, %v1462
        %v1477 = vpack.c.bf16 %v1465, %v1464
        %v1478 = vpack.c.bf16 %v1467, %v1466
        %v1479 = vpack.c.bf16 %v1469, %v1468
        %v1480 = vpack.c.bf16 %v1471, %v1470
        %v1481 = vpack.c.bf16 %v1473, %v1472
        %v1490 = vunpack.c.l.b16 %v1474
        %v1491 = vunpack.c.h.b16 %v1474
        %v1492 = vunpack.c.l.b16 %v1475
        %v1493 = vunpack.c.h.b16 %v1475
        %v1494 = vunpack.c.l.b16 %v1476
        %v1495 = vunpack.c.h.b16 %v1476
        %v1496 = vunpack.c.l.b16 %v1477
        %v1497 = vunpack.c.h.b16 %v1477
        %v1498 = vunpack.c.l.b16 %v1478
        %v1499 = vunpack.c.h.b16 %v1478
        %v1500 = vunpack.c.l.b16 %v1479
        %v1501 = vunpack.c.h.b16 %v1479
        %v1502 = vunpack.c.l.b16 %v1480
        %v1503 = vunpack.c.h.b16 %v1480
        %v1504 = vunpack.c.l.b16 %v1481
        %v1505 = vunpack.c.h.b16 %v1481
        %v1506 = vpack.c.b16 %v1490, %v1490
        %v1507 = vpack.c.b16 %v1491, %v1491
        %v1508 = vpack.c.b16 %v1492, %v1492
        %v1509 = vpack.c.b16 %v1493, %v1493
        %v1510 = vpack.c.b16 %v1494, %v1494
        %v1511 = vpack.c.b16 %v1495, %v1495
        %v1512 = vpack.c.b16 %v1496, %v1496
        %v1513 = vpack.c.b16 %v1497, %v1497
        %v1514 = vpack.c.b16 %v1498, %v1498
        %v1515 = vpack.c.b16 %v1499, %v1499
        %v1516 = vpack.c.b16 %v1500, %v1500
        %v1517 = vpack.c.b16 %v1501, %v1501
        %v1518 = vpack.c.b16 %v1502, %v1502
        %v1519 = vpack.c.b16 %v1503, %v1503
        %v1520 = vpack.c.b16 %v1504, %v1504
        %v1521 = vpack.c.b16 %v1505, %v1505
        %1538 = vst [vmem:[%s287] sm:$0xf] %v1506
        %1539 = vst [vmem:[%s287 + $0x4] sm:$0xf] %v1507
        %1540 = vst [vmem:[%s287 + $0x8] sm:$0xf] %v1508
        %1541 = vst [vmem:[%s287 + $0xc] sm:$0xf] %v1509
        %1542 = vst [vmem:[%s287 + $0x10] sm:$0xf] %v1510
        %1543 = vst [vmem:[%s287 + $0x14] sm:$0xf] %v1511
        %1544 = vst [vmem:[%s287 + $0x18] sm:$0xf] %v1512
        %1545 = vst [vmem:[%s287 + $0x1c] sm:$0xf] %v1513
        %1546 = vst [vmem:[%s287 + $0x20] sm:$0xf] %v1514
        %1547 = vst [vmem:[%s287 + $0x24] sm:$0xf] %v1515
        %1548 = vst [vmem:[%s287 + $0x28] sm:$0xf] %v1516
        %1549 = vst [vmem:[%s287 + $0x2c] sm:$0xf] %v1517
        %1550 = vst [vmem:[%s287 + $0x30] sm:$0xf] %v1518
        %1551 = vst [vmem:[%s287 + $0x34] sm:$0xf] %v1519
        %1552 = vst [vmem:[%s287 + $0x38] sm:$0xf] %v1520
        %1553 = vst [vmem:[%s287 + $0x3c] sm:$0xf] %v1521
      $region44: #{adaptive_attention_forward.8} parent=31 // pred_fallthru
        _
      %s1554 = smul.u32 16, %s20
      %p1555 = scmp.lt.s32.totalorder %s19, 7
      %s1556 = scalar_select %p1555, %s19, 7
      %p1557 = scmp.lt.s32.totalorder %s1554, 31
      %s1558 = scalar_select %p1557, %s1554, 31
      %s1559 = smul.addr %s1556, 32
      %s1560 = sadd.s32 %s1558, %s1559
      %s1561 = smul.addr %s1560, 4
      %s1562 = scalar_lea.vmem %s3, %s1561
      // Predicated region
      $region45: #{adaptive_attention_forward.8} parent=31 // pred_check
        %p1563 = pneg %p137
      $region46: #{adaptive_attention_forward.8} parent=31 // pred_check_branch
        %1565 = sbr.rel (%p1563) target = $region48
      $region47: #{adaptive_attention_forward.8} parent=31 // pred_region
        %s1566 = smul.u32 16, %s20
      $region48: #{adaptive_attention_forward.8} parent=31 // pred_fallthru
        _
    $region32: #{adaptive_attention_forward.8} parent=5 // pred_fallthru
      _
    %p1567 = scmp.le.s32.totalorder 2, %s9
    // Predicated region
    $region49: #{adaptive_attention_forward.8} parent=5 // pred_check
      %p1568 = pneg %p1567
    $region50: #{adaptive_attention_forward.8} parent=5 // pred_check_branch
      %1570 = sbr.rel (%p1568) target = $region52
    $region51: #{adaptive_attention_forward.8} parent=5 // pred_region
      %s1571 = ssub.s32 %s9, 2
      // Predicated region
      $region53: #{adaptive_attention_forward.8} parent=51 // pred_check
        %p1572 = pneg %p143
      $region54: #{adaptive_attention_forward.8} parent=51 // pred_check_branch
        %1574 = sbr.rel (%p1572) target = $region56
      $region55: #{adaptive_attention_forward.8} parent=51 // pred_region
        %s1575 = smul.u32 16, %s23
        %p1576 = scmp.lt.s32.totalorder %s22, 7
        %s1577 = scalar_select %p1576, %s22, 7
        %p1578 = scmp.lt.s32.totalorder %s1575, 31
        %s1579 = scalar_select %p1578, %s1575, 31
        %s1580 = smul.addr %s1577, 32
        %s1581 = sadd.s32 %s1579, %s1580
        %s1582 = smul.addr %s1581, 4
        %s1583 = scalar_lea.vmem %s3, %s1582
      $region56: #{adaptive_attention_forward.8} parent=51 // pred_fallthru
        _
    $region52: #{adaptive_attention_forward.8} parent=5 // pred_fallthru
      _
  $region6: #{adaptive_attention_forward.8} parent=0 // loop_footer
    %s13 = sadd.s32 1, %s9
  $region7: #{adaptive_attention_forward.8} parent=0 // loop_footer_branch
    %8 = sbr.rel target = $region3
  $region8: #{adaptive_attention_forward.8} parent=0 // loop_exit
    _

// kernel: adaptive_attention_forward.9
$region0: #{adaptive_attention_forward.9}
  #allocation0 [shape = 'u32[]', space=smem, size = 0x4, offset = 0x4, fixed_abs, tag = 'smem constant byte address 0x4 - core index']
  #allocation1 [shape = 'u32[144,128]{1,0:T(1,128)}', space=vmem, size = 0x12000, scoped, tag = 'internal scratch']
  %s0 = inlined_call_operand.vmem [shape: bf16[512,512], index: 0, kind: input, shape index: {}]
  %s1 = inlined_call_operand.vmem [shape: bf16[512,512], index: 1, kind: input, shape index: {}]
  %s2 = inlined_call_operand.hbm [shape: bf16[512,512], index: 2, kind: output, shape index: {}]
  %s3 = sld [smem:[#allocation0]]
  $region82: #{adaptive_attention_forward.9} parent=0
    _
  %s5 = ssub.s32 1, %s3
  %s6 = scalar_select 0, %s5, %s3
  $region1: #{adaptive_attention_forward.9} parent=0
    #allocation2 [shape = 'u8[262144]{0}', space=vmem, size = 0x40000, scoped, tag = 'input window, operand 1']
    #allocation3 [shape = 'u8[65536]{0}', space=vmem, size = 0x10000, scoped, tag = 'output window, operand 0']
    #allocation4 [shape = 's32[2]{0}', space=sflag, size = 0x8, scoped, tag = 'scoped memory for adaptive_attention_forward.9']
    %7 = vsyncpa [#allocation4], 0
    %s8 = scalar_lea.sflag [#allocation4], 1
    %9 = vsyncpa %s8, 0
    loop: start=0, step=1, limit=18
    $region2: #{adaptive_attention_forward.9} parent=1 // loop_pre_header
      _
    $region3: #{adaptive_attention_forward.9} parent=1 // loop_header
      %s11 = sphi 0, %s15
      %p12 = scmp.ge.s32.totalorder %s11, 18
      %s18 = sphi 0, %s30
      %s19 = sphi 0, %s26
      %s20 = sphi 0, %s18
      %s21 = sphi 0, %s19
      %s22 = sphi 0, %s20
      %s23 = sphi 0, %s21
      %s33 = sphi 0, %s35
      %s36 = sphi 0, %s33
      %s37 = sphi 0, %s36
      %s53 = sphi 0, %s37
      %s59 = sphi 0, %s61
      %s62 = sphi 0, %s59
      %s63 = sphi 0, %s62
      %s79 = sphi 0, %s63
      %s87 = sphi 0, %s89
      %s90 = sphi 0, %s87
      %s91 = sphi 0, %s90
      %s107 = sphi 0, %s91
    $region4: #{adaptive_attention_forward.9} parent=1 // loop_header_branch
      %14 = sbr.rel (%p12) target = $region8
    $region5: #{adaptive_attention_forward.9} parent=1 // loop_body
      %s16 = ssub.s32 %s11, 1
      %s17 = ssub.s32 %s11, 2
      %s24 = sadd.s32 1, %s19
      %p25 = scmp.ge.s32.totalorder %s24, 4
      %s26 = scalar_select %p25, 0, %s24
      %s27 = sadd.s32 1, %s18
      %s28 = scalar_select %p25, %s27, %s18
      %p29 = scmp.ge.s32.totalorder %s28, 4
      %s30 = scalar_select %p29, 0, %s28
      %s31 = ssub.s32 %s18, %s30
      %p32 = scmp.eq.s32.totalorder %s31, 0
      %s34 = sadd.s32 %s33, 1
      %s35 = scalar_select %p32, %s33, %s34
      %p38 = pneg %p32
      %p39 = scmp.eq.s32.totalorder %s11, 15
      %p40 = por %p38, %p39
      %p41 = scmp.ne.s32.totalorder %s33, %s36
      %p42 = scmp.eq.s32.totalorder %s11, 0
      %p43 = por %p41, %p42
      %p44 = scmp.ne.s32.totalorder %s33, %s36
      %p45 = scmp.eq.s32.totalorder %s16, 15
      %p46 = por %p44, %p45
      %p47 = scmp.ne.s32.totalorder %s36, %s37
      %p48 = scmp.eq.s32.totalorder %s16, 0
      %p49 = por %p47, %p48
      %p50 = scmp.ne.s32.totalorder %s36, %s37
      %p51 = scmp.eq.s32.totalorder %s17, 15
      %p52 = por %p50, %p51
      %p54 = scmp.ne.s32.totalorder %s37, %s53
      %p55 = scmp.eq.s32.totalorder %s17, 0
      %p56 = por %p54, %p55
      %s57 = ssub.s32 %s19, %s26
      %p58 = scmp.eq.s32.totalorder %s57, 0
      %s60 = sadd.s32 %s59, 1
      %s61 = scalar_select %p58, %s59, %s60
      %p64 = pneg %p58
      %p65 = scmp.eq.s32.totalorder %s11, 15
      %p66 = por %p64, %p65
      %p67 = scmp.ne.s32.totalorder %s59, %s62
      %p68 = scmp.eq.s32.totalorder %s11, 0
      %p69 = por %p67, %p68
      %p70 = scmp.ne.s32.totalorder %s59, %s62
      %p71 = scmp.eq.s32.totalorder %s16, 15
      %p72 = por %p70, %p71
      %p73 = scmp.ne.s32.totalorder %s62, %s63
      %p74 = scmp.eq.s32.totalorder %s16, 0
      %p75 = por %p73, %p74
      %p76 = scmp.ne.s32.totalorder %s62, %s63
      %p77 = scmp.eq.s32.totalorder %s17, 15
      %p78 = por %p76, %p77
      %p80 = scmp.ne.s32.totalorder %s63, %s79
      %p81 = scmp.eq.s32.totalorder %s17, 0
      %p82 = por %p80, %p81
      %s83 = ssub.s32 %s18, %s30
      %s84 = ssub.s32 %s19, %s26
      %s85 = sor.u32 %s83, %s84
      %p86 = scmp.eq.s32.totalorder %s85, 0
      %s88 = sadd.s32 %s87, 1
      %s89 = scalar_select %p86, %s87, %s88
      %p92 = pneg %p86
      %p93 = scmp.eq.s32.totalorder %s11, 15
      %p94 = por %p92, %p93
      %p95 = scmp.ne.s32.totalorder %s87, %s90
      %p96 = scmp.eq.s32.totalorder %s11, 0
      %p97 = por %p95, %p96
      %p98 = scmp.ne.s32.totalorder %s87, %s90
      %p99 = scmp.eq.s32.totalorder %s16, 15
      %p100 = por %p98, %p99
      %p101 = scmp.ne.s32.totalorder %s90, %s91
      %p102 = scmp.eq.s32.totalorder %s16, 0
      %p103 = por %p101, %p102
      %p104 = scmp.ne.s32.totalorder %s90, %s91
      %p105 = scmp.eq.s32.totalorder %s17, 15
      %p106 = por %p104, %p105
      %p108 = scmp.ne.s32.totalorder %s91, %s107
      %p109 = scmp.eq.s32.totalorder %s17, 0
      %p110 = por %p108, %p109
      %p111 = scmp.le.s32.totalorder 1, %s11
      %p112 = scmp.lt.s32.totalorder %s11, 17
      %p113 = pnand %p111, %p112
      %p114 = pneg %p113
      // Predicated region
      $region9: #{adaptive_attention_forward.9} parent=5 // pred_check
        _
      $region10: #{adaptive_attention_forward.9} parent=5 // pred_check_branch
        %116 = sbr.rel (%p113) target = $region12
      $region11: #{adaptive_attention_forward.9} parent=5 // pred_region
        %s117 = ssub.s32 %s11, 1
      $region12: #{adaptive_attention_forward.9} parent=5 // pred_fallthru
        _
      %p118 = scmp.lt.s32.totalorder %s11, 16
      // Predicated region
      $region13: #{adaptive_attention_forward.9} parent=5 // pred_check
        %p119 = pneg %p118
      $region14: #{adaptive_attention_forward.9} parent=5 // pred_check_branch
        %121 = sbr.rel (%p119) target = $region16
      $region15: #{adaptive_attention_forward.9} parent=5 // pred_region
        // Predicated region
        $region17: #{adaptive_attention_forward.9} parent=15 // pred_check
          %p122 = pneg %p43
        $region18: #{adaptive_attention_forward.9} parent=15 // pred_check_branch
          %124 = sbr.rel (%p122) target = $region20
        $region19: #{adaptive_attention_forward.9} parent=15 // pred_region
          %s125 = smul.u32 16, %s18
          %p126 = scmp.lt.s32.totalorder %s125, 63
          %s127 = scalar_select %p126, %s125, 63
          %s128 = smul.addr %s127, 4
          %s129 = smul.addr %s128, 4
          %s130 = scalar_lea.vmem %s0, %s129
          %s131 = smul.u32 16, %s18
        $region20: #{adaptive_attention_forward.9} parent=15 // pred_fallthru
          _
        // Predicated region
        $region21: #{adaptive_attention_forward.9} parent=15 // pred_check
          %p132 = pneg %p69
        $region22: #{adaptive_attention_forward.9} parent=15 // pred_check_branch
          %134 = sbr.rel (%p132) target = $region24
        $region23: #{adaptive_attention_forward.9} parent=15 // pred_region
          %s135 = sand.u32 %s59, 1
          %s136 = sand.u32 %s59, 1
          %s137 = smul.addr %s136, 256
          %s138 = scalar_lea.vmem [#allocation2], %s137
          %s139 = smul.addr %s19, 4
          %s140 = scalar_lea.vmem %s1, %s139
          // Predicated region
          $region25: #{adaptive_attention_forward.9} parent=23 // pred_check
            _
          $region26: #{adaptive_attention_forward.9} parent=23 // pred_check_branch
            %142 = sbr.rel (0) target = $region28
          $region27: #{adaptive_attention_forward.9} parent=23 // pred_region
            // Predicated region
            $region29: #{adaptive_attention_forward.9} parent=27 // pred_check
              _
            $region30: #{adaptive_attention_forward.9} parent=27 // pred_check_branch
              %144 = sbr.rel target = $region32
            $region31: #{adaptive_attention_forward.9} parent=27 // pred_region
              // Predicated region
              $region44: #{adaptive_attention_forward.9} parent=31 // pred_check
                _
              $region45: #{adaptive_attention_forward.9} parent=31 // pred_check_branch
                %286 = sbr.rel (0) target = $region47
              $region46: #{adaptive_attention_forward.9} parent=31 // pred_region
                loop: start=0, step=1, limit=1
                $region48: #{adaptive_attention_forward.9} parent=46 // loop_pre_header
                  _
                $region49: #{adaptive_attention_forward.9} parent=46 // loop_header
                  %s288 = sphi 0, %s292
                  %p289 = scmp.ge.s32.totalorder %s288, 1
                  %s293 = sphi %s140, %s140
                  %s294 = sphi %s138, %s138
                $region50: #{adaptive_attention_forward.9} parent=46 // loop_header_branch
                  %291 = sbr.rel (%p289) target = $region54
                $region51: #{adaptive_attention_forward.9} parent=46 // loop_body
                  _
                $region52: #{adaptive_attention_forward.9} parent=46 // loop_footer
                  %s292 = sadd.s32 1, %s288
                $region53: #{adaptive_attention_forward.9} parent=46 // loop_footer_branch
                  %287 = sbr.rel target = $region49
                $region54: #{adaptive_attention_forward.9} parent=46 // loop_exit
                  _
                %s296 = ssub.s32 16, 1
                loop: start=0, step=1, limit=1
                $region55: #{adaptive_attention_forward.9} parent=46 // loop_pre_header
                  _
                $region56: #{adaptive_attention_forward.9} parent=46 // loop_header
                  %s298 = sphi 0, %s302
                  %p299 = scmp.ge.s32.totalorder %s298, 1
                  %s303 = sphi %s140, %s140
                  %s304 = sphi %s138, %s138
                $region57: #{adaptive_attention_forward.9} parent=46 // loop_header_branch
                  %301 = sbr.rel (%p299) target = $region61
                $region58: #{adaptive_attention_forward.9} parent=46 // loop_body
                  %v305 = vld [vmem:[%s303] sm:%s296]
                  %306 = vst [vmem:[%s304] sm:%s296] %v305
                  %v307 = vld [vmem:[%s303 + $0x10] sm:%s296]
                  %308 = vst [vmem:[%s304 + $0x4] sm:%s296] %v307
                  %v309 = vld [vmem:[%s303 + $0x20] sm:%s296]
                  %310 = vst [vmem:[%s304 + $0x8] sm:%s296] %v309
                  %v311 = vld [vmem:[%s303 + $0x30] sm:%s296]
                  %312 = vst [vmem:[%s304 + $0xc] sm:%s296] %v311
                  %v313 = vld [vmem:[%s303 + $0x40] sm:%s296]
                  %314 = vst [vmem:[%s304 + $0x10] sm:%s296] %v313
                  %v315 = vld [vmem:[%s303 + $0x50] sm:%s296]
                  %316 = vst [vmem:[%s304 + $0x14] sm:%s296] %v315
                  %v317 = vld [vmem:[%s303 + $0x60] sm:%s296]
                  %318 = vst [vmem:[%s304 + $0x18] sm:%s296] %v317
                  %v319 = vld [vmem:[%s303 + $0x70] sm:%s296]
                  %320 = vst [vmem:[%s304 + $0x1c] sm:%s296] %v319
                  %v321 = vld [vmem:[%s303 + $0x80] sm:%s296]
                  %322 = vst [vmem:[%s304 + $0x20] sm:%s296] %v321
                  %v323 = vld [vmem:[%s303 + $0x90] sm:%s296]
                  %324 = vst [vmem:[%s304 + $0x24] sm:%s296] %v323
                  %v325 = vld [vmem:[%s303 + $0xa0] sm:%s296]
                  %326 = vst [vmem:[%s304 + $0x28] sm:%s296] %v325
                  %v327 = vld [vmem:[%s303 + $0xb0] sm:%s296]
                  %328 = vst [vmem:[%s304 + $0x2c] sm:%s296] %v327
                  %v329 = vld [vmem:[%s303 + $0xc0] sm:%s296]
                  %330 = vst [vmem:[%s304 + $0x30] sm:%s296] %v329
                  %v331 = vld [vmem:[%s303 + $0xd0] sm:%s296]
                  %332 = vst [vmem:[%s304 + $0x34] sm:%s296] %v331
                  %v333 = vld [vmem:[%s303 + $0xe0] sm:%s296]
                  %334 = vst [vmem:[%s304 + $0x38] sm:%s296] %v333
                  %v335 = vld [vmem:[%s303 + $0xf0] sm:%s296]
                  %336 = vst [vmem:[%s304 + $0x3c] sm:%s296] %v335
                  %v337 = vld [vmem:[%s303 + $0x100] sm:%s296]
                  %338 = vst [vmem:[%s304 + $0x40] sm:%s296] %v337
                  %v339 = vld [vmem:[%s303 + $0x110] sm:%s296]
                  %340 = vst [vmem:[%s304 + $0x44] sm:%s296] %v339
                  %v341 = vld [vmem:[%s303 + $0x120] sm:%s296]
                  %342 = vst [vmem:[%s304 + $0x48] sm:%s296] %v341
                  %v343 = vld [vmem:[%s303 + $0x130] sm:%s296]
                  %344 = vst [vmem:[%s304 + $0x4c] sm:%s296] %v343
                  %v345 = vld [vmem:[%s303 + $0x140] sm:%s296]
                  %346 = vst [vmem:[%s304 + $0x50] sm:%s296] %v345
                  %v347 = vld [vmem:[%s303 + $0x150] sm:%s296]
                  %348 = vst [vmem:[%s304 + $0x54] sm:%s296] %v347
                  %v349 = vld [vmem:[%s303 + $0x160] sm:%s296]
                  %350 = vst [vmem:[%s304 + $0x58] sm:%s296] %v349
                  %v351 = vld [vmem:[%s303 + $0x170] sm:%s296]
                  %352 = vst [vmem:[%s304 + $0x5c] sm:%s296] %v351
                  %v353 = vld [vmem:[%s303 + $0x180] sm:%s296]
                  %354 = vst [vmem:[%s304 + $0x60] sm:%s296] %v353
                  %v355 = vld [vmem:[%s303 + $0x190] sm:%s296]
                  %356 = vst [vmem:[%s304 + $0x64] sm:%s296] %v355
                  %v357 = vld [vmem:[%s303 + $0x1a0] sm:%s296]
                  %358 = vst [vmem:[%s304 + $0x68] sm:%s296] %v357
                  %v359 = vld [vmem:[%s303 + $0x1b0] sm:%s296]
                  %360 = vst [vmem:[%s304 + $0x6c] sm:%s296] %v359
                  %v361 = vld [vmem:[%s303 + $0x1c0] sm:%s296]
                  %362 = vst [vmem:[%s304 + $0x70] sm:%s296] %v361
                  %v363 = vld [vmem:[%s303 + $0x1d0] sm:%s296]
                  %364 = vst [vmem:[%s304 + $0x74] sm:%s296] %v363
                  %v365 = vld [vmem:[%s303 + $0x1e0] sm:%s296]
                  %366 = vst [vmem:[%s304 + $0x78] sm:%s296] %v365
                  %v367 = vld [vmem:[%s303 + $0x1f0] sm:%s296]
                  %368 = vst [vmem:[%s304 + $0x7c] sm:%s296] %v367
                  %v369 = vld [vmem:[%s303 + $0x200] sm:%s296]
                  %370 = vst [vmem:[%s304 + $0x80] sm:%s296] %v369
                  %v371 = vld [vmem:[%s303 + $0x210] sm:%s296]
                  %372 = vst [vmem:[%s304 + $0x84] sm:%s296] %v371
                  %v373 = vld [vmem:[%s303 + $0x220] sm:%s296]
                  %374 = vst [vmem:[%s304 + $0x88] sm:%s296] %v373
                  %v375 = vld [vmem:[%s303 + $0x230] sm:%s296]
                  %376 = vst [vmem:[%s304 + $0x8c] sm:%s296] %v375
                  %v377 = vld [vmem:[%s303 + $0x240] sm:%s296]
                  %378 = vst [vmem:[%s304 + $0x90] sm:%s296] %v377
                  %v379 = vld [vmem:[%s303 + $0x250] sm:%s296]
                  %380 = vst [vmem:[%s304 + $0x94] sm:%s296] %v379
                  %v381 = vld [vmem:[%s303 + $0x260] sm:%s296]
                  %382 = vst [vmem:[%s304 + $0x98] sm:%s296] %v381
                  %v383 = vld [vmem:[%s303 + $0x270] sm:%s296]
                  %384 = vst [vmem:[%s304 + $0x9c] sm:%s296] %v383
                  %v385 = vld [vmem:[%s303 + $0x280] sm:%s296]
                  %386 = vst [vmem:[%s304 + $0xa0] sm:%s296] %v385
                  %v387 = vld [vmem:[%s303 + $0x290] sm:%s296]
                  %388 = vst [vmem:[%s304 + $0xa4] sm:%s296] %v387
                  %v389 = vld [vmem:[%s303 + $0x2a0] sm:%s296]
                  %390 = vst [vmem:[%s304 + $0xa8] sm:%s296] %v389
                  %v391 = vld [vmem:[%s303 + $0x2b0] sm:%s296]
                  %392 = vst [vmem:[%s304 + $0xac] sm:%s296] %v391
                  %v393 = vld [vmem:[%s303 + $0x2c0] sm:%s296]
                  %394 = vst [vmem:[%s304 + $0xb0] sm:%s296] %v393
                  %v395 = vld [vmem:[%s303 + $0x2d0] sm:%s296]
                  %396 = vst [vmem:[%s304 + $0xb4] sm:%s296] %v395
                  %v397 = vld [vmem:[%s303 + $0x2e0] sm:%s296]
                  %398 = vst [vmem:[%s304 + $0xb8] sm:%s296] %v397
                  %v399 = vld [vmem:[%s303 + $0x2f0] sm:%s296]
                  %400 = vst [vmem:[%s304 + $0xbc] sm:%s296] %v399
                  %v401 = vld [vmem:[%s303 + $0x300] sm:%s296]
                  %402 = vst [vmem:[%s304 + $0xc0] sm:%s296] %v401
                  %v403 = vld [vmem:[%s303 + $0x310] sm:%s296]
                  %404 = vst [vmem:[%s304 + $0xc4] sm:%s296] %v403
                  %v405 = vld [vmem:[%s303 + $0x320] sm:%s296]
                  %406 = vst [vmem:[%s304 + $0xc8] sm:%s296] %v405
                  %v407 = vld [vmem:[%s303 + $0x330] sm:%s296]
                  %408 = vst [vmem:[%s304 + $0xcc] sm:%s296] %v407
                  %v409 = vld [vmem:[%s303 + $0x340] sm:%s296]
                  %410 = vst [vmem:[%s304 + $0xd0] sm:%s296] %v409
                  %v411 = vld [vmem:[%s303 + $0x350] sm:%s296]
                  %412 = vst [vmem:[%s304 + $0xd4] sm:%s296] %v411
                  %v413 = vld [vmem:[%s303 + $0x360] sm:%s296]
                  %414 = vst [vmem:[%s304 + $0xd8] sm:%s296] %v413
                  %v415 = vld [vmem:[%s303 + $0x370] sm:%s296]
                  %416 = vst [vmem:[%s304 + $0xdc] sm:%s296] %v415
                  %v417 = vld [vmem:[%s303 + $0x380] sm:%s296]
                  %418 = vst [vmem:[%s304 + $0xe0] sm:%s296] %v417
                  %v419 = vld [vmem:[%s303 + $0x390] sm:%s296]
                  %420 = vst [vmem:[%s304 + $0xe4] sm:%s296] %v419
                  %v421 = vld [vmem:[%s303 + $0x3a0] sm:%s296]
                  %422 = vst [vmem:[%s304 + $0xe8] sm:%s296] %v421
                  %v423 = vld [vmem:[%s303 + $0x3b0] sm:%s296]
                  %424 = vst [vmem:[%s304 + $0xec] sm:%s296] %v423
                  %v425 = vld [vmem:[%s303 + $0x3c0] sm:%s296]
                  %426 = vst [vmem:[%s304 + $0xf0] sm:%s296] %v425
                  %v427 = vld [vmem:[%s303 + $0x3d0] sm:%s296]
                  %428 = vst [vmem:[%s304 + $0xf4] sm:%s296] %v427
                  %v429 = vld [vmem:[%s303 + $0x3e0] sm:%s296]
                  %430 = vst [vmem:[%s304 + $0xf8] sm:%s296] %v429
                  %v431 = vld [vmem:[%s303 + $0x3f0] sm:%s296]
                  %432 = vst [vmem:[%s304 + $0xfc] sm:%s296] %v431
                $region59: #{adaptive_attention_forward.9} parent=46 // loop_footer
                  %s302 = sadd.s32 1, %s298
                $region60: #{adaptive_attention_forward.9} parent=46 // loop_footer_branch
                  %297 = sbr.rel target = $region56
                $region61: #{adaptive_attention_forward.9} parent=46 // loop_exit
                  _
              $region47: #{adaptive_attention_forward.9} parent=31 // pred_fallthru
                _
            $region32: #{adaptive_attention_forward.9} parent=27 // pred_fallthru
              _
            // Predicated region
            $region33: #{adaptive_attention_forward.9} parent=27 // pred_check
              _
            $region34: #{adaptive_attention_forward.9} parent=27 // pred_check_branch
              %146 = sbr.rel (0) target = $region36
            $region35: #{adaptive_attention_forward.9} parent=27 // pred_region
              %s148 = ssub.s32 16, 1
              loop: start=0, step=1, limit=1
              $region37: #{adaptive_attention_forward.9} parent=35 // loop_pre_header
                _
              $region38: #{adaptive_attention_forward.9} parent=35 // loop_header
                %s150 = sphi 0, %s154
                %p151 = scmp.ge.s32.totalorder %s150, 1
                %s155 = sphi %s140, %s140
                %s156 = sphi %s138, %s138
              $region39: #{adaptive_attention_forward.9} parent=35 // loop_header_branch
                %153 = sbr.rel (%p151) target = $region43
              $region40: #{adaptive_attention_forward.9} parent=35 // loop_body
                %v157 = vld [vmem:[%s155] sm:%s148]
                %158 = vst [vmem:[%s156] sm:%s148] %v157
                %v159 = vld [vmem:[%s155 + $0x10] sm:%s148]
                %160 = vst [vmem:[%s156 + $0x4] sm:%s148] %v159
                %v161 = vld [vmem:[%s155 + $0x20] sm:%s148]
                %162 = vst [vmem:[%s156 + $0x8] sm:%s148] %v161
                %v163 = vld [vmem:[%s155 + $0x30] sm:%s148]
                %164 = vst [vmem:[%s156 + $0xc] sm:%s148] %v163
                %v165 = vld [vmem:[%s155 + $0x40] sm:%s148]
                %166 = vst [vmem:[%s156 + $0x10] sm:%s148] %v165
                %v167 = vld [vmem:[%s155 + $0x50] sm:%s148]
                %168 = vst [vmem:[%s156 + $0x14] sm:%s148] %v167
                %v169 = vld [vmem:[%s155 + $0x60] sm:%s148]
                %170 = vst [vmem:[%s156 + $0x18] sm:%s148] %v169
                %v171 = vld [vmem:[%s155 + $0x70] sm:%s148]
                %172 = vst [vmem:[%s156 + $0x1c] sm:%s148] %v171
                %v173 = vld [vmem:[%s155 + $0x80] sm:%s148]
                %174 = vst [vmem:[%s156 + $0x20] sm:%s148] %v173
                %v175 = vld [vmem:[%s155 + $0x90] sm:%s148]
                %176 = vst [vmem:[%s156 + $0x24] sm:%s148] %v175
                %v177 = vld [vmem:[%s155 + $0xa0] sm:%s148]
                %178 = vst [vmem:[%s156 + $0x28] sm:%s148] %v177
                %v179 = vld [vmem:[%s155 + $0xb0] sm:%s148]
                %180 = vst [vmem:[%s156 + $0x2c] sm:%s148] %v179
                %v181 = vld [vmem:[%s155 + $0xc0] sm:%s148]
                %182 = vst [vmem:[%s156 + $0x30] sm:%s148] %v181
                %v183 = vld [vmem:[%s155 + $0xd0] sm:%s148]
                %184 = vst [vmem:[%s156 + $0x34] sm:%s148] %v183
                %v185 = vld [vmem:[%s155 + $0xe0] sm:%s148]
                %186 = vst [vmem:[%s156 + $0x38] sm:%s148] %v185
                %v187 = vld [vmem:[%s155 + $0xf0] sm:%s148]
                %188 = vst [vmem:[%s156 + $0x3c] sm:%s148] %v187
                %v189 = vld [vmem:[%s155 + $0x100] sm:%s148]
                %190 = vst [vmem:[%s156 + $0x40] sm:%s148] %v189
                %v191 = vld [vmem:[%s155 + $0x110] sm:%s148]
                %192 = vst [vmem:[%s156 + $0x44] sm:%s148] %v191
                %v193 = vld [vmem:[%s155 + $0x120] sm:%s148]
                %194 = vst [vmem:[%s156 + $0x48] sm:%s148] %v193
                %v195 = vld [vmem:[%s155 + $0x130] sm:%s148]
                %196 = vst [vmem:[%s156 + $0x4c] sm:%s148] %v195
                %v197 = vld [vmem:[%s155 + $0x140] sm:%s148]
                %198 = vst [vmem:[%s156 + $0x50] sm:%s148] %v197
                %v199 = vld [vmem:[%s155 + $0x150] sm:%s148]
                %200 = vst [vmem:[%s156 + $0x54] sm:%s148] %v199
                %v201 = vld [vmem:[%s155 + $0x160] sm:%s148]
                %202 = vst [vmem:[%s156 + $0x58] sm:%s148] %v201
                %v203 = vld [vmem:[%s155 + $0x170] sm:%s148]
                %204 = vst [vmem:[%s156 + $0x5c] sm:%s148] %v203
                %v205 = vld [vmem:[%s155 + $0x180] sm:%s148]
                %206 = vst [vmem:[%s156 + $0x60] sm:%s148] %v205
                %v207 = vld [vmem:[%s155 + $0x190] sm:%s148]
                %208 = vst [vmem:[%s156 + $0x64] sm:%s148] %v207
                %v209 = vld [vmem:[%s155 + $0x1a0] sm:%s148]
                %210 = vst [vmem:[%s156 + $0x68] sm:%s148] %v209
                %v211 = vld [vmem:[%s155 + $0x1b0] sm:%s148]
                %212 = vst [vmem:[%s156 + $0x6c] sm:%s148] %v211
                %v213 = vld [vmem:[%s155 + $0x1c0] sm:%s148]
                %214 = vst [vmem:[%s156 + $0x70] sm:%s148] %v213
                %v215 = vld [vmem:[%s155 + $0x1d0] sm:%s148]
                %216 = vst [vmem:[%s156 + $0x74] sm:%s148] %v215
                %v217 = vld [vmem:[%s155 + $0x1e0] sm:%s148]
                %218 = vst [vmem:[%s156 + $0x78] sm:%s148] %v217
                %v219 = vld [vmem:[%s155 + $0x1f0] sm:%s148]
                %220 = vst [vmem:[%s156 + $0x7c] sm:%s148] %v219
                %v221 = vld [vmem:[%s155 + $0x200] sm:%s148]
                %222 = vst [vmem:[%s156 + $0x80] sm:%s148] %v221
                %v223 = vld [vmem:[%s155 + $0x210] sm:%s148]
                %224 = vst [vmem:[%s156 + $0x84] sm:%s148] %v223
                %v225 = vld [vmem:[%s155 + $0x220] sm:%s148]
                %226 = vst [vmem:[%s156 + $0x88] sm:%s148] %v225
                %v227 = vld [vmem:[%s155 + $0x230] sm:%s148]
                %228 = vst [vmem:[%s156 + $0x8c] sm:%s148] %v227
                %v229 = vld [vmem:[%s155 + $0x240] sm:%s148]
                %230 = vst [vmem:[%s156 + $0x90] sm:%s148] %v229
                %v231 = vld [vmem:[%s155 + $0x250] sm:%s148]
                %232 = vst [vmem:[%s156 + $0x94] sm:%s148] %v231
                %v233 = vld [vmem:[%s155 + $0x260] sm:%s148]
                %234 = vst [vmem:[%s156 + $0x98] sm:%s148] %v233
                %v235 = vld [vmem:[%s155 + $0x270] sm:%s148]
                %236 = vst [vmem:[%s156 + $0x9c] sm:%s148] %v235
                %v237 = vld [vmem:[%s155 + $0x280] sm:%s148]
                %238 = vst [vmem:[%s156 + $0xa0] sm:%s148] %v237
                %v239 = vld [vmem:[%s155 + $0x290] sm:%s148]
                %240 = vst [vmem:[%s156 + $0xa4] sm:%s148] %v239
                %v241 = vld [vmem:[%s155 + $0x2a0] sm:%s148]
                %242 = vst [vmem:[%s156 + $0xa8] sm:%s148] %v241
                %v243 = vld [vmem:[%s155 + $0x2b0] sm:%s148]
                %244 = vst [vmem:[%s156 + $0xac] sm:%s148] %v243
                %v245 = vld [vmem:[%s155 + $0x2c0] sm:%s148]
                %246 = vst [vmem:[%s156 + $0xb0] sm:%s148] %v245
                %v247 = vld [vmem:[%s155 + $0x2d0] sm:%s148]
                %248 = vst [vmem:[%s156 + $0xb4] sm:%s148] %v247
                %v249 = vld [vmem:[%s155 + $0x2e0] sm:%s148]
                %250 = vst [vmem:[%s156 + $0xb8] sm:%s148] %v249
                %v251 = vld [vmem:[%s155 + $0x2f0] sm:%s148]
                %252 = vst [vmem:[%s156 + $0xbc] sm:%s148] %v251
                %v253 = vld [vmem:[%s155 + $0x300] sm:%s148]
                %254 = vst [vmem:[%s156 + $0xc0] sm:%s148] %v253
                %v255 = vld [vmem:[%s155 + $0x310] sm:%s148]
                %256 = vst [vmem:[%s156 + $0xc4] sm:%s148] %v255
                %v257 = vld [vmem:[%s155 + $0x320] sm:%s148]
                %258 = vst [vmem:[%s156 + $0xc8] sm:%s148] %v257
                %v259 = vld [vmem:[%s155 + $0x330] sm:%s148]
                %260 = vst [vmem:[%s156 + $0xcc] sm:%s148] %v259
                %v261 = vld [vmem:[%s155 + $0x340] sm:%s148]
                %262 = vst [vmem:[%s156 + $0xd0] sm:%s148] %v261
                %v263 = vld [vmem:[%s155 + $0x350] sm:%s148]
                %264 = vst [vmem:[%s156 + $0xd4] sm:%s148] %v263
                %v265 = vld [vmem:[%s155 + $0x360] sm:%s148]
                %266 = vst [vmem:[%s156 + $0xd8] sm:%s148] %v265
                %v267 = vld [vmem:[%s155 + $0x370] sm:%s148]
                %268 = vst [vmem:[%s156 + $0xdc] sm:%s148] %v267
                %v269 = vld [vmem:[%s155 + $0x380] sm:%s148]
                %270 = vst [vmem:[%s156 + $0xe0] sm:%s148] %v269
                %v271 = vld [vmem:[%s155 + $0x390] sm:%s148]
                %272 = vst [vmem:[%s156 + $0xe4] sm:%s148] %v271
                %v273 = vld [vmem:[%s155 + $0x3a0] sm:%s148]
                %274 = vst [vmem:[%s156 + $0xe8] sm:%s148] %v273
                %v275 = vld [vmem:[%s155 + $0x3b0] sm:%s148]
                %276 = vst [vmem:[%s156 + $0xec] sm:%s148] %v275
                %v277 = vld [vmem:[%s155 + $0x3c0] sm:%s148]
                %278 = vst [vmem:[%s156 + $0xf0] sm:%s148] %v277
                %v279 = vld [vmem:[%s155 + $0x3d0] sm:%s148]
                %280 = vst [vmem:[%s156 + $0xf4] sm:%s148] %v279
                %v281 = vld [vmem:[%s155 + $0x3e0] sm:%s148]
                %282 = vst [vmem:[%s156 + $0xf8] sm:%s148] %v281
                %v283 = vld [vmem:[%s155 + $0x3f0] sm:%s148]
                %284 = vst [vmem:[%s156 + $0xfc] sm:%s148] %v283
              $region41: #{adaptive_attention_forward.9} parent=35 // loop_footer
                %s154 = sadd.s32 1, %s150
              $region42: #{adaptive_attention_forward.9} parent=35 // loop_footer_branch
                %149 = sbr.rel target = $region38
              $region43: #{adaptive_attention_forward.9} parent=35 // loop_exit
                _
            $region36: #{adaptive_attention_forward.9} parent=27 // pred_fallthru
              _
          $region28: #{adaptive_attention_forward.9} parent=23 // pred_fallthru
            _
          %433 = vnop
        $region24: #{adaptive_attention_forward.9} parent=15 // pred_fallthru
          _
      $region16: #{adaptive_attention_forward.9} parent=5 // pred_fallthru
        _
      %p434 = scmp.le.s32.totalorder 1, %s11
      %p435 = scmp.lt.s32.totalorder %s11, 17
      %p436 = pnand %p434, %p435
      %p437 = pneg %p436
      // Predicated region
      $region62: #{adaptive_attention_forward.9} parent=5 // pred_check
        _
      $region63: #{adaptive_attention_forward.9} parent=5 // pred_check_branch
        %439 = sbr.rel (%p436) target = $region65
      $region64: #{adaptive_attention_forward.9} parent=5 // pred_region
        %s440 = ssub.s32 %s11, 1
        %s441 = sand.u32 %s62, 1
        %s442 = sand.u32 %s62, 1
        %s443 = smul.addr %s442, 256
        %s444 = scalar_lea.vmem [#allocation2], %s443
        // Predicated region
        $region66: #{adaptive_attention_forward.9} parent=64 // pred_check
          %p445 = pneg %p75
        $region67: #{adaptive_attention_forward.9} parent=64 // pred_check_branch
          %447 = sbr.rel (%p445) target = $region69
        $region68: #{adaptive_attention_forward.9} parent=64 // pred_region
          _
        $region69: #{adaptive_attention_forward.9} parent=64 // pred_fallthru
          _
        %s448 = smul.u32 16, %s20
        %p449 = scmp.lt.s32.totalorder %s448, 63
        %s450 = scalar_select %p449, %s448, 63
        %s451 = smul.addr %s450, 4
        %s452 = smul.addr %s451, 4
        %s453 = scalar_lea.vmem %s0, %s452
        %p454 = pneg %p49
        %p455 = pneg %p46
        %s456 = sand.u32 %s62, 1
        %s457 = sand.u32 %s62, 1
        %s458 = smul.addr %s457, 256
        %s459 = scalar_lea.vmem [#allocation2], %s458
        %p460 = pneg %p75
        %p461 = pneg %p72
        %p462 = pneg %p103
        %p463 = pneg %p100
        %s464 = sand.u32 %s90, 1
        %s465 = scalar_lea.sflag [#allocation4], %s464
        %s466 = sand.u32 %s90, 1
        %s467 = smul.addr %s466, 64
        %s468 = scalar_lea.vmem [#allocation3], %s467
        %s469 = smul.u32 16, %s20
        %p470 = scmp.lt.s32.totalorder %s469, 63
        %s471 = scalar_select %p470, %s469, 63
        %s472 = smul.addr %s471, 4
        %s473 = smul.addr %s472, 4
        %s474 = scalar_lea.vmem %s0, %s473
        %s475 = smul.u32 16, %s20
        %s476 = smul.u32 16, %s20
        %v478 = vld [vmem:[%s474] sm:$0xff]
        %v479 = vld [vmem:[%s474 + $0x8] sm:$0xff]
        %v480 = vld [vmem:[%s474 + $0x10] sm:$0xff]
        %v481 = vld [vmem:[%s474 + $0x18] sm:$0xff]
        %v482 = vld [vmem:[%s474 + $0x20] sm:$0xff]
        %v483 = vld [vmem:[%s474 + $0x28] sm:$0xff]
        %v484 = vld [vmem:[%s474 + $0x30] sm:$0xff]
        %v485 = vld [vmem:[%s474 + $0x38] sm:$0xff]
        %v486 = vld [vmem:[%s474 + $0x40] sm:$0xff]
        %v487 = vld [vmem:[%s474 + $0x48] sm:$0xff]
        %v488 = vld [vmem:[%s474 + $0x50] sm:$0xff]
        %v489 = vld [vmem:[%s474 + $0x58] sm:$0xff]
        %v490 = vld [vmem:[%s474 + $0x60] sm:$0xff]
        %v491 = vld [vmem:[%s474 + $0x68] sm:$0xff]
        %v492 = vld [vmem:[%s474 + $0x70] sm:$0xff]
        %v493 = vld [vmem:[%s474 + $0x78] sm:$0xff]
        %v494 = vld [vmem:[%s474 + $0x80] sm:$0xff]
        %v495 = vld [vmem:[%s474 + $0x88] sm:$0xff]
        %v496 = vld [vmem:[%s474 + $0x90] sm:$0xff]
        %v497 = vld [vmem:[%s474 + $0x98] sm:$0xff]
        %v498 = vld [vmem:[%s474 + $0xa0] sm:$0xff]
        %v499 = vld [vmem:[%s474 + $0xa8] sm:$0xff]
        %v500 = vld [vmem:[%s474 + $0xb0] sm:$0xff]
        %v501 = vld [vmem:[%s474 + $0xb8] sm:$0xff]
        %v502 = vld [vmem:[%s474 + $0xc0] sm:$0xff]
        %v503 = vld [vmem:[%s474 + $0xc8] sm:$0xff]
        %v504 = vld [vmem:[%s474 + $0xd0] sm:$0xff]
        %v505 = vld [vmem:[%s474 + $0xd8] sm:$0xff]
        %v506 = vld [vmem:[%s474 + $0xe0] sm:$0xff]
        %v507 = vld [vmem:[%s474 + $0xe8] sm:$0xff]
        %v508 = vld [vmem:[%s474 + $0xf0] sm:$0xff]
        %v509 = vld [vmem:[%s474 + $0xf8] sm:$0xff]
        %v510 = vld [vmem:[%s444] sm:$0xf]
        %v511 = vld [vmem:[%s444 + $0x4] sm:$0xf]
        %v512 = vld [vmem:[%s444 + $0x8] sm:$0xf]
        %v513 = vld [vmem:[%s444 + $0xc] sm:$0xf]
        %v514 = vld [vmem:[%s444 + $0x10] sm:$0xf]
        %v515 = vld [vmem:[%s444 + $0x14] sm:$0xf]
        %v516 = vld [vmem:[%s444 + $0x18] sm:$0xf]
        %v517 = vld [vmem:[%s444 + $0x1c] sm:$0xf]
        %v518 = vld [vmem:[%s444 + $0x20] sm:$0xf]
        %v519 = vld [vmem:[%s444 + $0x24] sm:$0xf]
        %v520 = vld [vmem:[%s444 + $0x28] sm:$0xf]
        %v521 = vld [vmem:[%s444 + $0x2c] sm:$0xf]
        %v522 = vld [vmem:[%s444 + $0x30] sm:$0xf]
        %v523 = vld [vmem:[%s444 + $0x34] sm:$0xf]
        %v524 = vld [vmem:[%s444 + $0x38] sm:$0xf]
        %v525 = vld [vmem:[%s444 + $0x3c] sm:$0xf]
        %v526 = vld [vmem:[%s444 + $0x40] sm:$0xf]
        %v527 = vld [vmem:[%s444 + $0x44] sm:$0xf]
        %v528 = vld [vmem:[%s444 + $0x48] sm:$0xf]
        %v529 = vld [vmem:[%s444 + $0x4c] sm:$0xf]
        %v530 = vld [vmem:[%s444 + $0x50] sm:$0xf]
        %v531 = vld [vmem:[%s444 + $0x54] sm:$0xf]
        %v532 = vld [vmem:[%s444 + $0x58] sm:$0xf]
        %v533 = vld [vmem:[%s444 + $0x5c] sm:$0xf]
        %v534 = vld [vmem:[%s444 + $0x60] sm:$0xf]
        %v535 = vld [vmem:[%s444 + $0x64] sm:$0xf]
        %v536 = vld [vmem:[%s444 + $0x68] sm:$0xf]
        %v537 = vld [vmem:[%s444 + $0x6c] sm:$0xf]
        %v538 = vld [vmem:[%s444 + $0x70] sm:$0xf]
        %v539 = vld [vmem:[%s444 + $0x74] sm:$0xf]
        %v540 = vld [vmem:[%s444 + $0x78] sm:$0xf]
        %v541 = vld [vmem:[%s444 + $0x7c] sm:$0xf]
        %v542 = vld [vmem:[%s444 + $0x80] sm:$0xf]
        %v543 = vld [vmem:[%s444 + $0x84] sm:$0xf]
        %v544 = vld [vmem:[%s444 + $0x88] sm:$0xf]
        %v545 = vld [vmem:[%s444 + $0x8c] sm:$0xf]
        %v546 = vld [vmem:[%s444 + $0x90] sm:$0xf]
        %v547 = vld [vmem:[%s444 + $0x94] sm:$0xf]
        %v548 = vld [vmem:[%s444 + $0x98] sm:$0xf]
        %v549 = vld [vmem:[%s444 + $0x9c] sm:$0xf]
        %v550 = vld [vmem:[%s444 + $0xa0] sm:$0xf]
        %v551 = vld [vmem:[%s444 + $0xa4] sm:$0xf]
        %v552 = vld [vmem:[%s444 + $0xa8] sm:$0xf]
        %v553 = vld [vmem:[%s444 + $0xac] sm:$0xf]
        %v554 = vld [vmem:[%s444 + $0xb0] sm:$0xf]
        %v555 = vld [vmem:[%s444 + $0xb4] sm:$0xf]
        %v556 = vld [vmem:[%s444 + $0xb8] sm:$0xf]
        %v557 = vld [vmem:[%s444 + $0xbc] sm:$0xf]
        %v558 = vld [vmem:[%s444 + $0xc0] sm:$0xf]
        %v559 = vld [vmem:[%s444 + $0xc4] sm:$0xf]
        %v560 = vld [vmem:[%s444 + $0xc8] sm:$0xf]
        %v561 = vld [vmem:[%s444 + $0xcc] sm:$0xf]
        %v562 = vld [vmem:[%s444 + $0xd0] sm:$0xf]
        %v563 = vld [vmem:[%s444 + $0xd4] sm:$0xf]
        %v564 = vld [vmem:[%s444 + $0xd8] sm:$0xf]
        %v565 = vld [vmem:[%s444 + $0xdc] sm:$0xf]
        %v566 = vld [vmem:[%s444 + $0xe0] sm:$0xf]
        %v567 = vld [vmem:[%s444 + $0xe4] sm:$0xf]
        %v568 = vld [vmem:[%s444 + $0xe8] sm:$0xf]
        %v569 = vld [vmem:[%s444 + $0xec] sm:$0xf]
        %v570 = vld [vmem:[%s444 + $0xf0] sm:$0xf]
        %v571 = vld [vmem:[%s444 + $0xf4] sm:$0xf]
        %v572 = vld [vmem:[%s444 + $0xf8] sm:$0xf]
        %v573 = vld [vmem:[%s444 + $0xfc] sm:$0xf]
        %v606 = vunpack.c.l.b16 %v478
        %v607 = vunpack.c.h.b16 %v478
        %v608 = vunpack.c.l.b16 %v479
        %v609 = vunpack.c.h.b16 %v479
        %v610 = vunpack.c.l.b16 %v480
        %v611 = vunpack.c.h.b16 %v480
        %v612 = vunpack.c.l.b16 %v481
        %v613 = vunpack.c.h.b16 %v481
        %v614 = vunpack.c.l.b16 %v482
        %v615 = vunpack.c.h.b16 %v482
        %v616 = vunpack.c.l.b16 %v483
        %v617 = vunpack.c.h.b16 %v483
        %v618 = vunpack.c.l.b16 %v484
        %v619 = vunpack.c.h.b16 %v484
        %v620 = vunpack.c.l.b16 %v485
        %v621 = vunpack.c.h.b16 %v485
        %v622 = vunpack.c.l.b16 %v486
        %v623 = vunpack.c.h.b16 %v486
        %v624 = vunpack.c.l.b16 %v487
        %v625 = vunpack.c.h.b16 %v487
        %v626 = vunpack.c.l.b16 %v488
        %v627 = vunpack.c.h.b16 %v488
        %v628 = vunpack.c.l.b16 %v489
        %v629 = vunpack.c.h.b16 %v489
        %v630 = vunpack.c.l.b16 %v490
        %v631 = vunpack.c.h.b16 %v490
        %v632 = vunpack.c.l.b16 %v491
        %v633 = vunpack.c.h.b16 %v491
        %v634 = vunpack.c.l.b16 %v492
        %v635 = vunpack.c.h.b16 %v492
        %v636 = vunpack.c.l.b16 %v493
        %v637 = vunpack.c.h.b16 %v493
        %v638 = vunpack.c.l.b16 %v494
        %v639 = vunpack.c.h.b16 %v494
        %v640 = vunpack.c.l.b16 %v495
        %v641 = vunpack.c.h.b16 %v495
        %v642 = vunpack.c.l.b16 %v496
        %v643 = vunpack.c.h.b16 %v496
        %v644 = vunpack.c.l.b16 %v497
        %v645 = vunpack.c.h.b16 %v497
        %v646 = vunpack.c.l.b16 %v498
        %v647 = vunpack.c.h.b16 %v498
        %v648 = vunpack.c.l.b16 %v499
        %v649 = vunpack.c.h.b16 %v499
        %v650 = vunpack.c.l.b16 %v500
        %v651 = vunpack.c.h.b16 %v500
        %v652 = vunpack.c.l.b16 %v501
        %v653 = vunpack.c.h.b16 %v501
        %v654 = vunpack.c.l.b16 %v502
        %v655 = vunpack.c.h.b16 %v502
        %v656 = vunpack.c.l.b16 %v503
        %v657 = vunpack.c.h.b16 %v503
        %v658 = vunpack.c.l.b16 %v504
        %v659 = vunpack.c.h.b16 %v504
        %v660 = vunpack.c.l.b16 %v505
        %v661 = vunpack.c.h.b16 %v505
        %v662 = vunpack.c.l.b16 %v506
        %v663 = vunpack.c.h.b16 %v506
        %v664 = vunpack.c.l.b16 %v507
        %v665 = vunpack.c.h.b16 %v507
        %v666 = vunpack.c.l.b16 %v508
        %v667 = vunpack.c.h.b16 %v508
        %v668 = vunpack.c.l.b16 %v509
        %v669 = vunpack.c.h.b16 %v509
        %v670 = vpack.c.b16 %v610, %v606
        %v671 = vpack.c.b16 %v611, %v607
        %v672 = vpack.c.b16 %v612, %v608
        %v673 = vpack.c.b16 %v613, %v609
        %v674 = vpack.c.b16 %v618, %v614
        %v675 = vpack.c.b16 %v619, %v615
        %v676 = vpack.c.b16 %v620, %v616
        %v677 = vpack.c.b16 %v621, %v617
        %v678 = vpack.c.b16 %v626, %v622
        %v679 = vpack.c.b16 %v627, %v623
        %v680 = vpack.c.b16 %v628, %v624
        %v681 = vpack.c.b16 %v629, %v625
        %v682 = vpack.c.b16 %v634, %v630
        %v683 = vpack.c.b16 %v635, %v631
        %v684 = vpack.c.b16 %v636, %v632
        %v685 = vpack.c.b16 %v637, %v633
        %v686 = vpack.c.b16 %v642, %v638
        %v687 = vpack.c.b16 %v643, %v639
        %v688 = vpack.c.b16 %v644, %v640
        %v689 = vpack.c.b16 %v645, %v641
        %v690 = vpack.c.b16 %v650, %v646
        %v691 = vpack.c.b16 %v651, %v647
        %v692 = vpack.c.b16 %v652, %v648
        %v693 = vpack.c.b16 %v653, %v649
        %v694 = vpack.c.b16 %v658, %v654
        %v695 = vpack.c.b16 %v659, %v655
        %v696 = vpack.c.b16 %v660, %v656
        %v697 = vpack.c.b16 %v661, %v657
        %v698 = vpack.c.b16 %v666, %v662
        %v699 = vpack.c.b16 %v667, %v663
        %v700 = vpack.c.b16 %v668, %v664
        %v701 = vpack.c.b16 %v669, %v665
        %v798 = vunpack.c.l.b16 %v510
        %v799 = vunpack.c.l.b16 %v511
        %v800 = vunpack.c.l.b16 %v512
        %v801 = vunpack.c.l.b16 %v513
        %v802 = vunpack.c.l.b16 %v514
        %v803 = vunpack.c.l.b16 %v515
        %v804 = vunpack.c.l.b16 %v516
        %v805 = vunpack.c.l.b16 %v517
        %v806 = vunpack.c.l.b16 %v518
        %v807 = vunpack.c.l.b16 %v519
        %v808 = vunpack.c.l.b16 %v520
        %v809 = vunpack.c.l.b16 %v521
        %v810 = vunpack.c.l.b16 %v522
        %v811 = vunpack.c.l.b16 %v523
        %v812 = vunpack.c.l.b16 %v524
        %v813 = vunpack.c.l.b16 %v525
        %v814 = vunpack.c.l.b16 %v526
        %v815 = vunpack.c.l.b16 %v527
        %v816 = vunpack.c.l.b16 %v528
        %v817 = vunpack.c.l.b16 %v529
        %v818 = vunpack.c.l.b16 %v530
        %v819 = vunpack.c.l.b16 %v531
        %v820 = vunpack.c.l.b16 %v532
        %v821 = vunpack.c.l.b16 %v533
        %v822 = vunpack.c.l.b16 %v534
        %v823 = vunpack.c.l.b16 %v535
        %v824 = vunpack.c.l.b16 %v536
        %v825 = vunpack.c.l.b16 %v537
        %v826 = vunpack.c.l.b16 %v538
        %v827 = vunpack.c.l.b16 %v539
        %v828 = vunpack.c.l.b16 %v540
        %v829 = vunpack.c.l.b16 %v541
        %v830 = vunpack.c.l.b16 %v542
        %v831 = vunpack.c.l.b16 %v543
        %v832 = vunpack.c.l.b16 %v544
        %v833 = vunpack.c.l.b16 %v545
        %v834 = vunpack.c.l.b16 %v546
        %v835 = vunpack.c.l.b16 %v547
        %v836 = vunpack.c.l.b16 %v548
        %v837 = vunpack.c.l.b16 %v549
        %v838 = vunpack.c.l.b16 %v550
        %v839 = vunpack.c.l.b16 %v551
        %v840 = vunpack.c.l.b16 %v552
        %v841 = vunpack.c.l.b16 %v553
        %v842 = vunpack.c.l.b16 %v554
        %v843 = vunpack.c.l.b16 %v555
        %v844 = vunpack.c.l.b16 %v556
        %v845 = vunpack.c.l.b16 %v557
        %v846 = vunpack.c.l.b16 %v558
        %v847 = vunpack.c.l.b16 %v559
        %v848 = vunpack.c.l.b16 %v560
        %v849 = vunpack.c.l.b16 %v561
        %v850 = vunpack.c.l.b16 %v562
        %v851 = vunpack.c.l.b16 %v563
        %v852 = vunpack.c.l.b16 %v564
        %v853 = vunpack.c.l.b16 %v565
        %v854 = vunpack.c.l.b16 %v566
        %v855 = vunpack.c.l.b16 %v567
        %v856 = vunpack.c.l.b16 %v568
        %v857 = vunpack.c.l.b16 %v569
        %v858 = vunpack.c.l.b16 %v570
        %v859 = vunpack.c.l.b16 %v571
        %v860 = vunpack.c.l.b16 %v572
        %v861 = vunpack.c.l.b16 %v573
        %v862 = vpack.c.b16 %v799, %v798
        %v863 = vpack.c.b16 %v801, %v800
        %v864 = vpack.c.b16 %v803, %v802
        %v865 = vpack.c.b16 %v805, %v804
        %v866 = vpack.c.b16 %v807, %v806
        %v867 = vpack.c.b16 %v809, %v808
        %v868 = vpack.c.b16 %v811, %v810
        %v869 = vpack.c.b16 %v813, %v812
        %v870 = vpack.c.b16 %v815, %v814
        %v871 = vpack.c.b16 %v817, %v816
        %v872 = vpack.c.b16 %v819, %v818
        %v873 = vpack.c.b16 %v821, %v820
        %v874 = vpack.c.b16 %v823, %v822
        %v875 = vpack.c.b16 %v825, %v824
        %v876 = vpack.c.b16 %v827, %v826
        %v877 = vpack.c.b16 %v829, %v828
        %v878 = vpack.c.b16 %v831, %v830
        %v879 = vpack.c.b16 %v833, %v832
        %v880 = vpack.c.b16 %v835, %v834
        %v881 = vpack.c.b16 %v837, %v836
        %v882 = vpack.c.b16 %v839, %v838
        %v883 = vpack.c.b16 %v841, %v840
        %v884 = vpack.c.b16 %v843, %v842
        %v885 = vpack.c.b16 %v845, %v844
        %v886 = vpack.c.b16 %v847, %v846
        %v887 = vpack.c.b16 %v849, %v848
        %v888 = vpack.c.b16 %v851, %v850
        %v889 = vpack.c.b16 %v853, %v852
        %v890 = vpack.c.b16 %v855, %v854
        %v891 = vpack.c.b16 %v857, %v856
        %v892 = vpack.c.b16 %v859, %v858
        %v893 = vpack.c.b16 %v861, %v860
        %926 = vmatprep.subr.bf16.mxu0 0
        %927 = vmatpush1.bf16.msra.mxu0 %v869
        %928 = vmatprep.subr.bf16.mxu0 0
        %929 = vmatpush1.bf16.msra.mxu0 %v868
        %930 = vmatprep.subr.bf16.mxu0 0
        %931 = vmatpush1.bf16.msra.mxu0 %v867
        %932 = vmatprep.subr.bf16.mxu0 0
        %933 = vmatpush1.bf16.msra.mxu0 %v866
        %934 = vmatprep.subr.bf16.mxu0 0
        %935 = vmatpush1.bf16.msra.mxu0 %v865
        %936 = vmatprep.subr.bf16.mxu0 0
        %937 = vmatpush1.bf16.msra.mxu0 %v864
        %938 = vmatprep.subr.bf16.mxu0 0
        %939 = vmatpush1.bf16.msra.mxu0 %v863
        %940 = vmatprep.subr.bf16.mxu0 0
        %941 = vmatpush1.bf16.msra.mxu0 %v862
        %942 = vmatprep.subr.bf16.mxu0 0
        %943 = vmatpush2.bf16.msra.mxu0 %v877
        %944 = vmatprep.subr.bf16.mxu0 0
        %945 = vmatpush2.bf16.msra.mxu0 %v876
        %946 = vmatprep.subr.bf16.mxu0 0
        %947 = vmatpush2.bf16.msra.mxu0 %v875
        %948 = vmatprep.subr.bf16.mxu0 0
        %949 = vmatpush2.bf16.msra.mxu0 %v874
        %950 = vmatprep.subr.bf16.mxu0 0
        %951 = vmatpush2.bf16.msra.mxu0 %v873
        %952 = vmatprep.subr.bf16.mxu0 0
        %953 = vmatpush2.bf16.msra.mxu0 %v872
        %954 = vmatprep.subr.bf16.mxu0 0
        %955 = vmatpush2.bf16.msra.mxu0 %v871
        %956 = vmatprep.subr.bf16.mxu0 0
        %957 = vmatpush2.bf16.msra.mxu0 %v870
        %958 = vmatprep.mubr.bf16.mxu0 %v671
        %959 = vmatmul.mubr.bf16.gmra.mxu0 %v670
        %v960 = vpop.f32.mrf.mxu0
        %v961 = vadd.f32 0.0, %v960
        %v962 = vpop.f32.mrf.mxu0
        %v963 = vpop.f32.mrf.mxu0
        %v964 = vadd.f32 0.0, %v963
        %v965 = vpop.f32.mrf.mxu0
        %966 = vmatprep.mubr.bf16.mxu0 %v675
        %967 = vmatmul.mubr.bf16.gmra.mxu0 %v674
        %v968 = vpop.f32.mrf.mxu0
        %v969 = vadd.f32 0.0, %v968
        %v970 = vpop.f32.mrf.mxu0
        %v971 = vpop.f32.mrf.mxu0
        %v972 = vadd.f32 0.0, %v971
        %v973 = vpop.f32.mrf.mxu0
        %974 = vmatprep.mubr.bf16.mxu0 %v679
        %975 = vmatmul.mubr.bf16.gmra.mxu0 %v678
        %v976 = vpop.f32.mrf.mxu0
        %v977 = vadd.f32 0.0, %v976
        %v978 = vpop.f32.mrf.mxu0
        %v979 = vpop.f32.mrf.mxu0
        %v980 = vadd.f32 0.0, %v979
        %v981 = vpop.f32.mrf.mxu0
        %982 = vmatprep.mubr.bf16.mxu0 %v683
        %983 = vmatmul.mubr.bf16.gmra.mxu0 %v682
        %v984 = vpop.f32.mrf.mxu0
        %v985 = vadd.f32 0.0, %v984
        %v986 = vpop.f32.mrf.mxu0
        %v987 = vpop.f32.mrf.mxu0
        %v988 = vadd.f32 0.0, %v987
        %v989 = vpop.f32.mrf.mxu0
        %990 = vmatprep.mubr.bf16.mxu0 %v687
        %991 = vmatmul.mubr.bf16.gmra.mxu0 %v686
        %v992 = vpop.f32.mrf.mxu0
        %v993 = vadd.f32 0.0, %v992
        %v994 = vpop.f32.mrf.mxu0
        %v995 = vpop.f32.mrf.mxu0
        %v996 = vadd.f32 0.0, %v995
        %v997 = vpop.f32.mrf.mxu0
        %998 = vmatprep.mubr.bf16.mxu0 %v691
        %999 = vmatmul.mubr.bf16.gmra.mxu0 %v690
        %v1000 = vpop.f32.mrf.mxu0
        %v1001 = vadd.f32 0.0, %v1000
        %v1002 = vpop.f32.mrf.mxu0
        %v1003 = vpop.f32.mrf.mxu0
        %v1004 = vadd.f32 0.0, %v1003
        %v1005 = vpop.f32.mrf.mxu0
        %1006 = vmatprep.mubr.bf16.mxu0 %v695
        %1007 = vmatmul.mubr.bf16.gmra.mxu0 %v694
        %v1008 = vpop.f32.mrf.mxu0
        %v1009 = vadd.f32 0.0, %v1008
        %v1010 = vpop.f32.mrf.mxu0
        %v1011 = vpop.f32.mrf.mxu0
        %v1012 = vadd.f32 0.0, %v1011
        %v1013 = vpop.f32.mrf.mxu0
        %1014 = vmatprep.mubr.bf16.mxu0 %v699
        %1015 = vmatmul.mubr.bf16.gmra.mxu0 %v698
        %v1016 = vpop.f32.mrf.mxu0
        %v1017 = vadd.f32 0.0, %v1016
        %v1018 = vpop.f32.mrf.mxu0
        %v1019 = vpop.f32.mrf.mxu0
        %v1020 = vadd.f32 0.0, %v1019
        %v1021 = vpop.f32.mrf.mxu0
        %1022 = vdwg.mxu0
        %1023 = vmatprep.subr.bf16.mxu0 0
        %1024 = vmatpush1.bf16.msra.mxu0 %v885
        %1025 = vmatprep.subr.bf16.mxu0 0
        %1026 = vmatpush1.bf16.msra.mxu0 %v884
        %1027 = vmatprep.subr.bf16.mxu0 0
        %1028 = vmatpush1.bf16.msra.mxu0 %v883
        %1029 = vmatprep.subr.bf16.mxu0 0
        %1030 = vmatpush1.bf16.msra.mxu0 %v882
        %1031 = vmatprep.subr.bf16.mxu0 0
        %1032 = vmatpush1.bf16.msra.mxu0 %v881
        %1033 = vmatprep.subr.bf16.mxu0 0
        %1034 = vmatpush1.bf16.msra.mxu0 %v880
        %1035 = vmatprep.subr.bf16.mxu0 0
        %1036 = vmatpush1.bf16.msra.mxu0 %v879
        %1037 = vmatprep.subr.bf16.mxu0 0
        %1038 = vmatpush1.bf16.msra.mxu0 %v878
        %1039 = vmatprep.subr.bf16.mxu0 0
        %1040 = vmatpush2.bf16.msra.mxu0 %v893
        %1041 = vmatprep.subr.bf16.mxu0 0
        %1042 = vmatpush2.bf16.msra.mxu0 %v892
        %1043 = vmatprep.subr.bf16.mxu0 0
        %1044 = vmatpush2.bf16.msra.mxu0 %v891
        %1045 = vmatprep.subr.bf16.mxu0 0
        %1046 = vmatpush2.bf16.msra.mxu0 %v890
        %1047 = vmatprep.subr.bf16.mxu0 0
        %1048 = vmatpush2.bf16.msra.mxu0 %v889
        %1049 = vmatprep.subr.bf16.mxu0 0
        %1050 = vmatpush2.bf16.msra.mxu0 %v888
        %1051 = vmatprep.subr.bf16.mxu0 0
        %1052 = vmatpush2.bf16.msra.mxu0 %v887
        %1053 = vmatprep.subr.bf16.mxu0 0
        %1054 = vmatpush2.bf16.msra.mxu0 %v886
        %1055 = vmatprep.mubr.bf16.mxu0 %v673
        %1056 = vmatmul.mubr.bf16.gmra.mxu0 %v672
        %v1057 = vpop.f32.mrf.mxu0
        %v1058 = vadd.f32 %v961, %v1057
        %v1059 = vpop.f32.mrf.mxu0
        %v1060 = vpop.f32.mrf.mxu0
        %v1061 = vadd.f32 %v964, %v1060
        %v1062 = vpop.f32.mrf.mxu0
        %1063 = vmatprep.mubr.bf16.mxu0 %v677
        %1064 = vmatmul.mubr.bf16.gmra.mxu0 %v676
        %v1065 = vpop.f32.mrf.mxu0
        %v1066 = vadd.f32 %v969, %v1065
        %v1067 = vpop.f32.mrf.mxu0
        %v1068 = vpop.f32.mrf.mxu0
        %v1069 = vadd.f32 %v972, %v1068
        %v1070 = vpop.f32.mrf.mxu0
        %1071 = vmatprep.mubr.bf16.mxu0 %v681
        %1072 = vmatmul.mubr.bf16.gmra.mxu0 %v680
        %v1073 = vpop.f32.mrf.mxu0
        %v1074 = vadd.f32 %v977, %v1073
        %v1075 = vpop.f32.mrf.mxu0
        %v1076 = vpop.f32.mrf.mxu0
        %v1077 = vadd.f32 %v980, %v1076
        %v1078 = vpop.f32.mrf.mxu0
        %1079 = vmatprep.mubr.bf16.mxu0 %v685
        %1080 = vmatmul.mubr.bf16.gmra.mxu0 %v684
        %v1081 = vpop.f32.mrf.mxu0
        %v1082 = vadd.f32 %v985, %v1081
        %v1083 = vpop.f32.mrf.mxu0
        %v1084 = vpop.f32.mrf.mxu0
        %v1085 = vadd.f32 %v988, %v1084
        %v1086 = vpop.f32.mrf.mxu0
        %1087 = vmatprep.mubr.bf16.mxu0 %v689
        %1088 = vmatmul.mubr.bf16.gmra.mxu0 %v688
        %v1089 = vpop.f32.mrf.mxu0
        %v1090 = vadd.f32 %v993, %v1089
        %v1091 = vpop.f32.mrf.mxu0
        %v1092 = vpop.f32.mrf.mxu0
        %v1093 = vadd.f32 %v996, %v1092
        %v1094 = vpop.f32.mrf.mxu0
        %1095 = vmatprep.mubr.bf16.mxu0 %v693
        %1096 = vmatmul.mubr.bf16.gmra.mxu0 %v692
        %v1097 = vpop.f32.mrf.mxu0
        %v1098 = vadd.f32 %v1001, %v1097
        %v1099 = vpop.f32.mrf.mxu0
        %v1100 = vpop.f32.mrf.mxu0
        %v1101 = vadd.f32 %v1004, %v1100
        %v1102 = vpop.f32.mrf.mxu0
        %1103 = vmatprep.mubr.bf16.mxu0 %v697
        %1104 = vmatmul.mubr.bf16.gmra.mxu0 %v696
        %v1105 = vpop.f32.mrf.mxu0
        %v1106 = vadd.f32 %v1009, %v1105
        %v1107 = vpop.f32.mrf.mxu0
        %v1108 = vpop.f32.mrf.mxu0
        %v1109 = vadd.f32 %v1012, %v1108
        %v1110 = vpop.f32.mrf.mxu0
        %1111 = vmatprep.mubr.bf16.mxu0 %v701
        %1112 = vmatmul.mubr.bf16.gmra.mxu0 %v700
        %v1113 = vpop.f32.mrf.mxu0
        %v1114 = vadd.f32 %v1017, %v1113
        %v1115 = vpop.f32.mrf.mxu0
        %v1116 = vpop.f32.mrf.mxu0
        %v1117 = vadd.f32 %v1020, %v1116
        %v1118 = vpop.f32.mrf.mxu0
        %1119 = vdwg.mxu0
        %v1120 = vpack.c.bf16 %v1061, %v1058
        %v1121 = vpack.c.bf16 %v1069, %v1066
        %v1122 = vpack.c.bf16 %v1077, %v1074
        %v1123 = vpack.c.bf16 %v1085, %v1082
        %v1124 = vpack.c.bf16 %v1093, %v1090
        %v1125 = vpack.c.bf16 %v1101, %v1098
        %v1126 = vpack.c.bf16 %v1109, %v1106
        %v1127 = vpack.c.bf16 %v1117, %v1114
        %v1136 = vunpack.c.l.b16 %v1120
        %v1137 = vunpack.c.h.b16 %v1120
        %v1138 = vunpack.c.l.b16 %v1121
        %v1139 = vunpack.c.h.b16 %v1121
        %v1140 = vunpack.c.l.b16 %v1122
        %v1141 = vunpack.c.h.b16 %v1122
        %v1142 = vunpack.c.l.b16 %v1123
        %v1143 = vunpack.c.h.b16 %v1123
        %v1144 = vunpack.c.l.b16 %v1124
        %v1145 = vunpack.c.h.b16 %v1124
        %v1146 = vunpack.c.l.b16 %v1125
        %v1147 = vunpack.c.h.b16 %v1125
        %v1148 = vunpack.c.l.b16 %v1126
        %v1149 = vunpack.c.h.b16 %v1126
        %v1150 = vunpack.c.l.b16 %v1127
        %v1151 = vunpack.c.h.b16 %v1127
        %v1152 = vpack.c.b16 %v1136, %v1136
        %v1153 = vpack.c.b16 %v1137, %v1137
        %v1154 = vpack.c.b16 %v1138, %v1138
        %v1155 = vpack.c.b16 %v1139, %v1139
        %v1156 = vpack.c.b16 %v1140, %v1140
        %v1157 = vpack.c.b16 %v1141, %v1141
        %v1158 = vpack.c.b16 %v1142, %v1142
        %v1159 = vpack.c.b16 %v1143, %v1143
        %v1160 = vpack.c.b16 %v1144, %v1144
        %v1161 = vpack.c.b16 %v1145, %v1145
        %v1162 = vpack.c.b16 %v1146, %v1146
        %v1163 = vpack.c.b16 %v1147, %v1147
        %v1164 = vpack.c.b16 %v1148, %v1148
        %v1165 = vpack.c.b16 %v1149, %v1149
        %v1166 = vpack.c.b16 %v1150, %v1150
        %v1167 = vpack.c.b16 %v1151, %v1151
        %1184 = vst [vmem:[%s468] sm:$0xf] %v1152
        %1185 = vst [vmem:[%s468 + $0x4] sm:$0xf] %v1153
        %1186 = vst [vmem:[%s468 + $0x8] sm:$0xf] %v1154
        %1187 = vst [vmem:[%s468 + $0xc] sm:$0xf] %v1155
        %1188 = vst [vmem:[%s468 + $0x10] sm:$0xf] %v1156
        %1189 = vst [vmem:[%s468 + $0x14] sm:$0xf] %v1157
        %1190 = vst [vmem:[%s468 + $0x18] sm:$0xf] %v1158
        %1191 = vst [vmem:[%s468 + $0x1c] sm:$0xf] %v1159
        %1192 = vst [vmem:[%s468 + $0x20] sm:$0xf] %v1160
        %1193 = vst [vmem:[%s468 + $0x24] sm:$0xf] %v1161
        %1194 = vst [vmem:[%s468 + $0x28] sm:$0xf] %v1162
        %1195 = vst [vmem:[%s468 + $0x2c] sm:$0xf] %v1163
        %1196 = vst [vmem:[%s468 + $0x30] sm:$0xf] %v1164
        %1197 = vst [vmem:[%s468 + $0x34] sm:$0xf] %v1165
        %1198 = vst [vmem:[%s468 + $0x38] sm:$0xf] %v1166
        %1199 = vst [vmem:[%s468 + $0x3c] sm:$0xf] %v1167
        %s1200 = sand.u32 %s90, 1
        %s1201 = scalar_lea.sflag [#allocation4], %s1200
        %s1202 = sand.u32 %s90, 1
        %s1203 = smul.addr %s1202, 64
        %s1204 = scalar_lea.vmem [#allocation3], %s1203
        // Predicated region
        $region70: #{adaptive_attention_forward.9} parent=64 // pred_check
          %p1205 = pneg %p100
        $region71: #{adaptive_attention_forward.9} parent=64 // pred_check_branch
          %1207 = sbr.rel (%p1205) target = $region73
        $region72: #{adaptive_attention_forward.9} parent=64 // pred_region
          %s1208 = smul.u32 16, %s20
          %s1210 = ssub.s32 1024, 1024
          %1211 = vsyncadd %s1201, %s1210
          %s1212 = smul.addr %s1208, 4
          %s1213 = sadd.s32 %s21, %s1212
          %s1214 = smul.addr %s1213, 64
          %s1215 = scalar_lea.hbm %s2, %s1214
          %s1216 = sshll.u32 %s1204, 4
          %s1217 = int_to_ptr.vmem [resolvable:$true] %s1216
          %1222 = dma.vmem_to_hbm [thread:$0]  %s1217, 1024, %s1215, %s1201, 64, 256, 4
        $region73: #{adaptive_attention_forward.9} parent=64 // pred_fallthru
          _
      $region65: #{adaptive_attention_forward.9} parent=5 // pred_fallthru
        _
      %p1223 = scmp.le.s32.totalorder 2, %s11
      // Predicated region
      $region74: #{adaptive_attention_forward.9} parent=5 // pred_check
        %p1224 = pneg %p1223
      $region75: #{adaptive_attention_forward.9} parent=5 // pred_check_branch
        %1226 = sbr.rel (%p1224) target = $region77
      $region76: #{adaptive_attention_forward.9} parent=5 // pred_region
        %s1227 = ssub.s32 %s11, 2
        // Predicated region
        $region78: #{adaptive_attention_forward.9} parent=76 // pred_check
          %p1228 = pneg %p106
        $region79: #{adaptive_attention_forward.9} parent=76 // pred_check_branch
          %1230 = sbr.rel (%p1228) target = $region81
        $region80: #{adaptive_attention_forward.9} parent=76 // pred_region
          %s1231 = sand.u32 %s91, 1
          %s1232 = scalar_lea.sflag [#allocation4], %s1231
          %s1233 = sand.u32 %s91, 1
          %s1234 = smul.addr %s1233, 64
          %s1235 = scalar_lea.vmem [#allocation3], %s1234
          %1236 = dma.done %s1232, 1024
        $region81: #{adaptive_attention_forward.9} parent=76 // pred_fallthru
          _
      $region77: #{adaptive_attention_forward.9} parent=5 // pred_fallthru
        _
    $region6: #{adaptive_attention_forward.9} parent=1 // loop_footer
      %s15 = sadd.s32 1, %s11
    $region7: #{adaptive_attention_forward.9} parent=1 // loop_footer_branch
      %10 = sbr.rel target = $region3
    $region8: #{adaptive_attention_forward.9} parent=1 // loop_exit
      _
    %1237 = vsyncpa [#allocation4], 1
    %s1238 = scalar_lea.sflag [#allocation4], 1
    %1239 = vsyncpa %s1238, 1

</llo_original>
